<compile_context>
chip_gen: v7x
topology: tpu7x:2x2x1
jax: 0.10.0
libtpu: 0.0.40
codegen_flags: <defaults>
</compile_context>

<pallas_src>
import functools

import numpy as np
import jax
import jax.numpy as jnp
from jax.experimental import pallas as pl
from jax.experimental.pallas import tpu as pltpu

LANE = 128       # TPU lane width
SUBL = 16        # bf16 sublane packing: 16 rows per vreg
TM_MAX = 256     # max batch-tile rows per grid step
NEG_INF = -1e30


def _rup(x, m):
    return ((x + m - 1) // m) * m


# ---------------------------------------------------------------------------
# Parameter initialization (deterministic, PyTorch-like fan_in scaling)
# ---------------------------------------------------------------------------
def init_params(key, board_width, board_height):
    W, H = board_width, board_height

    def lin_init(key, out_f, in_f):
        k1, k2 = jax.random.split(key)
        bound = 1.0 / jnp.sqrt(in_f)
        w = jax.random.uniform(k1, (out_f, in_f), jnp.float32, -bound, bound)
        b = jax.random.uniform(k2, (out_f,), jnp.float32, -bound, bound)
        return w, b

    def conv_init(key, out_c, in_c, k):
        k1, k2 = jax.random.split(key)
        fan_in = in_c * k * k
        bound = 1.0 / jnp.sqrt(fan_in)
        w = jax.random.uniform(k1, (out_c, in_c, k, k), jnp.float32, -bound, bound)
        b = jax.random.uniform(k2, (out_c,), jnp.float32, -bound, bound)
        return w, b

    keys = jax.random.split(key, 8)
    p = {}
    p["conv1_w"], p["conv1_b"] = conv_init(keys[0], 32, 1, 3)
    p["conv2_w"], p["conv2_b"] = conv_init(keys[1], 64, 32, 3)
    p["conv3_w"], p["conv3_b"] = conv_init(keys[2], 128, 64, 3)
    p["act_conv1_w"], p["act_conv1_b"] = conv_init(keys[3], 4, 128, 1)
    p["act_fc1_w"], p["act_fc1_b"] = lin_init(keys[4], W * H, 4 * W * H)
    p["val_conv1_w"], p["val_conv1_b"] = conv_init(keys[5], 2, 128, 1)
    p["val_fc1_w"], p["val_fc1_b"] = lin_init(keys[6], 64, 2 * W * H)
    p["val_fc2_w"], p["val_fc2_b"] = lin_init(keys[7], 1, 64)
    return p


# ---------------------------------------------------------------------------
# One-time parameter preprocessing: convs -> dense, lane-padded matmul weights
# ---------------------------------------------------------------------------
def _shift_matrix(H, W, kh, kw, KH, KW):
    """shift[s_in, s_out] = 1 iff input pos s_in feeds output pos s_out for tap (kh,kw)."""
    S = H * W
    m = np.zeros((S, S), np.float32)
    dh, dw = kh - KH // 2, kw - KW // 2
    for ho in range(H):
        for wo in range(W):
            hi, wi = ho + dh, wo + dw
            if 0 <= hi < H and 0 <= wi < W:
                m[hi * W + wi, ho * W + wo] = 1.0
    return m


def _conv_as_dense(w_oihw, H, W):
    """PyTorch conv (padding = K//2) as a dense (C_in*HW, C_out*HW) matrix
    acting on NCHW-flattened features (index = c*HW + h*W + w)."""
    w = np.asarray(w_oihw, np.float32)
    O, I, KH, KW = w.shape
    S = H * W
    K = np.zeros((I * S, O * S), np.float32)
    for kh in range(KH):
        for kw in range(KW):
            K += np.kron(w[:, :, kh, kw].T, _shift_matrix(H, W, kh, kw, KH, KW))
    return K


def _pad2(a, rows, cols):
    out = np.zeros((rows, cols), np.float32)
    out[: a.shape[0], : a.shape[1]] = a
    return out


def prepare_params(params, board_width, board_height, mxu_dtype=jnp.bfloat16):
    H, W = board_height, board_width
    S = H * W
    F0P = LANE                          # input features (1*S=9) padded to 128
    F1, F2, F3 = 32 * S, 64 * S, 128 * S
    F1P, F2P, F3P = _rup(F1, LANE), _rup(F2, LANE), _rup(F3, LANE)
    HP = LANE                           # fused 1x1-head width: 4*S + 2*S -> 128
    VP = LANE                           # value hidden / output width, padded

    def rep_bias(b):
        return np.repeat(np.asarray(b, np.float32), S)

    # trunk 3x3 convs as dense feature-space matmuls
    k1 = _pad2(_conv_as_dense(params["conv1_w"], H, W), F0P, F1P)
    k2 = _pad2(_conv_as_dense(params["conv2_w"], H, W), F1P, F2P)
    k3 = _pad2(_conv_as_dense(params["conv3_w"], H, W), F2P, F3P)
    b1 = _pad2(rep_bias(params["conv1_b"])[None, :], 1, F1P)
    b2 = _pad2(rep_bias(params["conv2_b"])[None, :], 1, F2P)
    b3 = _pad2(rep_bias(params["conv3_b"])[None, :], 1, F3P)

    # both 1x1-conv heads fused into one lane-dense matmul (F3P, 128)
    ka = _conv_as_dense(params["act_conv1_w"], H, W)   # (F3, 4*S)
    kv = _conv_as_dense(params["val_conv1_w"], H, W)   # (F3, 2*S)
    k_head = np.zeros((F3P, HP), np.float32)
    k_head[:F3, : 4 * S] = ka
    k_head[:F3, 4 * S: 6 * S] = kv
    b_head = np.zeros((1, HP), np.float32)
    b_head[0, : 4 * S] = rep_bias(params["act_conv1_b"])
    b_head[0, 4 * S: 6 * S] = rep_bias(params["val_conv1_b"])

    # fused head FCs: one (128, 256) matmul on h.
    #   lanes [0, 128)   : policy logits  (act_fc1), padded logits biased -1e30
    #   lanes [128, 256) : value hidden   (val_fc1)
    w_hf = np.zeros((HP, 2 * LANE), np.float32)
    w_hf[: 4 * S, :S] = np.asarray(params["act_fc1_w"], np.float32).T
    w_hf[4 * S: 6 * S, LANE: LANE + 64] = np.asarray(params["val_fc1_w"], np.float32).T
    b_hf = np.zeros((1, 2 * LANE), np.float32)
    b_hf[0, :LANE] = NEG_INF                       # mask padded policy logits
    b_hf[0, :S] = np.asarray(params["act_fc1_b"], np.float32)
    b_hf[0, LANE: LANE + 64] = np.asarray(params["val_fc1_b"], np.float32)

    # final value FC
    w_v2 = np.zeros((VP, VP), np.float32)
    w_v2[:64, :1] = np.asarray(params["val_fc2_w"], np.float32).T
    b_v2 = np.zeros((1, VP), np.float32)
    b_v2[0, :1] = np.asarray(params["val_fc2_b"], np.float32)

    mats = dict(k1=k1, k2=k2, k3=k3, k_head=k_head, w_hf=w_hf, w_v2=w_v2)
    biases = dict(b1=b1, b2=b2, b3=b3, b_head=b_head, b_hf=b_hf, b_v2=b_v2)
    out = {k: jnp.asarray(v, mxu_dtype) for k, v in mats.items()}
    out.update({k: jnp.asarray(v, jnp.float32) for k, v in biases.items()})
    return out


# ---------------------------------------------------------------------------
# Fused Pallas kernel: the whole forward pass for one batch tile, VMEM resident
# ---------------------------------------------------------------------------
def _fused_net_kernel(x_ref,
                      k1_ref, b1_ref, k2_ref, b2_ref, k3_ref, b3_ref,
                      kh_ref, bh_ref, whf_ref, bhf_ref, wv2_ref, bv2_ref,
                      out_ref):
    def dense(x, w_ref, b_ref):
        # bf16 MXU operands, f32 accumulation, f32 bias/epilogue.
        y = jnp.dot(x.astype(w_ref.dtype), w_ref[...],
                    preferred_element_type=jnp.float32)
        return y + b_ref[...]

    x = x_ref[...]                                       # (TM, 128)  bf16
    x = jnp.maximum(dense(x, k1_ref, b1_ref), 0.0)       # (TM, 384)  conv1+relu
    x = jnp.maximum(dense(x, k2_ref, b2_ref), 0.0)       # (TM, 640)  conv2+relu
    x = jnp.maximum(dense(x, k3_ref, b3_ref), 0.0)       # (TM, 1152) conv3+relu
    h = jnp.maximum(dense(x, kh_ref, bh_ref), 0.0)       # (TM, 128)  both 1x1 heads

    # fused policy-FC + value-FC1: one (TM,128)x(128,256) MXU issue
    y = dense(h, whf_ref, bhf_ref)                       # (TM, 256)
    logits = y[:, :LANE]                                 # padded cols hold -1e30
    vhid = jnp.maximum(y[:, LANE:], 0.0)                 # (TM, 128)

    # policy: masked softmax over the real logits
    logits = logits - jnp.max(logits, axis=-1, keepdims=True)
    e = jnp.exp(logits)
    pol = e * pl.reciprocal(jnp.sum(e, axis=-1, keepdims=True), approx=True)

    # value: FC + tanh (value in column 0)
    val = jnp.tanh(dense(vhid, wv2_ref, bv2_ref))        # (TM, 128)

    # single lane-dense packed output: policy in lanes 0..127, value in 128..255
    out_ref[:, :LANE] = pol
    out_ref[:, LANE:] = val


def net_forward(state_input_nchw, prepared, board_width, board_height):
    """Matches PyTorch Net.forward; state_input is (N, 1, H, W) float32."""
    N = state_input_nchw.shape[0]
    H, W = board_height, board_width
    S = H * W

    # Batch tiling: tile rows multiple of 16 (full bf16 vreg), weights resident.
    npad16 = _rup(max(N, 1), SUBL)
    if npad16 <= TM_MAX:
        TM, NPAD = npad16, npad16
    else:
        TM, NPAD = TM_MAX, _rup(npad16, TM_MAX)
    grid = NPAD // TM

    # NCHW flatten (C=1), pad batch->NPAD rows and features->128 lanes, cast bf16 once.
    x = state_input_nchw.reshape(N, S).astype(jnp.bfloat16)
    xp = jnp.zeros((NPAD, LANE), jnp.bfloat16).at[:N, :S].set(x)

    p = prepared
    weight_args = (p["k1"], p["b1"], p["k2"], p["b2"], p["k3"], p["b3"],
                   p["k_head"], p["b_head"], p["w_hf"], p["b_hf"],
                   p["w_v2"], p["b_v2"])

    # Weights/biases: full-array blocks with constant index_map -> DMA'd once
    # per pallas_call and kept resident across the batch grid.
    def const_spec(a):
        return pl.BlockSpec(a.shape, lambda i: (0, 0))

    in_specs = [pl.BlockSpec((TM, LANE), lambda i: (i, 0))]
    in_specs += [const_spec(a) for a in weight_args]
    out_spec = pl.BlockSpec((TM, 2 * LANE), lambda i: (i, 0))

    out = pl.pallas_call(
        _fused_net_kernel,
        out_shape=jax.ShapeDtypeStruct((NPAD, 2 * LANE), jnp.float32),
        grid_spec=pltpu.PrefetchScalarGridSpec(
            num_scalar_prefetch=0,
            grid=(grid,),
            in_specs=in_specs,
            out_specs=out_spec,
        ),
        compiler_params=pltpu.CompilerParams(
            dimension_semantics=("parallel",),   # shard batch tiles across v7x's 2 TCs
        ),
    )(xp, *weight_args)

    x_act = out[:N, :S].reshape(N, board_width, board_height)
    x_val = out[:N, LANE:LANE + 1]
    return x_act, x_val


# ---------------------------------------------------------------------------
# Pure-JAX f32 reference (for self-check only)
# ---------------------------------------------------------------------------
def net_forward_reference(state_input, params, board_width, board_height):
    def conv(x, w, b, pad):
        y = jax.lax.conv_general_dilated(
            x, w, window_strides=(1, 1), padding=pad,
            dimension_numbers=("NCHW", "OIHW", "NCHW"))
        return y + b.reshape(1, -1, 1, 1)

    x = state_input.astype(jnp.float32)
    x = jax.nn.relu(conv(x, params["conv1_w"], params["conv1_b"], "SAME"))
    x = jax.nn.relu(conv(x, params["conv2_w"], params["conv2_b"], "SAME"))
    x = jax.nn.relu(conv(x, params["conv3_w"], params["conv3_b"], "SAME"))
    xa = jax.nn.relu(conv(x, params["act_conv1_w"], params["act_conv1_b"], "VALID"))
    xa = xa.reshape(xa.shape[0], -1)
    xa = jax.nn.softmax(xa @ params["act_fc1_w"].T + params["act_fc1_b"], axis=1)
    xa = xa.reshape(-1, board_width, board_height)
    xv = jax.nn.relu(conv(x, params["val_conv1_w"], params["val_conv1_b"], "VALID"))
    xv = xv.reshape(xv.shape[0], -1)
    xv = jax.nn.relu(xv @ params["val_fc1_w"].T + params["val_fc1_b"])
    xv = jnp.tanh(xv @ params["val_fc2_w"].T + params["val_fc2_b"])
    return xa, xv


# ---------------------------------------------------------------------------
if __name__ == "__main__":
    board_width, board_height = 3, 3

    key = jax.random.PRNGKey(0)
    k_params, k_in1, k_in2 = jax.random.split(key, 3)

    params = init_params(k_params, board_width, board_height)
    prepared = prepare_params(params, board_width, board_height)

    fwd = jax.jit(functools.partial(net_forward,
                                    board_width=board_width,
                                    board_height=board_height))

    # --- small inference-style batch (single grid step) ---
    batch = 2
    state_input = jax.random.normal(
        k_in1, (batch, 1, board_height, board_width), jnp.float32)
    x_act, x_val = fwd(state_input, prepared)
    jax.block_until_ready((x_act, x_val))

    assert x_act.shape == (batch, board_width, board_height)
    assert x_val.shape == (batch, 1)
    assert jnp.allclose(jnp.sum(x_act.reshape(batch, -1), axis=1), 1.0, atol=2e-3)

    ref_act, ref_val = net_forward_reference(state_input, params,
                                             board_width, board_height)
    assert float(jnp.max(jnp.abs(x_act - ref_act))) < 5e-2
    assert float(jnp.max(jnp.abs(x_val - ref_val))) < 5e-2

    # --- larger self-play-style batch (exercises grid > 1, resident weights) ---
    big_batch = 320
    big_input = jax.random.normal(
        k_in2, (big_batch, 1, board_height, board_width), jnp.float32)
    b_act, b_val = fwd(big_input, prepared)
    jax.block_until_ready((b_act, b_val))

    assert b_act.shape == (big_batch, board_width, board_height)
    assert b_val.shape == (big_batch, 1)
    rb_act, rb_val = net_forward_reference(big_input, params,
                                           board_width, board_height)
    assert jnp.allclose(jnp.sum(b_act.reshape(big_batch, -1), axis=1), 1.0, atol=2e-3)
    assert float(jnp.max(jnp.abs(b_act - rb_act))) < 5e-2
    assert float(jnp.max(jnp.abs(b_val - rb_val))) < 5e-2

    print("KERNEL_OK")
</pallas_src>

<mosaic_0001>
module attributes {stable_mosaic.version = 11 : i64} {
  func.func @_fused_net_kernel(%arg0: i32, %arg1: memref<16x128xbf16, #tpu.memory_space<vmem>>, %arg2: memref<128x384xbf16, #tpu.memory_space<vmem>>, %arg3: memref<1x384xf32, #tpu.memory_space<vmem>>, %arg4: memref<384x640xbf16, #tpu.memory_space<vmem>>, %arg5: memref<1x640xf32, #tpu.memory_space<vmem>>, %arg6: memref<640x1152xbf16, #tpu.memory_space<vmem>>, %arg7: memref<1x1152xf32, #tpu.memory_space<vmem>>, %arg8: memref<1152x128xbf16, #tpu.memory_space<vmem>>, %arg9: memref<1x128xf32, #tpu.memory_space<vmem>>, %arg10: memref<128x256xbf16, #tpu.memory_space<vmem>>, %arg11: memref<1x256xf32, #tpu.memory_space<vmem>>, %arg12: memref<128x128xbf16, #tpu.memory_space<vmem>>, %arg13: memref<1x128xf32, #tpu.memory_space<vmem>>, %arg14: memref<16x256xf32, #tpu.memory_space<vmem>>) attributes {dimension_semantics = [#tpu.dimension_semantics<parallel>], iteration_bounds = array<i64: 1>, scalar_prefetch = 0 : i64, scratch_operands = 0 : i64, tpu.core_type = #tpu.core_type<tc>, window_params = [{transform_indices = @transform_0, window_bounds = array<i64: 16, 128>}, {pipeline_mode = #tpu.pipeline_mode<synchronous>, transform_indices = @transform_1, window_bounds = array<i64: 128, 384>}, {pipeline_mode = #tpu.pipeline_mode<synchronous>, transform_indices = @transform_2, window_bounds = array<i64: 1, 384>}, {pipeline_mode = #tpu.pipeline_mode<synchronous>, transform_indices = @transform_3, window_bounds = array<i64: 384, 640>}, {pipeline_mode = #tpu.pipeline_mode<synchronous>, transform_indices = @transform_4, window_bounds = array<i64: 1, 640>}, {pipeline_mode = #tpu.pipeline_mode<synchronous>, transform_indices = @transform_5, window_bounds = array<i64: 640, 1152>}, {pipeline_mode = #tpu.pipeline_mode<synchronous>, transform_indices = @transform_6, window_bounds = array<i64: 1, 1152>}, {pipeline_mode = #tpu.pipeline_mode<synchronous>, transform_indices = @transform_7, window_bounds = array<i64: 1152, 128>}, {pipeline_mode = #tpu.pipeline_mode<synchronous>, transform_indices = @transform_8, window_bounds = array<i64: 1, 128>}, {pipeline_mode = #tpu.pipeline_mode<synchronous>, transform_indices = @transform_9, window_bounds = array<i64: 128, 256>}, {pipeline_mode = #tpu.pipeline_mode<synchronous>, transform_indices = @transform_10, window_bounds = array<i64: 1, 256>}, {pipeline_mode = #tpu.pipeline_mode<synchronous>, transform_indices = @transform_11, window_bounds = array<i64: 128, 128>}, {pipeline_mode = #tpu.pipeline_mode<synchronous>, transform_indices = @transform_12, window_bounds = array<i64: 1, 128>}, {transform_indices = @transform_13, window_bounds = array<i64: 16, 256>}]} {
    %c0 = arith.constant 0 : index
    %c0_0 = arith.constant 0 : index
    %0 = vector.load %arg1[%c0, %c0_0] : memref<16x128xbf16, #tpu.memory_space<vmem>>, vector<16x128xbf16>
    %c0_1 = arith.constant 0 : index
    %c0_2 = arith.constant 0 : index
    %1 = vector.load %arg2[%c0_1, %c0_2] : memref<128x384xbf16, #tpu.memory_space<vmem>>, vector<128x384xbf16>
    %cst = arith.constant dense<0.000000e+00> : vector<16x384xf32>
    %2 = tpu.matmul %0, %1, %cst {dimension_numbers = #tpu.dot_dimension_numbers<[1], [0], [0], [1], [0, 0, 1, 1], [], []>} : vector<16x128xbf16>, vector<128x384xbf16>, vector<16x384xf32> -> vector<16x384xf32>
    %c0_3 = arith.constant 0 : index
    %c0_4 = arith.constant 0 : index
    %3 = vector.load %arg3[%c0_3, %c0_4] : memref<1x384xf32, #tpu.memory_space<vmem>>, vector<1x384xf32>
    %4 = vector.broadcast %3 : vector<1x384xf32> to vector<16x384xf32>
    %5 = arith.addf %2, %4 : vector<16x384xf32>
    %cst_5 = arith.constant 0.000000e+00 : f32
    %6 = vector.broadcast %cst_5 : f32 to vector<16x384xf32>
    %7 = arith.maximumf %5, %6 : vector<16x384xf32>
    %8 = arith.truncf %7 : vector<16x384xf32> to vector<16x384xbf16>
    %c0_6 = arith.constant 0 : index
    %c0_7 = arith.constant 0 : index
    %9 = vector.load %arg4[%c0_6, %c0_7] : memref<384x640xbf16, #tpu.memory_space<vmem>>, vector<384x640xbf16>
    %cst_8 = arith.constant dense<0.000000e+00> : vector<16x640xf32>
    %10 = tpu.matmul %8, %9, %cst_8 {dimension_numbers = #tpu.dot_dimension_numbers<[1], [0], [0], [1], [0, 0, 1, 1], [], []>} : vector<16x384xbf16>, vector<384x640xbf16>, vector<16x640xf32> -> vector<16x640xf32>
    %c0_9 = arith.constant 0 : index
    %c0_10 = arith.constant 0 : index
    %11 = vector.load %arg5[%c0_9, %c0_10] : memref<1x640xf32, #tpu.memory_space<vmem>>, vector<1x640xf32>
    %12 = vector.broadcast %11 : vector<1x640xf32> to vector<16x640xf32>
    %13 = arith.addf %10, %12 : vector<16x640xf32>
    %cst_11 = arith.constant 0.000000e+00 : f32
    %14 = vector.broadcast %cst_11 : f32 to vector<16x640xf32>
    %15 = arith.maximumf %13, %14 : vector<16x640xf32>
    %16 = arith.truncf %15 : vector<16x640xf32> to vector<16x640xbf16>
    %c0_12 = arith.constant 0 : index
    %c0_13 = arith.constant 0 : index
    %17 = vector.load %arg6[%c0_12, %c0_13] : memref<640x1152xbf16, #tpu.memory_space<vmem>>, vector<640x1152xbf16>
    %cst_14 = arith.constant dense<0.000000e+00> : vector<16x1152xf32>
    %18 = tpu.matmul %16, %17, %cst_14 {dimension_numbers = #tpu.dot_dimension_numbers<[1], [0], [0], [1], [0, 0, 1, 1], [], []>} : vector<16x640xbf16>, vector<640x1152xbf16>, vector<16x1152xf32> -> vector<16x1152xf32>
    %c0_15 = arith.constant 0 : index
    %c0_16 = arith.constant 0 : index
    %19 = vector.load %arg7[%c0_15, %c0_16] : memref<1x1152xf32, #tpu.memory_space<vmem>>, vector<1x1152xf32>
    %20 = vector.broadcast %19 : vector<1x1152xf32> to vector<16x1152xf32>
    %21 = arith.addf %18, %20 : vector<16x1152xf32>
    %cst_17 = arith.constant 0.000000e+00 : f32
    %22 = vector.broadcast %cst_17 : f32 to vector<16x1152xf32>
    %23 = arith.maximumf %21, %22 : vector<16x1152xf32>
    %24 = arith.truncf %23 : vector<16x1152xf32> to vector<16x1152xbf16>
    %c0_18 = arith.constant 0 : index
    %c0_19 = arith.constant 0 : index
    %25 = vector.load %arg8[%c0_18, %c0_19] : memref<1152x128xbf16, #tpu.memory_space<vmem>>, vector<1152x128xbf16>
    %cst_20 = arith.constant dense<0.000000e+00> : vector<16x128xf32>
    %26 = tpu.matmul %24, %25, %cst_20 {dimension_numbers = #tpu.dot_dimension_numbers<[1], [0], [0], [1], [0, 0, 1, 1], [], []>} : vector<16x1152xbf16>, vector<1152x128xbf16>, vector<16x128xf32> -> vector<16x128xf32>
    %c0_21 = arith.constant 0 : index
    %c0_22 = arith.constant 0 : index
    %27 = vector.load %arg9[%c0_21, %c0_22] : memref<1x128xf32, #tpu.memory_space<vmem>>, vector<1x128xf32>
    %28 = vector.broadcast %27 : vector<1x128xf32> to vector<16x128xf32>
    %29 = arith.addf %26, %28 : vector<16x128xf32>
    %cst_23 = arith.constant 0.000000e+00 : f32
    %30 = vector.broadcast %cst_23 : f32 to vector<16x128xf32>
    %31 = arith.maximumf %29, %30 : vector<16x128xf32>
    %32 = arith.truncf %31 : vector<16x128xf32> to vector<16x128xbf16>
    %c0_24 = arith.constant 0 : index
    %c0_25 = arith.constant 0 : index
    %33 = vector.load %arg10[%c0_24, %c0_25] : memref<128x256xbf16, #tpu.memory_space<vmem>>, vector<128x256xbf16>
    %cst_26 = arith.constant dense<0.000000e+00> : vector<16x256xf32>
    %34 = tpu.matmul %32, %33, %cst_26 {dimension_numbers = #tpu.dot_dimension_numbers<[1], [0], [0], [1], [0, 0, 1, 1], [], []>} : vector<16x128xbf16>, vector<128x256xbf16>, vector<16x256xf32> -> vector<16x256xf32>
    %c0_27 = arith.constant 0 : index
    %c0_28 = arith.constant 0 : index
    %35 = vector.load %arg11[%c0_27, %c0_28] : memref<1x256xf32, #tpu.memory_space<vmem>>, vector<1x256xf32>
    %36 = vector.broadcast %35 : vector<1x256xf32> to vector<16x256xf32>
    %37 = arith.addf %34, %36 : vector<16x256xf32>
    %38 = vector.extract_strided_slice %37 {offsets = [0, 0], sizes = [16, 128], strides = [1, 1]} : vector<16x256xf32> to vector<16x128xf32>
    %39 = vector.extract_strided_slice %37 {offsets = [0, 128], sizes = [16, 128], strides = [1, 1]} : vector<16x256xf32> to vector<16x128xf32>
    %cst_29 = arith.constant 0.000000e+00 : f32
    %40 = vector.broadcast %cst_29 : f32 to vector<16x128xf32>
    %41 = arith.maximumf %39, %40 : vector<16x128xf32>
    %cst_30 = arith.constant dense<0xFF800000> : vector<16xf32>
    %42 = vector.multi_reduction <maximumf>, %38, %cst_30 [1] : vector<16x128xf32> to vector<16xf32>
    %43 = vector.shape_cast %42 : vector<16xf32> to vector<16x1xf32>
    %44 = vector.broadcast %43 : vector<16x1xf32> to vector<16x128xf32>
    %45 = arith.subf %38, %44 : vector<16x128xf32>
    %46 = math.exp %45 : vector<16x128xf32>
    %cst_31 = arith.constant dense<0.000000e+00> : vector<16xf32>
    %47 = vector.multi_reduction <add>, %46, %cst_31 [1] : vector<16x128xf32> to vector<16xf32>
    %48 = vector.shape_cast %47 : vector<16xf32> to vector<16x1xf32>
    %49 = tpu.reciprocal %48 {approx = true} : vector<16x1xf32> -> vector<16x1xf32>
    %50 = vector.broadcast %49 : vector<16x1xf32> to vector<16x128xf32>
    %51 = arith.mulf %46, %50 : vector<16x128xf32>
    %52 = arith.truncf %41 : vector<16x128xf32> to vector<16x128xbf16>
    %c0_32 = arith.constant 0 : index
    %c0_33 = arith.constant 0 : index
    %53 = vector.load %arg12[%c0_32, %c0_33] : memref<128x128xbf16, #tpu.memory_space<vmem>>, vector<128x128xbf16>
    %cst_34 = arith.constant dense<0.000000e+00> : vector<16x128xf32>
    %54 = tpu.matmul %52, %53, %cst_34 {dimension_numbers = #tpu.dot_dimension_numbers<[1], [0], [0], [1], [0, 0, 1, 1], [], []>} : vector<16x128xbf16>, vector<128x128xbf16>, vector<16x128xf32> -> vector<16x128xf32>
    %c0_35 = arith.constant 0 : index
    %c0_36 = arith.constant 0 : index
    %55 = vector.load %arg13[%c0_35, %c0_36] : memref<1x128xf32, #tpu.memory_space<vmem>>, vector<1x128xf32>
    %56 = vector.broadcast %55 : vector<1x128xf32> to vector<16x128xf32>
    %57 = arith.addf %54, %56 : vector<16x128xf32>
    %58 = math.tanh %57 : vector<16x128xf32>
    %c0_37 = arith.constant 0 : index
    %c0_38 = arith.constant 0 : index
    %59 = vector.load %arg14[%c0_37, %c0_38] : memref<16x256xf32, #tpu.memory_space<vmem>>, vector<16x128xf32>
    tpu.vector_store %arg14[%c0_37, %c0_38], %51 {strides = array<i32>} : memref<16x256xf32, #tpu.memory_space<vmem>>, vector<16x128xf32>,
    %c0_39 = arith.constant 0 : index
    %c128 = arith.constant 128 : index
    %60 = vector.load %arg14[%c0_39, %c128] : memref<16x256xf32, #tpu.memory_space<vmem>>, vector<16x128xf32>
    tpu.vector_store %arg14[%c0_39, %c128], %58 {strides = array<i32>} : memref<16x256xf32, #tpu.memory_space<vmem>>, vector<16x128xf32>,
    return
  }
  func.func @transform_0(%arg0: i32) -> (i32, i32) {
    %c0_i32 = arith.constant 0 : i32
    %c0_i32_0 = arith.constant 0 : i32
    return %arg0, %c0_i32 : i32, i32
  }
  func.func @transform_1(%arg0: i32) -> (i32, i32) {
    %c0_i32 = arith.constant 0 : i32
    %c0_i32_0 = arith.constant 0 : i32
    %c0_i32_1 = arith.constant 0 : i32
    return %c0_i32, %c0_i32_0 : i32, i32
  }
  func.func @transform_2(%arg0: i32) -> (i32, i32) {
    %c0_i32 = arith.constant 0 : i32
    %c0_i32_0 = arith.constant 0 : i32
    %c0_i32_1 = arith.constant 0 : i32
    return %c0_i32, %c0_i32_0 : i32, i32
  }
  func.func @transform_3(%arg0: i32) -> (i32, i32) {
    %c0_i32 = arith.constant 0 : i32
    %c0_i32_0 = arith.constant 0 : i32
    %c0_i32_1 = arith.constant 0 : i32
    return %c0_i32, %c0_i32_0 : i32, i32
  }
  func.func @transform_4(%arg0: i32) -> (i32, i32) {
    %c0_i32 = arith.constant 0 : i32
    %c0_i32_0 = arith.constant 0 : i32
    %c0_i32_1 = arith.constant 0 : i32
    return %c0_i32, %c0_i32_0 : i32, i32
  }
  func.func @transform_5(%arg0: i32) -> (i32, i32) {
    %c0_i32 = arith.constant 0 : i32
    %c0_i32_0 = arith.constant 0 : i32
    %c0_i32_1 = arith.constant 0 : i32
    return %c0_i32, %c0_i32_0 : i32, i32
  }
  func.func @transform_6(%arg0: i32) -> (i32, i32) {
    %c0_i32 = arith.constant 0 : i32
    %c0_i32_0 = arith.constant 0 : i32
    %c0_i32_1 = arith.constant 0 : i32
    return %c0_i32, %c0_i32_0 : i32, i32
  }
  func.func @transform_7(%arg0: i32) -> (i32, i32) {
    %c0_i32 = arith.constant 0 : i32
    %c0_i32_0 = arith.constant 0 : i32
    %c0_i32_1 = arith.constant 0 : i32
    return %c0_i32, %c0_i32_0 : i32, i32
  }
  func.func @transform_8(%arg0: i32) -> (i32, i32) {
    %c0_i32 = arith.constant 0 : i32
    %c0_i32_0 = arith.constant 0 : i32
    %c0_i32_1 = arith.constant 0 : i32
    return %c0_i32, %c0_i32_0 : i32, i32
  }
  func.func @transform_9(%arg0: i32) -> (i32, i32) {
    %c0_i32 = arith.constant 0 : i32
    %c0_i32_0 = arith.constant 0 : i32
    %c0_i32_1 = arith.constant 0 : i32
    return %c0_i32, %c0_i32_0 : i32, i32
  }
  func.func @transform_10(%arg0: i32) -> (i32, i32) {
    %c0_i32 = arith.constant 0 : i32
    %c0_i32_0 = arith.constant 0 : i32
    %c0_i32_1 = arith.constant 0 : i32
    return %c0_i32, %c0_i32_0 : i32, i32
  }
  func.func @transform_11(%arg0: i32) -> (i32, i32) {
    %c0_i32 = arith.constant 0 : i32
    %c0_i32_0 = arith.constant 0 : i32
    %c0_i32_1 = arith.constant 0 : i32
    return %c0_i32, %c0_i32_0 : i32, i32
  }
  func.func @transform_12(%arg0: i32) -> (i32, i32) {
    %c0_i32 = arith.constant 0 : i32
    %c0_i32_0 = arith.constant 0 : i32
    %c0_i32_1 = arith.constant 0 : i32
    return %c0_i32, %c0_i32_0 : i32, i32
  }
  func.func @transform_13(%arg0: i32) -> (i32, i32) {
    %c0_i32 = arith.constant 0 : i32
    %c0_i32_0 = arith.constant 0 : i32
    return %arg0, %c0_i32 : i32, i32
  }
}

</mosaic_0001>

<llo_original>
// kernel: net_forward.1
$region0: #{net_forward.1}
  #allocation0 [shape = 'u32[]', space=smem, size = 0x4, offset = 0x4, fixed_abs, tag = 'smem constant byte address 0x4 - core index']
  #allocation1 [shape = 'u32[144,128]{1,0:T(1,128)}', space=vmem, size = 0x12000, scoped, tag = 'internal scratch']
  %s0 = inlined_call_operand.vmem [shape: bf16[16,128], index: 0, kind: input, shape index: {}]
  %s1 = inlined_call_operand.hbm [shape: bf16[128,384], index: 1, kind: input, shape index: {}]
  %s2 = inlined_call_operand.hbm [shape: f32[1,384], index: 2, kind: input, shape index: {}]
  %s3 = inlined_call_operand.hbm [shape: bf16[384,640], index: 3, kind: input, shape index: {}]
  %s4 = inlined_call_operand.hbm [shape: f32[1,640], index: 4, kind: input, shape index: {}]
  %s5 = inlined_call_operand.hbm [shape: bf16[640,1152], index: 5, kind: input, shape index: {}]
  %s6 = inlined_call_operand.hbm [shape: f32[1,1152], index: 6, kind: input, shape index: {}]
  %s7 = inlined_call_operand.hbm [shape: bf16[1152,128], index: 7, kind: input, shape index: {}]
  %s8 = inlined_call_operand.hbm [shape: f32[1,128], index: 8, kind: input, shape index: {}]
  %s9 = inlined_call_operand.hbm [shape: bf16[128,256], index: 9, kind: input, shape index: {}]
  %s10 = inlined_call_operand.hbm [shape: f32[1,256], index: 10, kind: input, shape index: {}]
  %s11 = inlined_call_operand.hbm [shape: bf16[128,128], index: 11, kind: input, shape index: {}]
  %s12 = inlined_call_operand.hbm [shape: f32[1,128], index: 12, kind: input, shape index: {}]
  %s13 = inlined_call_operand.vmem [shape: f32[16,256], index: 13, kind: output, shape index: {}]
  %s14 = sld [smem:[#allocation0]]
  $region110: #{net_forward.1} parent=0
    _
  %s16 = ssub.s32 1, %s14
  %s17 = scalar_select 0, %s16, %s14
  $region1: #{net_forward.1} parent=0
    #allocation2 [shape = 'u8[98304]{0}', space=vmem, size = 0x18000, scoped, tag = 'input window, operand 1, single buffered']
    #allocation3 [shape = 's32[1]{0}', space=sflag, size = 0x4, scoped, tag = 'scoped memory for net_forward.1']
    #allocation4 [shape = 'u8[1536]{0}', space=vmem, size = 0x800, scoped, tag = 'input window, operand 2, single buffered']
    #allocation5 [shape = 's32[1]{0}', space=sflag, size = 0x4, scoped, tag = 'scoped memory for net_forward.1']
    #allocation6 [shape = 'u8[491520]{0}', space=vmem, size = 0x78000, scoped, tag = 'input window, operand 3, single buffered']
    #allocation7 [shape = 'u8[2560]{0}', space=vmem, size = 0xc00, scoped, tag = 'input window, operand 4, single buffered']
    #allocation8 [shape = 's32[1]{0}', space=sflag, size = 0x4, scoped, tag = 'scoped memory for net_forward.1']
    #allocation9 [shape = 'u8[1474560]{0}', space=vmem, size = 0x168000, scoped, tag = 'input window, operand 5, single buffered']
    #allocation10 [shape = 'u8[4608]{0}', space=vmem, size = 0x1400, scoped, tag = 'input window, operand 6, single buffered']
    #allocation11 [shape = 's32[1]{0}', space=sflag, size = 0x4, scoped, tag = 'scoped memory for net_forward.1']
    #allocation12 [shape = 'u8[294912]{0}', space=vmem, size = 0x48000, scoped, tag = 'input window, operand 7, single buffered']
    #allocation13 [shape = 'u8[512]{0}', space=vmem, size = 0x400, scoped, tag = 'input window, operand 8, single buffered']
    #allocation14 [shape = 's32[1]{0}', space=sflag, size = 0x4, scoped, tag = 'scoped memory for net_forward.1']
    #allocation15 [shape = 'u8[65536]{0}', space=vmem, size = 0x10000, scoped, tag = 'input window, operand 9, single buffered']
    #allocation16 [shape = 'u8[1024]{0}', space=vmem, size = 0x400, scoped, tag = 'input window, operand 10, single buffered']
    #allocation17 [shape = 's32[1]{0}', space=sflag, size = 0x4, scoped, tag = 'scoped memory for net_forward.1']
    #allocation18 [shape = 'u8[32768]{0}', space=vmem, size = 0x8000, scoped, tag = 'input window, operand 11, single buffered']
    #allocation19 [shape = 'u8[512]{0}', space=vmem, size = 0x400, scoped, tag = 'input window, operand 12, single buffered']
    #allocation20 [shape = 's32[1]{0}', space=sflag, size = 0x4, scoped, tag = 'scoped memory for net_forward.1']
    %18 = vsyncpa [#allocation3], 0
    %19 = vsyncpa [#allocation5], 0
    %20 = vsyncpa [#allocation8], 0
    %21 = vsyncpa [#allocation11], 0
    %22 = vsyncpa [#allocation14], 0
    %23 = vsyncpa [#allocation17], 0
    %24 = vsyncpa [#allocation20], 0
    // Predicated region
    $region2: #{net_forward.1} parent=1 // pred_check
      _
    $region3: #{net_forward.1} parent=1 // pred_check_branch
      %26 = sbr.rel (0) target = $region5
    $region4: #{net_forward.1} parent=1 // pred_region
      _
    $region5: #{net_forward.1} parent=1 // pred_fallthru
      _
    // Predicated region
    $region6: #{net_forward.1} parent=1 // pred_check
      _
    $region7: #{net_forward.1} parent=1 // pred_check_branch
      %28 = sbr.rel (0) target = $region9
    $region8: #{net_forward.1} parent=1 // pred_region
      %s30 = ssub.s32 3072, 3072
      %31 = vsyncadd [#allocation3], %s30
      %s32 = sshll.u32 [#allocation2], 4
      %s33 = int_to_ptr.vmem [resolvable:$true] %s32
      %38 = dma.hbm_to_vmem [thread:$0]  %s1, 3072, %s33, [#allocation3], 192, 192, 12
    $region9: #{net_forward.1} parent=1 // pred_fallthru
      _
    // Predicated region
    $region10: #{net_forward.1} parent=1 // pred_check
      _
    $region11: #{net_forward.1} parent=1 // pred_check_branch
      %40 = sbr.rel (0) target = $region13
    $region12: #{net_forward.1} parent=1 // pred_region
      %s42 = ssub.s32 48, 48
      %43 = vsyncadd [#allocation5], %s42
      %s45 = sshll.u32 [#allocation4], 4
      %s46 = int_to_ptr.vmem [resolvable:$true] %s45
      %48 = dma.hbm_to_vmem [thread:$0]  %s2, 48, %s46, [#allocation5]
    $region13: #{net_forward.1} parent=1 // pred_fallthru
      _
    // Predicated region
    $region14: #{net_forward.1} parent=1 // pred_check
      _
    $region15: #{net_forward.1} parent=1 // pred_check_branch
      %50 = sbr.rel (0) target = $region17
    $region16: #{net_forward.1} parent=1 // pred_region
      %s52 = ssub.s32 15360, 15360
      %53 = vsyncadd [#allocation5], %s52
      %s54 = sshll.u32 [#allocation6], 4
      %s55 = int_to_ptr.vmem [resolvable:$true] %s54
      %60 = dma.hbm_to_vmem [thread:$0]  %s3, 15360, %s55, [#allocation5], 320, 320, 20
    $region17: #{net_forward.1} parent=1 // pred_fallthru
      _
    // Predicated region
    $region18: #{net_forward.1} parent=1 // pred_check
      _
    $region19: #{net_forward.1} parent=1 // pred_check_branch
      %62 = sbr.rel (0) target = $region21
    $region20: #{net_forward.1} parent=1 // pred_region
      %s64 = ssub.s32 80, 80
      %65 = vsyncadd [#allocation8], %s64
      %s67 = sshll.u32 [#allocation7], 4
      %s68 = int_to_ptr.vmem [resolvable:$true] %s67
      %70 = dma.hbm_to_vmem [thread:$0]  %s4, 80, %s68, [#allocation8]
    $region21: #{net_forward.1} parent=1 // pred_fallthru
      _
    // Predicated region
    $region22: #{net_forward.1} parent=1 // pred_check
      _
    $region23: #{net_forward.1} parent=1 // pred_check_branch
      %72 = sbr.rel (0) target = $region25
    $region24: #{net_forward.1} parent=1 // pred_region
      %s74 = ssub.s32 46080, 46080
      %75 = vsyncadd [#allocation8], %s74
      %s76 = sshll.u32 [#allocation9], 4
      %s77 = int_to_ptr.vmem [resolvable:$true] %s76
      %82 = dma.hbm_to_vmem [thread:$0]  %s5, 46080, %s77, [#allocation8], 576, 576, 36
    $region25: #{net_forward.1} parent=1 // pred_fallthru
      _
    // Predicated region
    $region26: #{net_forward.1} parent=1 // pred_check
      _
    $region27: #{net_forward.1} parent=1 // pred_check_branch
      %84 = sbr.rel (0) target = $region29
    $region28: #{net_forward.1} parent=1 // pred_region
      %s86 = ssub.s32 144, 144
      %87 = vsyncadd [#allocation11], %s86
      %s89 = sshll.u32 [#allocation10], 4
      %s90 = int_to_ptr.vmem [resolvable:$true] %s89
      %92 = dma.hbm_to_vmem [thread:$0]  %s6, 144, %s90, [#allocation11]
    $region29: #{net_forward.1} parent=1 // pred_fallthru
      _
    // Predicated region
    $region30: #{net_forward.1} parent=1 // pred_check
      _
    $region31: #{net_forward.1} parent=1 // pred_check_branch
      %94 = sbr.rel (0) target = $region33
    $region32: #{net_forward.1} parent=1 // pred_region
      %s96 = ssub.s32 9216, 9216
      %97 = vsyncadd [#allocation11], %s96
      %s98 = sshll.u32 [#allocation12], 4
      %s99 = int_to_ptr.vmem [resolvable:$true] %s98
      %104 = dma.hbm_to_vmem [thread:$0]  %s7, 9216, %s99, [#allocation11], 64, 64, 4
    $region33: #{net_forward.1} parent=1 // pred_fallthru
      _
    // Predicated region
    $region34: #{net_forward.1} parent=1 // pred_check
      _
    $region35: #{net_forward.1} parent=1 // pred_check_branch
      %106 = sbr.rel (0) target = $region37
    $region36: #{net_forward.1} parent=1 // pred_region
      %s108 = ssub.s32 16, 16
      %109 = vsyncadd [#allocation14], %s108
      %s111 = sshll.u32 [#allocation13], 4
      %s112 = int_to_ptr.vmem [resolvable:$true] %s111
      %114 = dma.hbm_to_vmem [thread:$0]  %s8, 16, %s112, [#allocation14]
    $region37: #{net_forward.1} parent=1 // pred_fallthru
      _
    // Predicated region
    $region38: #{net_forward.1} parent=1 // pred_check
      _
    $region39: #{net_forward.1} parent=1 // pred_check_branch
      %116 = sbr.rel (0) target = $region41
    $region40: #{net_forward.1} parent=1 // pred_region
      %s118 = ssub.s32 2048, 2048
      %119 = vsyncadd [#allocation14], %s118
      %s120 = sshll.u32 [#allocation15], 4
      %s121 = int_to_ptr.vmem [resolvable:$true] %s120
      %126 = dma.hbm_to_vmem [thread:$0]  %s9, 2048, %s121, [#allocation14], 128, 128, 8
    $region41: #{net_forward.1} parent=1 // pred_fallthru
      _
    // Predicated region
    $region42: #{net_forward.1} parent=1 // pred_check
      _
    $region43: #{net_forward.1} parent=1 // pred_check_branch
      %128 = sbr.rel (0) target = $region45
    $region44: #{net_forward.1} parent=1 // pred_region
      %s130 = ssub.s32 32, 32
      %131 = vsyncadd [#allocation17], %s130
      %s133 = sshll.u32 [#allocation16], 4
      %s134 = int_to_ptr.vmem [resolvable:$true] %s133
      %136 = dma.hbm_to_vmem [thread:$0]  %s10, 32, %s134, [#allocation17]
    $region45: #{net_forward.1} parent=1 // pred_fallthru
      _
    // Predicated region
    $region46: #{net_forward.1} parent=1 // pred_check
      _
    $region47: #{net_forward.1} parent=1 // pred_check_branch
      %138 = sbr.rel (0) target = $region49
    $region48: #{net_forward.1} parent=1 // pred_region
      %s140 = ssub.s32 1024, 1024
      %141 = vsyncadd [#allocation17], %s140
      %s142 = sshll.u32 [#allocation18], 4
      %s143 = int_to_ptr.vmem [resolvable:$true] %s142
      %148 = dma.hbm_to_vmem [thread:$0]  %s11, 1024, %s143, [#allocation17], 64, 64, 4
    $region49: #{net_forward.1} parent=1 // pred_fallthru
      _
    // Predicated region
    $region50: #{net_forward.1} parent=1 // pred_check
      _
    $region51: #{net_forward.1} parent=1 // pred_check_branch
      %150 = sbr.rel (0) target = $region53
    $region52: #{net_forward.1} parent=1 // pred_region
      %s152 = ssub.s32 16, 16
      %153 = vsyncadd [#allocation20], %s152
      %s155 = sshll.u32 [#allocation19], 4
      %s156 = int_to_ptr.vmem [resolvable:$true] %s155
      %158 = dma.hbm_to_vmem [thread:$0]  %s12, 16, %s156, [#allocation20]
    $region53: #{net_forward.1} parent=1 // pred_fallthru
      _
    // Predicated region
    $region54: #{net_forward.1} parent=1 // pred_check
      _
    $region55: #{net_forward.1} parent=1 // pred_check_branch
      %160 = sbr.rel (0) target = $region57
    $region56: #{net_forward.1} parent=1 // pred_region
      %161 = dma.done [#allocation3], 3072
    $region57: #{net_forward.1} parent=1 // pred_fallthru
      _
    // Predicated region
    $region58: #{net_forward.1} parent=1 // pred_check
      _
    $region59: #{net_forward.1} parent=1 // pred_check_branch
      %163 = sbr.rel (0) target = $region61
    $region60: #{net_forward.1} parent=1 // pred_region
      %164 = dma.done [#allocation5], 48
    $region61: #{net_forward.1} parent=1 // pred_fallthru
      _
    // Predicated region
    $region62: #{net_forward.1} parent=1 // pred_check
      _
    $region63: #{net_forward.1} parent=1 // pred_check_branch
      %166 = sbr.rel (0) target = $region65
    $region64: #{net_forward.1} parent=1 // pred_region
      %167 = dma.done [#allocation5], 15360
    $region65: #{net_forward.1} parent=1 // pred_fallthru
      _
    // Predicated region
    $region66: #{net_forward.1} parent=1 // pred_check
      _
    $region67: #{net_forward.1} parent=1 // pred_check_branch
      %169 = sbr.rel (0) target = $region69
    $region68: #{net_forward.1} parent=1 // pred_region
      %170 = dma.done [#allocation8], 80
    $region69: #{net_forward.1} parent=1 // pred_fallthru
      _
    // Predicated region
    $region70: #{net_forward.1} parent=1 // pred_check
      _
    $region71: #{net_forward.1} parent=1 // pred_check_branch
      %172 = sbr.rel (0) target = $region73
    $region72: #{net_forward.1} parent=1 // pred_region
      %173 = dma.done [#allocation8], 46080
    $region73: #{net_forward.1} parent=1 // pred_fallthru
      _
    // Predicated region
    $region74: #{net_forward.1} parent=1 // pred_check
      _
    $region75: #{net_forward.1} parent=1 // pred_check_branch
      %175 = sbr.rel (0) target = $region77
    $region76: #{net_forward.1} parent=1 // pred_region
      %176 = dma.done [#allocation11], 144
    $region77: #{net_forward.1} parent=1 // pred_fallthru
      _
    // Predicated region
    $region78: #{net_forward.1} parent=1 // pred_check
      _
    $region79: #{net_forward.1} parent=1 // pred_check_branch
      %178 = sbr.rel (0) target = $region81
    $region80: #{net_forward.1} parent=1 // pred_region
      %179 = dma.done [#allocation11], 9216
    $region81: #{net_forward.1} parent=1 // pred_fallthru
      _
    // Predicated region
    $region82: #{net_forward.1} parent=1 // pred_check
      _
    $region83: #{net_forward.1} parent=1 // pred_check_branch
      %181 = sbr.rel (0) target = $region85
    $region84: #{net_forward.1} parent=1 // pred_region
      %182 = dma.done [#allocation14], 16
    $region85: #{net_forward.1} parent=1 // pred_fallthru
      _
    // Predicated region
    $region86: #{net_forward.1} parent=1 // pred_check
      _
    $region87: #{net_forward.1} parent=1 // pred_check_branch
      %184 = sbr.rel (0) target = $region89
    $region88: #{net_forward.1} parent=1 // pred_region
      %185 = dma.done [#allocation14], 2048
    $region89: #{net_forward.1} parent=1 // pred_fallthru
      _
    // Predicated region
    $region90: #{net_forward.1} parent=1 // pred_check
      _
    $region91: #{net_forward.1} parent=1 // pred_check_branch
      %187 = sbr.rel (0) target = $region93
    $region92: #{net_forward.1} parent=1 // pred_region
      %188 = dma.done [#allocation17], 32
    $region93: #{net_forward.1} parent=1 // pred_fallthru
      _
    // Predicated region
    $region94: #{net_forward.1} parent=1 // pred_check
      _
    $region95: #{net_forward.1} parent=1 // pred_check_branch
      %190 = sbr.rel (0) target = $region97
    $region96: #{net_forward.1} parent=1 // pred_region
      %191 = dma.done [#allocation17], 1024
    $region97: #{net_forward.1} parent=1 // pred_fallthru
      _
    // Predicated region
    $region98: #{net_forward.1} parent=1 // pred_check
      _
    $region99: #{net_forward.1} parent=1 // pred_check_branch
      %193 = sbr.rel (0) target = $region101
    $region100: #{net_forward.1} parent=1 // pred_region
      %194 = dma.done [#allocation20], 16
    $region101: #{net_forward.1} parent=1 // pred_fallthru
      _
    %v196 = vld [vmem:[%s0] sm:$0xf]
    %v197 = vld [vmem:[%s0 + $0x4] sm:$0xf]
    %v198 = vld [vmem:[#allocation2] sm:$0xff]
    %v199 = vld [vmem:[#allocation2 + $0x8] sm:$0xf]
    %v200 = vld [vmem:[#allocation2 + $0xc] sm:$0xff]
    %v201 = vld [vmem:[#allocation2 + $0x14] sm:$0xf]
    %v202 = vld [vmem:[#allocation2 + $0x18] sm:$0xff]
    %v203 = vld [vmem:[#allocation2 + $0x20] sm:$0xf]
    %v204 = vld [vmem:[#allocation2 + $0x24] sm:$0xff]
    %v205 = vld [vmem:[#allocation2 + $0x2c] sm:$0xf]
    %v206 = vld [vmem:[#allocation2 + $0x30] sm:$0xff]
    %v207 = vld [vmem:[#allocation2 + $0x38] sm:$0xf]
    %v208 = vld [vmem:[#allocation2 + $0x3c] sm:$0xff]
    %v209 = vld [vmem:[#allocation2 + $0x44] sm:$0xf]
    %v210 = vld [vmem:[#allocation2 + $0x48] sm:$0xff]
    %v211 = vld [vmem:[#allocation2 + $0x50] sm:$0xf]
    %v212 = vld [vmem:[#allocation2 + $0x54] sm:$0xff]
    %v213 = vld [vmem:[#allocation2 + $0x5c] sm:$0xf]
    %v214 = vld [vmem:[#allocation2 + $0x60] sm:$0xff]
    %v215 = vld [vmem:[#allocation2 + $0x68] sm:$0xf]
    %v216 = vld [vmem:[#allocation2 + $0x6c] sm:$0xff]
    %v217 = vld [vmem:[#allocation2 + $0x74] sm:$0xf]
    %v218 = vld [vmem:[#allocation2 + $0x78] sm:$0xff]
    %v219 = vld [vmem:[#allocation2 + $0x80] sm:$0xf]
    %v220 = vld [vmem:[#allocation2 + $0x84] sm:$0xff]
    %v221 = vld [vmem:[#allocation2 + $0x8c] sm:$0xf]
    %v222 = vld [vmem:[#allocation2 + $0x90] sm:$0xff]
    %v223 = vld [vmem:[#allocation2 + $0x98] sm:$0xf]
    %v224 = vld [vmem:[#allocation2 + $0x9c] sm:$0xff]
    %v225 = vld [vmem:[#allocation2 + $0xa4] sm:$0xf]
    %v226 = vld [vmem:[#allocation2 + $0xa8] sm:$0xff]
    %v227 = vld [vmem:[#allocation2 + $0xb0] sm:$0xf]
    %v228 = vld [vmem:[#allocation2 + $0xb4] sm:$0xff]
    %v229 = vld [vmem:[#allocation2 + $0xbc] sm:$0xf]
    %v230 = vld [vmem:[#allocation4] sm:$0x7]
    %v232 = vlaneseq
    %v233 = vshrl.u32 %v232, 7
    %v234 = vsub.s32 0, %v233
    %v235 = vrot.slane %v230, %v234
    %v236 = vlaneseq
    %v237 = vshrl.u32 %v236, 7
    %v238 = vsub.s32 1, %v237
    %v239 = vrot.slane %v230, %v238
    %v240 = vlaneseq
    %v241 = vshrl.u32 %v240, 7
    %v242 = vsub.s32 2, %v241
    %v243 = vrot.slane %v230, %v242
    %v249 = vunpack.c.l.b16 %v196
    %v250 = vunpack.c.l.b16 %v197
    %v251 = vpack.c.b16 %v250, %v249
    %v285 = vunpack.c.l.b16 %v198
    %v286 = vunpack.c.h.b16 %v198
    %v287 = vunpack.c.l.b16 %v199
    %v288 = vunpack.c.l.b16 %v200
    %v289 = vunpack.c.h.b16 %v200
    %v290 = vunpack.c.l.b16 %v201
    %v291 = vunpack.c.l.b16 %v202
    %v292 = vunpack.c.h.b16 %v202
    %v293 = vunpack.c.l.b16 %v203
    %v294 = vunpack.c.l.b16 %v204
    %v295 = vunpack.c.h.b16 %v204
    %v296 = vunpack.c.l.b16 %v205
    %v297 = vunpack.c.l.b16 %v206
    %v298 = vunpack.c.h.b16 %v206
    %v299 = vunpack.c.l.b16 %v207
    %v300 = vunpack.c.l.b16 %v208
    %v301 = vunpack.c.h.b16 %v208
    %v302 = vunpack.c.l.b16 %v209
    %v303 = vunpack.c.l.b16 %v210
    %v304 = vunpack.c.h.b16 %v210
    %v305 = vunpack.c.l.b16 %v211
    %v306 = vunpack.c.l.b16 %v212
    %v307 = vunpack.c.h.b16 %v212
    %v308 = vunpack.c.l.b16 %v213
    %v309 = vunpack.c.l.b16 %v214
    %v310 = vunpack.c.h.b16 %v214
    %v311 = vunpack.c.l.b16 %v215
    %v312 = vunpack.c.l.b16 %v216
    %v313 = vunpack.c.h.b16 %v216
    %v314 = vunpack.c.l.b16 %v217
    %v315 = vunpack.c.l.b16 %v218
    %v316 = vunpack.c.h.b16 %v218
    %v317 = vunpack.c.l.b16 %v219
    %v318 = vunpack.c.l.b16 %v220
    %v319 = vunpack.c.h.b16 %v220
    %v320 = vunpack.c.l.b16 %v221
    %v321 = vunpack.c.l.b16 %v222
    %v322 = vunpack.c.h.b16 %v222
    %v323 = vunpack.c.l.b16 %v223
    %v324 = vunpack.c.l.b16 %v224
    %v325 = vunpack.c.h.b16 %v224
    %v326 = vunpack.c.l.b16 %v225
    %v327 = vunpack.c.l.b16 %v226
    %v328 = vunpack.c.h.b16 %v226
    %v329 = vunpack.c.l.b16 %v227
    %v330 = vunpack.c.l.b16 %v228
    %v331 = vunpack.c.h.b16 %v228
    %v332 = vunpack.c.l.b16 %v229
    %v333 = vpack.c.b16 %v288, %v285
    %v334 = vpack.c.b16 %v289, %v286
    %v335 = vpack.c.b16 %v290, %v287
    %v336 = vpack.c.b16 %v294, %v291
    %v337 = vpack.c.b16 %v295, %v292
    %v338 = vpack.c.b16 %v296, %v293
    %v339 = vpack.c.b16 %v300, %v297
    %v340 = vpack.c.b16 %v301, %v298
    %v341 = vpack.c.b16 %v302, %v299
    %v342 = vpack.c.b16 %v306, %v303
    %v343 = vpack.c.b16 %v307, %v304
    %v344 = vpack.c.b16 %v308, %v305
    %v345 = vpack.c.b16 %v312, %v309
    %v346 = vpack.c.b16 %v313, %v310
    %v347 = vpack.c.b16 %v314, %v311
    %v348 = vpack.c.b16 %v318, %v315
    %v349 = vpack.c.b16 %v319, %v316
    %v350 = vpack.c.b16 %v320, %v317
    %v351 = vpack.c.b16 %v324, %v321
    %v352 = vpack.c.b16 %v325, %v322
    %v353 = vpack.c.b16 %v326, %v323
    %v354 = vpack.c.b16 %v330, %v327
    %v355 = vpack.c.b16 %v331, %v328
    %v356 = vpack.c.b16 %v332, %v329
    %381 = vmatprep.subr.bf16.mxu0 %v334
    %382 = vmatpush1.bf16.msra.mxu0 %v333
    %383 = vmatprep.subr.bf16.mxu0 %v337
    %384 = vmatpush1.bf16.msra.mxu0 %v336
    %385 = vmatprep.subr.bf16.mxu0 %v340
    %386 = vmatpush1.bf16.msra.mxu0 %v339
    %387 = vmatprep.subr.bf16.mxu0 %v343
    %388 = vmatpush1.bf16.msra.mxu0 %v342
    %389 = vmatprep.subr.bf16.mxu0 %v346
    %390 = vmatpush1.bf16.msra.mxu0 %v345
    %391 = vmatprep.subr.bf16.mxu0 %v349
    %392 = vmatpush1.bf16.msra.mxu0 %v348
    %393 = vmatprep.subr.bf16.mxu0 %v352
    %394 = vmatpush1.bf16.msra.mxu0 %v351
    %395 = vmatprep.subr.bf16.mxu0 %v355
    %396 = vmatpush1.bf16.msra.mxu0 %v354
    %397 = vmatprep.subr.bf16.mxu0 0
    %398 = vmatpush1.bf16.msra.mxu0 0
    %399 = vmatprep.subr.bf16.mxu0 0
    %400 = vmatpush1.bf16.msra.mxu0 0
    %401 = vmatprep.subr.bf16.mxu0 0
    %402 = vmatpush1.bf16.msra.mxu0 0
    %403 = vmatprep.subr.bf16.mxu0 0
    %404 = vmatpush1.bf16.msra.mxu0 0
    %405 = vmatprep.subr.bf16.mxu0 0
    %406 = vmatpush1.bf16.msra.mxu0 0
    %407 = vmatprep.subr.bf16.mxu0 0
    %408 = vmatpush1.bf16.msra.mxu0 0
    %409 = vmatprep.subr.bf16.mxu0 0
    %410 = vmatpush1.bf16.msra.mxu0 0
    %411 = vmatprep.subr.bf16.mxu0 0
    %412 = vmatpush1.bf16.msra.mxu0 0
    %413 = vmatprep.mubr.bf16.mxu0 0
    %414 = vmatmul.mubr.bf16.gmra.mrb[0].mxu0 %v251
    %v415 = vpop.f32.mrb[0].mxu0
    %v416 = vadd.f32 %v235, %v415
    %v417 = vpop.f32.mrb[0].mxu0
    %v418 = vadd.f32 %v239, %v417
    %v419 = vpop.f32.mrb[0].mxu0
    %v420 = vadd.f32 %v235, %v419
    %v421 = vpop.f32.mrb[0].mxu0
    %v422 = vadd.f32 %v239, %v421
    %423 = vdwg.mxu0
    %424 = vmatprep.subr.bf16.mxu0 0
    %425 = vmatpush1.bf16.msra.mxu0 %v335
    %426 = vmatprep.subr.bf16.mxu0 0
    %427 = vmatpush1.bf16.msra.mxu0 %v338
    %428 = vmatprep.subr.bf16.mxu0 0
    %429 = vmatpush1.bf16.msra.mxu0 %v341
    %430 = vmatprep.subr.bf16.mxu0 0
    %431 = vmatpush1.bf16.msra.mxu0 %v344
    %432 = vmatprep.subr.bf16.mxu0 0
    %433 = vmatpush1.bf16.msra.mxu0 %v347
    %434 = vmatprep.subr.bf16.mxu0 0
    %435 = vmatpush1.bf16.msra.mxu0 %v350
    %436 = vmatprep.subr.bf16.mxu0 0
    %437 = vmatpush1.bf16.msra.mxu0 %v353
    %438 = vmatprep.subr.bf16.mxu0 0
    %439 = vmatpush1.bf16.msra.mxu0 %v356
    %440 = vmatprep.subr.bf16.mxu0 0
    %441 = vmatpush1.bf16.msra.mxu0 0
    %442 = vmatprep.subr.bf16.mxu0 0
    %443 = vmatpush1.bf16.msra.mxu0 0
    %444 = vmatprep.subr.bf16.mxu0 0
    %445 = vmatpush1.bf16.msra.mxu0 0
    %446 = vmatprep.subr.bf16.mxu0 0
    %447 = vmatpush1.bf16.msra.mxu0 0
    %448 = vmatprep.subr.bf16.mxu0 0
    %449 = vmatpush1.bf16.msra.mxu0 0
    %450 = vmatprep.subr.bf16.mxu0 0
    %451 = vmatpush1.bf16.msra.mxu0 0
    %452 = vmatprep.subr.bf16.mxu0 0
    %453 = vmatpush1.bf16.msra.mxu0 0
    %454 = vmatprep.subr.bf16.mxu0 0
    %455 = vmatpush1.bf16.msra.mxu0 0
    %456 = vmatprep.mubr.bf16.mxu0 0
    %457 = vmatmul.mubr.bf16.gmra.mrb[0].mxu0 %v251
    %v458 = vpop.f32.mrb[0].mxu0
    %v459 = vadd.f32 %v243, %v458
    %v460 = vpop.f32.mrb[0].mxu0
    %v461 = vpop.f32.mrb[0].mxu0
    %v462 = vadd.f32 %v243, %v461
    %v463 = vpop.f32.mrb[0].mxu0
    %464 = vdwg.mxu0
    %v465 = vmax.f32 %v416, 0.0
    %v466 = vmax.f32 %v418, 0.0
    %v467 = vmax.f32 %v459, 0.0
    %v468 = vmax.f32 %v420, 0.0
    %v469 = vmax.f32 %v422, 0.0
    %v470 = vmax.f32 %v462, 0.0
    %v471 = vpack.c.bf16 %v468, %v465
    %v472 = vpack.c.bf16 %v469, %v466
    %v473 = vpack.c.bf16 %v470, %v467
    %v474 = vld [vmem:[#allocation6] sm:$0xff]
    %v475 = vld [vmem:[#allocation6 + $0x8] sm:$0xff]
    %v476 = vld [vmem:[#allocation6 + $0x10] sm:$0xf]
    %v477 = vld [vmem:[#allocation6 + $0x14] sm:$0xff]
    %v478 = vld [vmem:[#allocation6 + $0x1c] sm:$0xff]
    %v479 = vld [vmem:[#allocation6 + $0x24] sm:$0xf]
    %v480 = vld [vmem:[#allocation6 + $0x28] sm:$0xff]
    %v481 = vld [vmem:[#allocation6 + $0x30] sm:$0xff]
    %v482 = vld [vmem:[#allocation6 + $0x38] sm:$0xf]
    %v483 = vld [vmem:[#allocation6 + $0x3c] sm:$0xff]
    %v484 = vld [vmem:[#allocation6 + $0x44] sm:$0xff]
    %v485 = vld [vmem:[#allocation6 + $0x4c] sm:$0xf]
    %v486 = vld [vmem:[#allocation6 + $0x50] sm:$0xff]
    %v487 = vld [vmem:[#allocation6 + $0x58] sm:$0xff]
    %v488 = vld [vmem:[#allocation6 + $0x60] sm:$0xf]
    %v489 = vld [vmem:[#allocation6 + $0x64] sm:$0xff]
    %v490 = vld [vmem:[#allocation6 + $0x6c] sm:$0xff]
    %v491 = vld [vmem:[#allocation6 + $0x74] sm:$0xf]
    %v492 = vld [vmem:[#allocation6 + $0x78] sm:$0xff]
    %v493 = vld [vmem:[#allocation6 + $0x80] sm:$0xff]
    %v494 = vld [vmem:[#allocation6 + $0x88] sm:$0xf]
    %v495 = vld [vmem:[#allocation6 + $0x8c] sm:$0xff]
    %v496 = vld [vmem:[#allocation6 + $0x94] sm:$0xff]
    %v497 = vld [vmem:[#allocation6 + $0x9c] sm:$0xf]
    %v498 = vld [vmem:[#allocation6 + $0xa0] sm:$0xff]
    %v499 = vld [vmem:[#allocation6 + $0xa8] sm:$0xff]
    %v500 = vld [vmem:[#allocation6 + $0xb0] sm:$0xf]
    %v501 = vld [vmem:[#allocation6 + $0xb4] sm:$0xff]
    %v502 = vld [vmem:[#allocation6 + $0xbc] sm:$0xff]
    %v503 = vld [vmem:[#allocation6 + $0xc4] sm:$0xf]
    %v504 = vld [vmem:[#allocation6 + $0xc8] sm:$0xff]
    %v505 = vld [vmem:[#allocation6 + $0xd0] sm:$0xff]
    %v506 = vld [vmem:[#allocation6 + $0xd8] sm:$0xf]
    %v507 = vld [vmem:[#allocation6 + $0xdc] sm:$0xff]
    %v508 = vld [vmem:[#allocation6 + $0xe4] sm:$0xff]
    %v509 = vld [vmem:[#allocation6 + $0xec] sm:$0xf]
    %v510 = vld [vmem:[#allocation6 + $0xf0] sm:$0xff]
    %v511 = vld [vmem:[#allocation6 + $0xf8] sm:$0xff]
    %v512 = vld [vmem:[#allocation6 + $0x100] sm:$0xf]
    %v513 = vld [vmem:[#allocation6 + $0x104] sm:$0xff]
    %v514 = vld [vmem:[#allocation6 + $0x10c] sm:$0xff]
    %v515 = vld [vmem:[#allocation6 + $0x114] sm:$0xf]
    %v516 = vld [vmem:[#allocation6 + $0x118] sm:$0xff]
    %v517 = vld [vmem:[#allocation6 + $0x120] sm:$0xff]
    %v518 = vld [vmem:[#allocation6 + $0x128] sm:$0xf]
    %v519 = vld [vmem:[#allocation6 + $0x12c] sm:$0xff]
    %v520 = vld [vmem:[#allocation6 + $0x134] sm:$0xff]
    %v521 = vld [vmem:[#allocation6 + $0x13c] sm:$0xf]
    %v522 = vld [vmem:[#allocation6 + $0x140] sm:$0xff]
    %v523 = vld [vmem:[#allocation6 + $0x148] sm:$0xff]
    %v524 = vld [vmem:[#allocation6 + $0x150] sm:$0xf]
    %v525 = vld [vmem:[#allocation6 + $0x154] sm:$0xff]
    %v526 = vld [vmem:[#allocation6 + $0x15c] sm:$0xff]
    %v527 = vld [vmem:[#allocation6 + $0x164] sm:$0xf]
    %v528 = vld [vmem:[#allocation6 + $0x168] sm:$0xff]
    %v529 = vld [vmem:[#allocation6 + $0x170] sm:$0xff]
    %v530 = vld [vmem:[#allocation6 + $0x178] sm:$0xf]
    %v531 = vld [vmem:[#allocation6 + $0x17c] sm:$0xff]
    %v532 = vld [vmem:[#allocation6 + $0x184] sm:$0xff]
    %v533 = vld [vmem:[#allocation6 + $0x18c] sm:$0xf]
    %v534 = vld [vmem:[#allocation6 + $0x190] sm:$0xff]
    %v535 = vld [vmem:[#allocation6 + $0x198] sm:$0xff]
    %v536 = vld [vmem:[#allocation6 + $0x1a0] sm:$0xf]
    %v537 = vld [vmem:[#allocation6 + $0x1a4] sm:$0xff]
    %v538 = vld [vmem:[#allocation6 + $0x1ac] sm:$0xff]
    %v539 = vld [vmem:[#allocation6 + $0x1b4] sm:$0xf]
    %v540 = vld [vmem:[#allocation6 + $0x1b8] sm:$0xff]
    %v541 = vld [vmem:[#allocation6 + $0x1c0] sm:$0xff]
    %v542 = vld [vmem:[#allocation6 + $0x1c8] sm:$0xf]
    %v543 = vld [vmem:[#allocation6 + $0x1cc] sm:$0xff]
    %v544 = vld [vmem:[#allocation6 + $0x1d4] sm:$0xff]
    %v545 = vld [vmem:[#allocation6 + $0x1dc] sm:$0xf]
    %v546 = vld [vmem:[#allocation6 + $0x1e0] sm:$0xff]
    %v547 = vld [vmem:[#allocation6 + $0x1e8] sm:$0xff]
    %v548 = vld [vmem:[#allocation6 + $0x1f0] sm:$0xf]
    %v549 = vld [vmem:[#allocation6 + $0x1f4] sm:$0xff]
    %v550 = vld [vmem:[#allocation6 + $0x1fc] sm:$0xff]
    %v551 = vld [vmem:[#allocation6 + $0x204] sm:$0xf]
    %v552 = vld [vmem:[#allocation6 + $0x208] sm:$0xff]
    %v553 = vld [vmem:[#allocation6 + $0x210] sm:$0xff]
    %v554 = vld [vmem:[#allocation6 + $0x218] sm:$0xf]
    %v555 = vld [vmem:[#allocation6 + $0x21c] sm:$0xff]
    %v556 = vld [vmem:[#allocation6 + $0x224] sm:$0xff]
    %v557 = vld [vmem:[#allocation6 + $0x22c] sm:$0xf]
    %v558 = vld [vmem:[#allocation6 + $0x230] sm:$0xff]
    %v559 = vld [vmem:[#allocation6 + $0x238] sm:$0xff]
    %v560 = vld [vmem:[#allocation6 + $0x240] sm:$0xf]
    %v561 = vld [vmem:[#allocation6 + $0x244] sm:$0xff]
    %v562 = vld [vmem:[#allocation6 + $0x24c] sm:$0xff]
    %v563 = vld [vmem:[#allocation6 + $0x254] sm:$0xf]
    %v564 = vld [vmem:[#allocation6 + $0x258] sm:$0xff]
    %v565 = vld [vmem:[#allocation6 + $0x260] sm:$0xff]
    %v566 = vld [vmem:[#allocation6 + $0x268] sm:$0xf]
    %v567 = vld [vmem:[#allocation6 + $0x26c] sm:$0xff]
    %v568 = vld [vmem:[#allocation6 + $0x274] sm:$0xff]
    %v569 = vld [vmem:[#allocation6 + $0x27c] sm:$0xf]
    %v570 = vld [vmem:[#allocation6 + $0x280] sm:$0xff]
    %v571 = vld [vmem:[#allocation6 + $0x288] sm:$0xff]
    %v572 = vld [vmem:[#allocation6 + $0x290] sm:$0xf]
    %v573 = vld [vmem:[#allocation6 + $0x294] sm:$0xff]
    %v574 = vld [vmem:[#allocation6 + $0x29c] sm:$0xff]
    %v575 = vld [vmem:[#allocation6 + $0x2a4] sm:$0xf]
    %v576 = vld [vmem:[#allocation6 + $0x2a8] sm:$0xff]
    %v577 = vld [vmem:[#allocation6 + $0x2b0] sm:$0xff]
    %v578 = vld [vmem:[#allocation6 + $0x2b8] sm:$0xf]
    %v579 = vld [vmem:[#allocation6 + $0x2bc] sm:$0xff]
    %v580 = vld [vmem:[#allocation6 + $0x2c4] sm:$0xff]
    %v581 = vld [vmem:[#allocation6 + $0x2cc] sm:$0xf]
    %v582 = vld [vmem:[#allocation6 + $0x2d0] sm:$0xff]
    %v583 = vld [vmem:[#allocation6 + $0x2d8] sm:$0xff]
    %v584 = vld [vmem:[#allocation6 + $0x2e0] sm:$0xf]
    %v585 = vld [vmem:[#allocation6 + $0x2e4] sm:$0xff]
    %v586 = vld [vmem:[#allocation6 + $0x2ec] sm:$0xff]
    %v587 = vld [vmem:[#allocation6 + $0x2f4] sm:$0xf]
    %v588 = vld [vmem:[#allocation6 + $0x2f8] sm:$0xff]
    %v589 = vld [vmem:[#allocation6 + $0x300] sm:$0xff]
    %v590 = vld [vmem:[#allocation6 + $0x308] sm:$0xf]
    %v591 = vld [vmem:[#allocation6 + $0x30c] sm:$0xff]
    %v592 = vld [vmem:[#allocation6 + $0x314] sm:$0xff]
    %v593 = vld [vmem:[#allocation6 + $0x31c] sm:$0xf]
    %v594 = vld [vmem:[#allocation6 + $0x320] sm:$0xff]
    %v595 = vld [vmem:[#allocation6 + $0x328] sm:$0xff]
    %v596 = vld [vmem:[#allocation6 + $0x330] sm:$0xf]
    %v597 = vld [vmem:[#allocation6 + $0x334] sm:$0xff]
    %v598 = vld [vmem:[#allocation6 + $0x33c] sm:$0xff]
    %v599 = vld [vmem:[#allocation6 + $0x344] sm:$0xf]
    %v600 = vld [vmem:[#allocation6 + $0x348] sm:$0xff]
    %v601 = vld [vmem:[#allocation6 + $0x350] sm:$0xff]
    %v602 = vld [vmem:[#allocation6 + $0x358] sm:$0xf]
    %v603 = vld [vmem:[#allocation6 + $0x35c] sm:$0xff]
    %v604 = vld [vmem:[#allocation6 + $0x364] sm:$0xff]
    %v605 = vld [vmem:[#allocation6 + $0x36c] sm:$0xf]
    %v606 = vld [vmem:[#allocation6 + $0x370] sm:$0xff]
    %v607 = vld [vmem:[#allocation6 + $0x378] sm:$0xff]
    %v608 = vld [vmem:[#allocation6 + $0x380] sm:$0xf]
    %v609 = vld [vmem:[#allocation6 + $0x384] sm:$0xff]
    %v610 = vld [vmem:[#allocation6 + $0x38c] sm:$0xff]
    %v611 = vld [vmem:[#allocation6 + $0x394] sm:$0xf]
    %v612 = vld [vmem:[#allocation6 + $0x398] sm:$0xff]
    %v613 = vld [vmem:[#allocation6 + $0x3a0] sm:$0xff]
    %v614 = vld [vmem:[#allocation6 + $0x3a8] sm:$0xf]
    %v615 = vld [vmem:[#allocation6 + $0x3ac] sm:$0xff]
    %v616 = vld [vmem:[#allocation6 + $0x3b4] sm:$0xff]
    %v617 = vld [vmem:[#allocation6 + $0x3bc] sm:$0xf]
    %v618 = vld [vmem:[#allocation7] sm:$0x1f]
    %v620 = vlaneseq
    %v621 = vshrl.u32 %v620, 7
    %v622 = vsub.s32 0, %v621
    %v623 = vrot.slane %v618, %v622
    %v624 = vlaneseq
    %v625 = vshrl.u32 %v624, 7
    %v626 = vsub.s32 1, %v625
    %v627 = vrot.slane %v618, %v626
    %v628 = vlaneseq
    %v629 = vshrl.u32 %v628, 7
    %v630 = vsub.s32 2, %v629
    %v631 = vrot.slane %v618, %v630
    %v632 = vlaneseq
    %v633 = vshrl.u32 %v632, 7
    %v634 = vsub.s32 3, %v633
    %v635 = vrot.slane %v618, %v634
    %v636 = vlaneseq
    %v637 = vshrl.u32 %v636, 7
    %v638 = vsub.s32 4, %v637
    %v639 = vrot.slane %v618, %v638
    %v789 = vunpack.c.l.b16 %v474
    %v790 = vunpack.c.h.b16 %v474
    %v791 = vunpack.c.l.b16 %v475
    %v792 = vunpack.c.h.b16 %v475
    %v793 = vunpack.c.l.b16 %v476
    %v794 = vunpack.c.l.b16 %v477
    %v795 = vunpack.c.h.b16 %v477
    %v796 = vunpack.c.l.b16 %v478
    %v797 = vunpack.c.h.b16 %v478
    %v798 = vunpack.c.l.b16 %v479
    %v799 = vunpack.c.l.b16 %v480
    %v800 = vunpack.c.h.b16 %v480
    %v801 = vunpack.c.l.b16 %v481
    %v802 = vunpack.c.h.b16 %v481
    %v803 = vunpack.c.l.b16 %v482
    %v804 = vunpack.c.l.b16 %v483
    %v805 = vunpack.c.h.b16 %v483
    %v806 = vunpack.c.l.b16 %v484
    %v807 = vunpack.c.h.b16 %v484
    %v808 = vunpack.c.l.b16 %v485
    %v809 = vunpack.c.l.b16 %v486
    %v810 = vunpack.c.h.b16 %v486
    %v811 = vunpack.c.l.b16 %v487
    %v812 = vunpack.c.h.b16 %v487
    %v813 = vunpack.c.l.b16 %v488
    %v814 = vunpack.c.l.b16 %v489
    %v815 = vunpack.c.h.b16 %v489
    %v816 = vunpack.c.l.b16 %v490
    %v817 = vunpack.c.h.b16 %v490
    %v818 = vunpack.c.l.b16 %v491
    %v819 = vunpack.c.l.b16 %v492
    %v820 = vunpack.c.h.b16 %v492
    %v821 = vunpack.c.l.b16 %v493
    %v822 = vunpack.c.h.b16 %v493
    %v823 = vunpack.c.l.b16 %v494
    %v824 = vunpack.c.l.b16 %v495
    %v825 = vunpack.c.h.b16 %v495
    %v826 = vunpack.c.l.b16 %v496
    %v827 = vunpack.c.h.b16 %v496
    %v828 = vunpack.c.l.b16 %v497
    %v829 = vunpack.c.l.b16 %v498
    %v830 = vunpack.c.h.b16 %v498
    %v831 = vunpack.c.l.b16 %v499
    %v832 = vunpack.c.h.b16 %v499
    %v833 = vunpack.c.l.b16 %v500
    %v834 = vunpack.c.l.b16 %v501
    %v835 = vunpack.c.h.b16 %v501
    %v836 = vunpack.c.l.b16 %v502
    %v837 = vunpack.c.h.b16 %v502
    %v838 = vunpack.c.l.b16 %v503
    %v839 = vunpack.c.l.b16 %v504
    %v840 = vunpack.c.h.b16 %v504
    %v841 = vunpack.c.l.b16 %v505
    %v842 = vunpack.c.h.b16 %v505
    %v843 = vunpack.c.l.b16 %v506
    %v844 = vunpack.c.l.b16 %v507
    %v845 = vunpack.c.h.b16 %v507
    %v846 = vunpack.c.l.b16 %v508
    %v847 = vunpack.c.h.b16 %v508
    %v848 = vunpack.c.l.b16 %v509
    %v849 = vunpack.c.l.b16 %v510
    %v850 = vunpack.c.h.b16 %v510
    %v851 = vunpack.c.l.b16 %v511
    %v852 = vunpack.c.h.b16 %v511
    %v853 = vunpack.c.l.b16 %v512
    %v854 = vunpack.c.l.b16 %v513
    %v855 = vunpack.c.h.b16 %v513
    %v856 = vunpack.c.l.b16 %v514
    %v857 = vunpack.c.h.b16 %v514
    %v858 = vunpack.c.l.b16 %v515
    %v859 = vunpack.c.l.b16 %v516
    %v860 = vunpack.c.h.b16 %v516
    %v861 = vunpack.c.l.b16 %v517
    %v862 = vunpack.c.h.b16 %v517
    %v863 = vunpack.c.l.b16 %v518
    %v864 = vunpack.c.l.b16 %v519
    %v865 = vunpack.c.h.b16 %v519
    %v866 = vunpack.c.l.b16 %v520
    %v867 = vunpack.c.h.b16 %v520
    %v868 = vunpack.c.l.b16 %v521
    %v869 = vunpack.c.l.b16 %v522
    %v870 = vunpack.c.h.b16 %v522
    %v871 = vunpack.c.l.b16 %v523
    %v872 = vunpack.c.h.b16 %v523
    %v873 = vunpack.c.l.b16 %v524
    %v874 = vunpack.c.l.b16 %v525
    %v875 = vunpack.c.h.b16 %v525
    %v876 = vunpack.c.l.b16 %v526
    %v877 = vunpack.c.h.b16 %v526
    %v878 = vunpack.c.l.b16 %v527
    %v879 = vunpack.c.l.b16 %v528
    %v880 = vunpack.c.h.b16 %v528
    %v881 = vunpack.c.l.b16 %v529
    %v882 = vunpack.c.h.b16 %v529
    %v883 = vunpack.c.l.b16 %v530
    %v884 = vunpack.c.l.b16 %v531
    %v885 = vunpack.c.h.b16 %v531
    %v886 = vunpack.c.l.b16 %v532
    %v887 = vunpack.c.h.b16 %v532
    %v888 = vunpack.c.l.b16 %v533
    %v889 = vunpack.c.l.b16 %v534
    %v890 = vunpack.c.h.b16 %v534
    %v891 = vunpack.c.l.b16 %v535
    %v892 = vunpack.c.h.b16 %v535
    %v893 = vunpack.c.l.b16 %v536
    %v894 = vunpack.c.l.b16 %v537
    %v895 = vunpack.c.h.b16 %v537
    %v896 = vunpack.c.l.b16 %v538
    %v897 = vunpack.c.h.b16 %v538
    %v898 = vunpack.c.l.b16 %v539
    %v899 = vunpack.c.l.b16 %v540
    %v900 = vunpack.c.h.b16 %v540
    %v901 = vunpack.c.l.b16 %v541
    %v902 = vunpack.c.h.b16 %v541
    %v903 = vunpack.c.l.b16 %v542
    %v904 = vunpack.c.l.b16 %v543
    %v905 = vunpack.c.h.b16 %v543
    %v906 = vunpack.c.l.b16 %v544
    %v907 = vunpack.c.h.b16 %v544
    %v908 = vunpack.c.l.b16 %v545
    %v909 = vunpack.c.l.b16 %v546
    %v910 = vunpack.c.h.b16 %v546
    %v911 = vunpack.c.l.b16 %v547
    %v912 = vunpack.c.h.b16 %v547
    %v913 = vunpack.c.l.b16 %v548
    %v914 = vunpack.c.l.b16 %v549
    %v915 = vunpack.c.h.b16 %v549
    %v916 = vunpack.c.l.b16 %v550
    %v917 = vunpack.c.h.b16 %v550
    %v918 = vunpack.c.l.b16 %v551
    %v919 = vunpack.c.l.b16 %v552
    %v920 = vunpack.c.h.b16 %v552
    %v921 = vunpack.c.l.b16 %v553
    %v922 = vunpack.c.h.b16 %v553
    %v923 = vunpack.c.l.b16 %v554
    %v924 = vunpack.c.l.b16 %v555
    %v925 = vunpack.c.h.b16 %v555
    %v926 = vunpack.c.l.b16 %v556
    %v927 = vunpack.c.h.b16 %v556
    %v928 = vunpack.c.l.b16 %v557
    %v929 = vunpack.c.l.b16 %v558
    %v930 = vunpack.c.h.b16 %v558
    %v931 = vunpack.c.l.b16 %v559
    %v932 = vunpack.c.h.b16 %v559
    %v933 = vunpack.c.l.b16 %v560
    %v934 = vunpack.c.l.b16 %v561
    %v935 = vunpack.c.h.b16 %v561
    %v936 = vunpack.c.l.b16 %v562
    %v937 = vunpack.c.h.b16 %v562
    %v938 = vunpack.c.l.b16 %v563
    %v939 = vunpack.c.l.b16 %v564
    %v940 = vunpack.c.h.b16 %v564
    %v941 = vunpack.c.l.b16 %v565
    %v942 = vunpack.c.h.b16 %v565
    %v943 = vunpack.c.l.b16 %v566
    %v944 = vunpack.c.l.b16 %v567
    %v945 = vunpack.c.h.b16 %v567
    %v946 = vunpack.c.l.b16 %v568
    %v947 = vunpack.c.h.b16 %v568
    %v948 = vunpack.c.l.b16 %v569
    %v949 = vunpack.c.l.b16 %v570
    %v950 = vunpack.c.h.b16 %v570
    %v951 = vunpack.c.l.b16 %v571
    %v952 = vunpack.c.h.b16 %v571
    %v953 = vunpack.c.l.b16 %v572
    %v954 = vunpack.c.l.b16 %v573
    %v955 = vunpack.c.h.b16 %v573
    %v956 = vunpack.c.l.b16 %v574
    %v957 = vunpack.c.h.b16 %v574
    %v958 = vunpack.c.l.b16 %v575
    %v959 = vunpack.c.l.b16 %v576
    %v960 = vunpack.c.h.b16 %v576
    %v961 = vunpack.c.l.b16 %v577
    %v962 = vunpack.c.h.b16 %v577
    %v963 = vunpack.c.l.b16 %v578
    %v964 = vunpack.c.l.b16 %v579
    %v965 = vunpack.c.h.b16 %v579
    %v966 = vunpack.c.l.b16 %v580
    %v967 = vunpack.c.h.b16 %v580
    %v968 = vunpack.c.l.b16 %v581
    %v969 = vunpack.c.l.b16 %v582
    %v970 = vunpack.c.h.b16 %v582
    %v971 = vunpack.c.l.b16 %v583
    %v972 = vunpack.c.h.b16 %v583
    %v973 = vunpack.c.l.b16 %v584
    %v974 = vunpack.c.l.b16 %v585
    %v975 = vunpack.c.h.b16 %v585
    %v976 = vunpack.c.l.b16 %v586
    %v977 = vunpack.c.h.b16 %v586
    %v978 = vunpack.c.l.b16 %v587
    %v979 = vunpack.c.l.b16 %v588
    %v980 = vunpack.c.h.b16 %v588
    %v981 = vunpack.c.l.b16 %v589
    %v982 = vunpack.c.h.b16 %v589
    %v983 = vunpack.c.l.b16 %v590
    %v984 = vunpack.c.l.b16 %v591
    %v985 = vunpack.c.h.b16 %v591
    %v986 = vunpack.c.l.b16 %v592
    %v987 = vunpack.c.h.b16 %v592
    %v988 = vunpack.c.l.b16 %v593
    %v989 = vunpack.c.l.b16 %v594
    %v990 = vunpack.c.h.b16 %v594
    %v991 = vunpack.c.l.b16 %v595
    %v992 = vunpack.c.h.b16 %v595
    %v993 = vunpack.c.l.b16 %v596
    %v994 = vunpack.c.l.b16 %v597
    %v995 = vunpack.c.h.b16 %v597
    %v996 = vunpack.c.l.b16 %v598
    %v997 = vunpack.c.h.b16 %v598
    %v998 = vunpack.c.l.b16 %v599
    %v999 = vunpack.c.l.b16 %v600
    %v1000 = vunpack.c.h.b16 %v600
    %v1001 = vunpack.c.l.b16 %v601
    %v1002 = vunpack.c.h.b16 %v601
    %v1003 = vunpack.c.l.b16 %v602
    %v1004 = vunpack.c.l.b16 %v603
    %v1005 = vunpack.c.h.b16 %v603
    %v1006 = vunpack.c.l.b16 %v604
    %v1007 = vunpack.c.h.b16 %v604
    %v1008 = vunpack.c.l.b16 %v605
    %v1009 = vunpack.c.l.b16 %v606
    %v1010 = vunpack.c.h.b16 %v606
    %v1011 = vunpack.c.l.b16 %v607
    %v1012 = vunpack.c.h.b16 %v607
    %v1013 = vunpack.c.l.b16 %v608
    %v1014 = vunpack.c.l.b16 %v609
    %v1015 = vunpack.c.h.b16 %v609
    %v1016 = vunpack.c.l.b16 %v610
    %v1017 = vunpack.c.h.b16 %v610
    %v1018 = vunpack.c.l.b16 %v611
    %v1019 = vunpack.c.l.b16 %v612
    %v1020 = vunpack.c.h.b16 %v612
    %v1021 = vunpack.c.l.b16 %v613
    %v1022 = vunpack.c.h.b16 %v613
    %v1023 = vunpack.c.l.b16 %v614
    %v1024 = vunpack.c.l.b16 %v615
    %v1025 = vunpack.c.h.b16 %v615
    %v1026 = vunpack.c.l.b16 %v616
    %v1027 = vunpack.c.h.b16 %v616
    %v1028 = vunpack.c.l.b16 %v617
    %v1029 = vpack.c.b16 %v794, %v789
    %v1030 = vpack.c.b16 %v795, %v790
    %v1031 = vpack.c.b16 %v796, %v791
    %v1032 = vpack.c.b16 %v797, %v792
    %v1033 = vpack.c.b16 %v798, %v793
    %v1034 = vpack.c.b16 %v804, %v799
    %v1035 = vpack.c.b16 %v805, %v800
    %v1036 = vpack.c.b16 %v806, %v801
    %v1037 = vpack.c.b16 %v807, %v802
    %v1038 = vpack.c.b16 %v808, %v803
    %v1039 = vpack.c.b16 %v814, %v809
    %v1040 = vpack.c.b16 %v815, %v810
    %v1041 = vpack.c.b16 %v816, %v811
    %v1042 = vpack.c.b16 %v817, %v812
    %v1043 = vpack.c.b16 %v818, %v813
    %v1044 = vpack.c.b16 %v824, %v819
    %v1045 = vpack.c.b16 %v825, %v820
    %v1046 = vpack.c.b16 %v826, %v821
    %v1047 = vpack.c.b16 %v827, %v822
    %v1048 = vpack.c.b16 %v828, %v823
    %v1049 = vpack.c.b16 %v834, %v829
    %v1050 = vpack.c.b16 %v835, %v830
    %v1051 = vpack.c.b16 %v836, %v831
    %v1052 = vpack.c.b16 %v837, %v832
    %v1053 = vpack.c.b16 %v838, %v833
    %v1054 = vpack.c.b16 %v844, %v839
    %v1055 = vpack.c.b16 %v845, %v840
    %v1056 = vpack.c.b16 %v846, %v841
    %v1057 = vpack.c.b16 %v847, %v842
    %v1058 = vpack.c.b16 %v848, %v843
    %v1059 = vpack.c.b16 %v854, %v849
    %v1060 = vpack.c.b16 %v855, %v850
    %v1061 = vpack.c.b16 %v856, %v851
    %v1062 = vpack.c.b16 %v857, %v852
    %v1063 = vpack.c.b16 %v858, %v853
    %v1064 = vpack.c.b16 %v864, %v859
    %v1065 = vpack.c.b16 %v865, %v860
    %v1066 = vpack.c.b16 %v866, %v861
    %v1067 = vpack.c.b16 %v867, %v862
    %v1068 = vpack.c.b16 %v868, %v863
    %v1069 = vpack.c.b16 %v874, %v869
    %v1070 = vpack.c.b16 %v875, %v870
    %v1071 = vpack.c.b16 %v876, %v871
    %v1072 = vpack.c.b16 %v877, %v872
    %v1073 = vpack.c.b16 %v878, %v873
    %v1074 = vpack.c.b16 %v884, %v879
    %v1075 = vpack.c.b16 %v885, %v880
    %v1076 = vpack.c.b16 %v886, %v881
    %v1077 = vpack.c.b16 %v887, %v882
    %v1078 = vpack.c.b16 %v888, %v883
    %v1079 = vpack.c.b16 %v894, %v889
    %v1080 = vpack.c.b16 %v895, %v890
    %v1081 = vpack.c.b16 %v896, %v891
    %v1082 = vpack.c.b16 %v897, %v892
    %v1083 = vpack.c.b16 %v898, %v893
    %v1084 = vpack.c.b16 %v904, %v899
    %v1085 = vpack.c.b16 %v905, %v900
    %v1086 = vpack.c.b16 %v906, %v901
    %v1087 = vpack.c.b16 %v907, %v902
    %v1088 = vpack.c.b16 %v908, %v903
    %v1089 = vpack.c.b16 %v914, %v909
    %v1090 = vpack.c.b16 %v915, %v910
    %v1091 = vpack.c.b16 %v916, %v911
    %v1092 = vpack.c.b16 %v917, %v912
    %v1093 = vpack.c.b16 %v918, %v913
    %v1094 = vpack.c.b16 %v924, %v919
    %v1095 = vpack.c.b16 %v925, %v920
    %v1096 = vpack.c.b16 %v926, %v921
    %v1097 = vpack.c.b16 %v927, %v922
    %v1098 = vpack.c.b16 %v928, %v923
    %v1099 = vpack.c.b16 %v934, %v929
    %v1100 = vpack.c.b16 %v935, %v930
    %v1101 = vpack.c.b16 %v936, %v931
    %v1102 = vpack.c.b16 %v937, %v932
    %v1103 = vpack.c.b16 %v938, %v933
    %v1104 = vpack.c.b16 %v944, %v939
    %v1105 = vpack.c.b16 %v945, %v940
    %v1106 = vpack.c.b16 %v946, %v941
    %v1107 = vpack.c.b16 %v947, %v942
    %v1108 = vpack.c.b16 %v948, %v943
    %v1109 = vpack.c.b16 %v954, %v949
    %v1110 = vpack.c.b16 %v955, %v950
    %v1111 = vpack.c.b16 %v956, %v951
    %v1112 = vpack.c.b16 %v957, %v952
    %v1113 = vpack.c.b16 %v958, %v953
    %v1114 = vpack.c.b16 %v964, %v959
    %v1115 = vpack.c.b16 %v965, %v960
    %v1116 = vpack.c.b16 %v966, %v961
    %v1117 = vpack.c.b16 %v967, %v962
    %v1118 = vpack.c.b16 %v968, %v963
    %v1119 = vpack.c.b16 %v974, %v969
    %v1120 = vpack.c.b16 %v975, %v970
    %v1121 = vpack.c.b16 %v976, %v971
    %v1122 = vpack.c.b16 %v977, %v972
    %v1123 = vpack.c.b16 %v978, %v973
    %v1124 = vpack.c.b16 %v984, %v979
    %v1125 = vpack.c.b16 %v985, %v980
    %v1126 = vpack.c.b16 %v986, %v981
    %v1127 = vpack.c.b16 %v987, %v982
    %v1128 = vpack.c.b16 %v988, %v983
    %v1129 = vpack.c.b16 %v994, %v989
    %v1130 = vpack.c.b16 %v995, %v990
    %v1131 = vpack.c.b16 %v996, %v991
    %v1132 = vpack.c.b16 %v997, %v992
    %v1133 = vpack.c.b16 %v998, %v993
    %v1134 = vpack.c.b16 %v1004, %v999
    %v1135 = vpack.c.b16 %v1005, %v1000
    %v1136 = vpack.c.b16 %v1006, %v1001
    %v1137 = vpack.c.b16 %v1007, %v1002
    %v1138 = vpack.c.b16 %v1008, %v1003
    %v1139 = vpack.c.b16 %v1014, %v1009
    %v1140 = vpack.c.b16 %v1015, %v1010
    %v1141 = vpack.c.b16 %v1016, %v1011
    %v1142 = vpack.c.b16 %v1017, %v1012
    %v1143 = vpack.c.b16 %v1018, %v1013
    %v1144 = vpack.c.b16 %v1024, %v1019
    %v1145 = vpack.c.b16 %v1025, %v1020
    %v1146 = vpack.c.b16 %v1026, %v1021
    %v1147 = vpack.c.b16 %v1027, %v1022
    %v1148 = vpack.c.b16 %v1028, %v1023
    %1269 = vmatprep.subr.bf16.mxu0 %v1030
    %1270 = vmatpush1.bf16.msra.mxu0 %v1029
    %1271 = vmatprep.subr.bf16.mxu0 %v1035
    %1272 = vmatpush1.bf16.msra.mxu0 %v1034
    %1273 = vmatprep.subr.bf16.mxu0 %v1040
    %1274 = vmatpush1.bf16.msra.mxu0 %v1039
    %1275 = vmatprep.subr.bf16.mxu0 %v1045
    %1276 = vmatpush1.bf16.msra.mxu0 %v1044
    %1277 = vmatprep.subr.bf16.mxu0 %v1050
    %1278 = vmatpush1.bf16.msra.mxu0 %v1049
    %1279 = vmatprep.subr.bf16.mxu0 %v1055
    %1280 = vmatpush1.bf16.msra.mxu0 %v1054
    %1281 = vmatprep.subr.bf16.mxu0 %v1060
    %1282 = vmatpush1.bf16.msra.mxu0 %v1059
    %1283 = vmatprep.subr.bf16.mxu0 %v1065
    %1284 = vmatpush1.bf16.msra.mxu0 %v1064
    %1285 = vmatprep.subr.bf16.mxu0 %v1070
    %1286 = vmatpush1.bf16.msra.mxu0 %v1069
    %1287 = vmatprep.subr.bf16.mxu0 %v1075
    %1288 = vmatpush1.bf16.msra.mxu0 %v1074
    %1289 = vmatprep.subr.bf16.mxu0 %v1080
    %1290 = vmatpush1.bf16.msra.mxu0 %v1079
    %1291 = vmatprep.subr.bf16.mxu0 %v1085
    %1292 = vmatpush1.bf16.msra.mxu0 %v1084
    %1293 = vmatprep.subr.bf16.mxu0 %v1090
    %1294 = vmatpush1.bf16.msra.mxu0 %v1089
    %1295 = vmatprep.subr.bf16.mxu0 %v1095
    %1296 = vmatpush1.bf16.msra.mxu0 %v1094
    %1297 = vmatprep.subr.bf16.mxu0 %v1100
    %1298 = vmatpush1.bf16.msra.mxu0 %v1099
    %1299 = vmatprep.subr.bf16.mxu0 %v1105
    %1300 = vmatpush1.bf16.msra.mxu0 %v1104
    %1301 = vmatprep.mubr.bf16.mxu0 %v472
    %1302 = vmatmul.mubr.bf16.gmra.mrb[0].mxu0 %v471
    %v1303 = vpop.f32.mrb[0].mxu0
    %v1304 = vadd.f32 %v623, %v1303
    %v1305 = vpop.f32.mrb[0].mxu0
    %v1306 = vadd.f32 %v627, %v1305
    %v1307 = vpop.f32.mrb[0].mxu0
    %v1308 = vadd.f32 %v623, %v1307
    %v1309 = vpop.f32.mrb[0].mxu0
    %v1310 = vadd.f32 %v627, %v1309
    %1311 = vdwg.mxu0
    %1312 = vmatprep.subr.bf16.mxu0 %v1110
    %1313 = vmatpush1.bf16.msra.mxu0 %v1109
    %1314 = vmatprep.subr.bf16.mxu0 %v1115
    %1315 = vmatpush1.bf16.msra.mxu0 %v1114
    %1316 = vmatprep.subr.bf16.mxu0 %v1120
    %1317 = vmatpush1.bf16.msra.mxu0 %v1119
    %1318 = vmatprep.subr.bf16.mxu0 %v1125
    %1319 = vmatpush1.bf16.msra.mxu0 %v1124
    %1320 = vmatprep.subr.bf16.mxu0 %v1130
    %1321 = vmatpush1.bf16.msra.mxu0 %v1129
    %1322 = vmatprep.subr.bf16.mxu0 %v1135
    %1323 = vmatpush1.bf16.msra.mxu0 %v1134
    %1324 = vmatprep.subr.bf16.mxu0 %v1140
    %1325 = vmatpush1.bf16.msra.mxu0 %v1139
    %1326 = vmatprep.subr.bf16.mxu0 %v1145
    %1327 = vmatpush1.bf16.msra.mxu0 %v1144
    %1328 = vmatprep.subr.bf16.mxu0 0
    %1329 = vmatpush1.bf16.msra.mxu0 0
    %1330 = vmatprep.subr.bf16.mxu0 0
    %1331 = vmatpush1.bf16.msra.mxu0 0
    %1332 = vmatprep.subr.bf16.mxu0 0
    %1333 = vmatpush1.bf16.msra.mxu0 0
    %1334 = vmatprep.subr.bf16.mxu0 0
    %1335 = vmatpush1.bf16.msra.mxu0 0
    %1336 = vmatprep.subr.bf16.mxu0 0
    %1337 = vmatpush1.bf16.msra.mxu0 0
    %1338 = vmatprep.subr.bf16.mxu0 0
    %1339 = vmatpush1.bf16.msra.mxu0 0
    %1340 = vmatprep.subr.bf16.mxu0 0
    %1341 = vmatpush1.bf16.msra.mxu0 0
    %1342 = vmatprep.subr.bf16.mxu0 0
    %1343 = vmatpush1.bf16.msra.mxu0 0
    %1344 = vmatprep.mubr.bf16.mxu0 0
    %1345 = vmatmul.mubr.bf16.gmra.mrb[0].mxu0 %v473
    %v1346 = vpop.f32.mrb[0].mxu0
    %v1347 = vadd.f32 %v1304, %v1346
    %v1348 = vpop.f32.mrb[0].mxu0
    %v1349 = vadd.f32 %v1306, %v1348
    %v1350 = vpop.f32.mrb[0].mxu0
    %v1351 = vadd.f32 %v1308, %v1350
    %v1352 = vpop.f32.mrb[0].mxu0
    %v1353 = vadd.f32 %v1310, %v1352
    %1354 = vdwg.mxu0
    %1355 = vmatprep.subr.bf16.mxu0 %v1032
    %1356 = vmatpush1.bf16.msra.mxu0 %v1031
    %1357 = vmatprep.subr.bf16.mxu0 %v1037
    %1358 = vmatpush1.bf16.msra.mxu0 %v1036
    %1359 = vmatprep.subr.bf16.mxu0 %v1042
    %1360 = vmatpush1.bf16.msra.mxu0 %v1041
    %1361 = vmatprep.subr.bf16.mxu0 %v1047
    %1362 = vmatpush1.bf16.msra.mxu0 %v1046
    %1363 = vmatprep.subr.bf16.mxu0 %v1052
    %1364 = vmatpush1.bf16.msra.mxu0 %v1051
    %1365 = vmatprep.subr.bf16.mxu0 %v1057
    %1366 = vmatpush1.bf16.msra.mxu0 %v1056
    %1367 = vmatprep.subr.bf16.mxu0 %v1062
    %1368 = vmatpush1.bf16.msra.mxu0 %v1061
    %1369 = vmatprep.subr.bf16.mxu0 %v1067
    %1370 = vmatpush1.bf16.msra.mxu0 %v1066
    %1371 = vmatprep.subr.bf16.mxu0 %v1072
    %1372 = vmatpush1.bf16.msra.mxu0 %v1071
    %1373 = vmatprep.subr.bf16.mxu0 %v1077
    %1374 = vmatpush1.bf16.msra.mxu0 %v1076
    %1375 = vmatprep.subr.bf16.mxu0 %v1082
    %1376 = vmatpush1.bf16.msra.mxu0 %v1081
    %1377 = vmatprep.subr.bf16.mxu0 %v1087
    %1378 = vmatpush1.bf16.msra.mxu0 %v1086
    %1379 = vmatprep.subr.bf16.mxu0 %v1092
    %1380 = vmatpush1.bf16.msra.mxu0 %v1091
    %1381 = vmatprep.subr.bf16.mxu0 %v1097
    %1382 = vmatpush1.bf16.msra.mxu0 %v1096
    %1383 = vmatprep.subr.bf16.mxu0 %v1102
    %1384 = vmatpush1.bf16.msra.mxu0 %v1101
    %1385 = vmatprep.subr.bf16.mxu0 %v1107
    %1386 = vmatpush1.bf16.msra.mxu0 %v1106
    %1387 = vmatprep.mubr.bf16.mxu0 %v472
    %1388 = vmatmul.mubr.bf16.gmra.mrb[0].mxu0 %v471
    %v1389 = vpop.f32.mrb[0].mxu0
    %v1390 = vadd.f32 %v631, %v1389
    %v1391 = vpop.f32.mrb[0].mxu0
    %v1392 = vadd.f32 %v635, %v1391
    %v1393 = vpop.f32.mrb[0].mxu0
    %v1394 = vadd.f32 %v631, %v1393
    %v1395 = vpop.f32.mrb[0].mxu0
    %v1396 = vadd.f32 %v635, %v1395
    %1397 = vdwg.mxu0
    %1398 = vmatprep.subr.bf16.mxu0 %v1112
    %1399 = vmatpush1.bf16.msra.mxu0 %v1111
    %1400 = vmatprep.subr.bf16.mxu0 %v1117
    %1401 = vmatpush1.bf16.msra.mxu0 %v1116
    %1402 = vmatprep.subr.bf16.mxu0 %v1122
    %1403 = vmatpush1.bf16.msra.mxu0 %v1121
    %1404 = vmatprep.subr.bf16.mxu0 %v1127
    %1405 = vmatpush1.bf16.msra.mxu0 %v1126
    %1406 = vmatprep.subr.bf16.mxu0 %v1132
    %1407 = vmatpush1.bf16.msra.mxu0 %v1131
    %1408 = vmatprep.subr.bf16.mxu0 %v1137
    %1409 = vmatpush1.bf16.msra.mxu0 %v1136
    %1410 = vmatprep.subr.bf16.mxu0 %v1142
    %1411 = vmatpush1.bf16.msra.mxu0 %v1141
    %1412 = vmatprep.subr.bf16.mxu0 %v1147
    %1413 = vmatpush1.bf16.msra.mxu0 %v1146
    %1414 = vmatprep.subr.bf16.mxu0 0
    %1415 = vmatpush1.bf16.msra.mxu0 0
    %1416 = vmatprep.subr.bf16.mxu0 0
    %1417 = vmatpush1.bf16.msra.mxu0 0
    %1418 = vmatprep.subr.bf16.mxu0 0
    %1419 = vmatpush1.bf16.msra.mxu0 0
    %1420 = vmatprep.subr.bf16.mxu0 0
    %1421 = vmatpush1.bf16.msra.mxu0 0
    %1422 = vmatprep.subr.bf16.mxu0 0
    %1423 = vmatpush1.bf16.msra.mxu0 0
    %1424 = vmatprep.subr.bf16.mxu0 0
    %1425 = vmatpush1.bf16.msra.mxu0 0
    %1426 = vmatprep.subr.bf16.mxu0 0
    %1427 = vmatpush1.bf16.msra.mxu0 0
    %1428 = vmatprep.subr.bf16.mxu0 0
    %1429 = vmatpush1.bf16.msra.mxu0 0
    %1430 = vmatprep.mubr.bf16.mxu0 0
    %1431 = vmatmul.mubr.bf16.gmra.mrb[0].mxu0 %v473
    %v1432 = vpop.f32.mrb[0].mxu0
    %v1433 = vadd.f32 %v1390, %v1432
    %v1434 = vpop.f32.mrb[0].mxu0
    %v1435 = vadd.f32 %v1392, %v1434
    %v1436 = vpop.f32.mrb[0].mxu0
    %v1437 = vadd.f32 %v1394, %v1436
    %v1438 = vpop.f32.mrb[0].mxu0
    %v1439 = vadd.f32 %v1396, %v1438
    %1440 = vdwg.mxu0
    %1441 = vmatprep.subr.bf16.mxu0 0
    %1442 = vmatpush1.bf16.msra.mxu0 %v1033
    %1443 = vmatprep.subr.bf16.mxu0 0
    %1444 = vmatpush1.bf16.msra.mxu0 %v1038
    %1445 = vmatprep.subr.bf16.mxu0 0
    %1446 = vmatpush1.bf16.msra.mxu0 %v1043
    %1447 = vmatprep.subr.bf16.mxu0 0
    %1448 = vmatpush1.bf16.msra.mxu0 %v1048
    %1449 = vmatprep.subr.bf16.mxu0 0
    %1450 = vmatpush1.bf16.msra.mxu0 %v1053
    %1451 = vmatprep.subr.bf16.mxu0 0
    %1452 = vmatpush1.bf16.msra.mxu0 %v1058
    %1453 = vmatprep.subr.bf16.mxu0 0
    %1454 = vmatpush1.bf16.msra.mxu0 %v1063
    %1455 = vmatprep.subr.bf16.mxu0 0
    %1456 = vmatpush1.bf16.msra.mxu0 %v1068
    %1457 = vmatprep.subr.bf16.mxu0 0
    %1458 = vmatpush1.bf16.msra.mxu0 %v1073
    %1459 = vmatprep.subr.bf16.mxu0 0
    %1460 = vmatpush1.bf16.msra.mxu0 %v1078
    %1461 = vmatprep.subr.bf16.mxu0 0
    %1462 = vmatpush1.bf16.msra.mxu0 %v1083
    %1463 = vmatprep.subr.bf16.mxu0 0
    %1464 = vmatpush1.bf16.msra.mxu0 %v1088
    %1465 = vmatprep.subr.bf16.mxu0 0
    %1466 = vmatpush1.bf16.msra.mxu0 %v1093
    %1467 = vmatprep.subr.bf16.mxu0 0
    %1468 = vmatpush1.bf16.msra.mxu0 %v1098
    %1469 = vmatprep.subr.bf16.mxu0 0
    %1470 = vmatpush1.bf16.msra.mxu0 %v1103
    %1471 = vmatprep.subr.bf16.mxu0 0
    %1472 = vmatpush1.bf16.msra.mxu0 %v1108
    %1473 = vmatprep.mubr.bf16.mxu0 %v472
    %1474 = vmatmul.mubr.bf16.gmra.mrb[0].mxu0 %v471
    %v1475 = vpop.f32.mrb[0].mxu0
    %v1476 = vadd.f32 %v639, %v1475
    %v1477 = vpop.f32.mrb[0].mxu0
    %v1478 = vpop.f32.mrb[0].mxu0
    %v1479 = vadd.f32 %v639, %v1478
    %v1480 = vpop.f32.mrb[0].mxu0
    %1481 = vdwg.mxu0
    %1482 = vmatprep.subr.bf16.mxu0 0
    %1483 = vmatpush1.bf16.msra.mxu0 %v1113
    %1484 = vmatprep.subr.bf16.mxu0 0
    %1485 = vmatpush1.bf16.msra.mxu0 %v1118
    %1486 = vmatprep.subr.bf16.mxu0 0
    %1487 = vmatpush1.bf16.msra.mxu0 %v1123
    %1488 = vmatprep.subr.bf16.mxu0 0
    %1489 = vmatpush1.bf16.msra.mxu0 %v1128
    %1490 = vmatprep.subr.bf16.mxu0 0
    %1491 = vmatpush1.bf16.msra.mxu0 %v1133
    %1492 = vmatprep.subr.bf16.mxu0 0
    %1493 = vmatpush1.bf16.msra.mxu0 %v1138
    %1494 = vmatprep.subr.bf16.mxu0 0
    %1495 = vmatpush1.bf16.msra.mxu0 %v1143
    %1496 = vmatprep.subr.bf16.mxu0 0
    %1497 = vmatpush1.bf16.msra.mxu0 %v1148
    %1498 = vmatprep.subr.bf16.mxu0 0
    %1499 = vmatpush1.bf16.msra.mxu0 0
    %1500 = vmatprep.subr.bf16.mxu0 0
    %1501 = vmatpush1.bf16.msra.mxu0 0
    %1502 = vmatprep.subr.bf16.mxu0 0
    %1503 = vmatpush1.bf16.msra.mxu0 0
    %1504 = vmatprep.subr.bf16.mxu0 0
    %1505 = vmatpush1.bf16.msra.mxu0 0
    %1506 = vmatprep.subr.bf16.mxu0 0
    %1507 = vmatpush1.bf16.msra.mxu0 0
    %1508 = vmatprep.subr.bf16.mxu0 0
    %1509 = vmatpush1.bf16.msra.mxu0 0
    %1510 = vmatprep.subr.bf16.mxu0 0
    %1511 = vmatpush1.bf16.msra.mxu0 0
    %1512 = vmatprep.subr.bf16.mxu0 0
    %1513 = vmatpush1.bf16.msra.mxu0 0
    %1514 = vmatprep.mubr.bf16.mxu0 0
    %1515 = vmatmul.mubr.bf16.gmra.mrb[0].mxu0 %v473
    %v1516 = vpop.f32.mrb[0].mxu0
    %v1517 = vadd.f32 %v1476, %v1516
    %v1518 = vpop.f32.mrb[0].mxu0
    %v1519 = vpop.f32.mrb[0].mxu0
    %v1520 = vadd.f32 %v1479, %v1519
    %v1521 = vpop.f32.mrb[0].mxu0
    %1522 = vdwg.mxu0
    %v1523 = vmax.f32 %v1347, 0.0
    %v1524 = vmax.f32 %v1349, 0.0
    %v1525 = vmax.f32 %v1433, 0.0
    %v1526 = vmax.f32 %v1435, 0.0
    %v1527 = vmax.f32 %v1517, 0.0
    %v1528 = vmax.f32 %v1351, 0.0
    %v1529 = vmax.f32 %v1353, 0.0
    %v1530 = vmax.f32 %v1437, 0.0
    %v1531 = vmax.f32 %v1439, 0.0
    %v1532 = vmax.f32 %v1520, 0.0
    %v1533 = vpack.c.bf16 %v1528, %v1523
    %v1534 = vpack.c.bf16 %v1529, %v1524
    %v1535 = vpack.c.bf16 %v1530, %v1525
    %v1536 = vpack.c.bf16 %v1531, %v1526
    %v1537 = vpack.c.bf16 %v1532, %v1527
    %v1538 = vld [vmem:[#allocation9] sm:$0xff]
    %v1539 = vld [vmem:[#allocation9 + $0x8] sm:$0xff]
    %v1540 = vld [vmem:[#allocation9 + $0x10] sm:$0xff]
    %v1541 = vld [vmem:[#allocation9 + $0x18] sm:$0xff]
    %v1542 = vld [vmem:[#allocation9 + $0x20] sm:$0xf]
    %v1543 = vld [vmem:[#allocation9 + $0x24] sm:$0xff]
    %v1544 = vld [vmem:[#allocation9 + $0x2c] sm:$0xff]
    %v1545 = vld [vmem:[#allocation9 + $0x34] sm:$0xff]
    %v1546 = vld [vmem:[#allocation9 + $0x3c] sm:$0xff]
    %v1547 = vld [vmem:[#allocation9 + $0x44] sm:$0xf]
    %v1548 = vld [vmem:[#allocation9 + $0x48] sm:$0xff]
    %v1549 = vld [vmem:[#allocation9 + $0x50] sm:$0xff]
    %v1550 = vld [vmem:[#allocation9 + $0x58] sm:$0xff]
    %v1551 = vld [vmem:[#allocation9 + $0x60] sm:$0xff]
    %v1552 = vld [vmem:[#allocation9 + $0x68] sm:$0xf]
    %v1553 = vld [vmem:[#allocation9 + $0x6c] sm:$0xff]
    %v1554 = vld [vmem:[#allocation9 + $0x74] sm:$0xff]
    %v1555 = vld [vmem:[#allocation9 + $0x7c] sm:$0xff]
    %v1556 = vld [vmem:[#allocation9 + $0x84] sm:$0xff]
    %v1557 = vld [vmem:[#allocation9 + $0x8c] sm:$0xf]
    %v1558 = vld [vmem:[#allocation9 + $0x90] sm:$0xff]
    %v1559 = vld [vmem:[#allocation9 + $0x98] sm:$0xff]
    %v1560 = vld [vmem:[#allocation9 + $0xa0] sm:$0xff]
    %v1561 = vld [vmem:[#allocation9 + $0xa8] sm:$0xff]
    %v1562 = vld [vmem:[#allocation9 + $0xb0] sm:$0xf]
    %v1563 = vld [vmem:[#allocation9 + $0xb4] sm:$0xff]
    %v1564 = vld [vmem:[#allocation9 + $0xbc] sm:$0xff]
    %v1565 = vld [vmem:[#allocation9 + $0xc4] sm:$0xff]
    %v1566 = vld [vmem:[#allocation9 + $0xcc] sm:$0xff]
    %v1567 = vld [vmem:[#allocation9 + $0xd4] sm:$0xf]
    %v1568 = vld [vmem:[#allocation9 + $0xd8] sm:$0xff]
    %v1569 = vld [vmem:[#allocation9 + $0xe0] sm:$0xff]
    %v1570 = vld [vmem:[#allocation9 + $0xe8] sm:$0xff]
    %v1571 = vld [vmem:[#allocation9 + $0xf0] sm:$0xff]
    %v1572 = vld [vmem:[#allocation9 + $0xf8] sm:$0xf]
    %v1573 = vld [vmem:[#allocation9 + $0xfc] sm:$0xff]
    %v1574 = vld [vmem:[#allocation9 + $0x104] sm:$0xff]
    %v1575 = vld [vmem:[#allocation9 + $0x10c] sm:$0xff]
    %v1576 = vld [vmem:[#allocation9 + $0x114] sm:$0xff]
    %v1577 = vld [vmem:[#allocation9 + $0x11c] sm:$0xf]
    %v1578 = vld [vmem:[#allocation9 + $0x120] sm:$0xff]
    %v1579 = vld [vmem:[#allocation9 + $0x128] sm:$0xff]
    %v1580 = vld [vmem:[#allocation9 + $0x130] sm:$0xff]
    %v1581 = vld [vmem:[#allocation9 + $0x138] sm:$0xff]
    %v1582 = vld [vmem:[#allocation9 + $0x140] sm:$0xf]
    %v1583 = vld [vmem:[#allocation9 + $0x144] sm:$0xff]
    %v1584 = vld [vmem:[#allocation9 + $0x14c] sm:$0xff]
    %v1585 = vld [vmem:[#allocation9 + $0x154] sm:$0xff]
    %v1586 = vld [vmem:[#allocation9 + $0x15c] sm:$0xff]
    %v1587 = vld [vmem:[#allocation9 + $0x164] sm:$0xf]
    %v1588 = vld [vmem:[#allocation9 + $0x168] sm:$0xff]
    %v1589 = vld [vmem:[#allocation9 + $0x170] sm:$0xff]
    %v1590 = vld [vmem:[#allocation9 + $0x178] sm:$0xff]
    %v1591 = vld [vmem:[#allocation9 + $0x180] sm:$0xff]
    %v1592 = vld [vmem:[#allocation9 + $0x188] sm:$0xf]
    %v1593 = vld [vmem:[#allocation9 + $0x18c] sm:$0xff]
    %v1594 = vld [vmem:[#allocation9 + $0x194] sm:$0xff]
    %v1595 = vld [vmem:[#allocation9 + $0x19c] sm:$0xff]
    %v1596 = vld [vmem:[#allocation9 + $0x1a4] sm:$0xff]
    %v1597 = vld [vmem:[#allocation9 + $0x1ac] sm:$0xf]
    %v1598 = vld [vmem:[#allocation9 + $0x1b0] sm:$0xff]
    %v1599 = vld [vmem:[#allocation9 + $0x1b8] sm:$0xff]
    %v1600 = vld [vmem:[#allocation9 + $0x1c0] sm:$0xff]
    %v1601 = vld [vmem:[#allocation9 + $0x1c8] sm:$0xff]
    %v1602 = vld [vmem:[#allocation9 + $0x1d0] sm:$0xf]
    %v1603 = vld [vmem:[#allocation9 + $0x1d4] sm:$0xff]
    %v1604 = vld [vmem:[#allocation9 + $0x1dc] sm:$0xff]
    %v1605 = vld [vmem:[#allocation9 + $0x1e4] sm:$0xff]
    %v1606 = vld [vmem:[#allocation9 + $0x1ec] sm:$0xff]
    %v1607 = vld [vmem:[#allocation9 + $0x1f4] sm:$0xf]
    %v1608 = vld [vmem:[#allocation9 + $0x1f8] sm:$0xff]
    %v1609 = vld [vmem:[#allocation9 + $0x200] sm:$0xff]
    %v1610 = vld [vmem:[#allocation9 + $0x208] sm:$0xff]
    %v1611 = vld [vmem:[#allocation9 + $0x210] sm:$0xff]
    %v1612 = vld [vmem:[#allocation9 + $0x218] sm:$0xf]
    %v1613 = vld [vmem:[#allocation9 + $0x21c] sm:$0xff]
    %v1614 = vld [vmem:[#allocation9 + $0x224] sm:$0xff]
    %v1615 = vld [vmem:[#allocation9 + $0x22c] sm:$0xff]
    %v1616 = vld [vmem:[#allocation9 + $0x234] sm:$0xff]
    %v1617 = vld [vmem:[#allocation9 + $0x23c] sm:$0xf]
    %v1618 = vld [vmem:[#allocation9 + $0x240] sm:$0xff]
    %v1619 = vld [vmem:[#allocation9 + $0x248] sm:$0xff]
    %v1620 = vld [vmem:[#allocation9 + $0x250] sm:$0xff]
    %v1621 = vld [vmem:[#allocation9 + $0x258] sm:$0xff]
    %v1622 = vld [vmem:[#allocation9 + $0x260] sm:$0xf]
    %v1623 = vld [vmem:[#allocation9 + $0x264] sm:$0xff]
    %v1624 = vld [vmem:[#allocation9 + $0x26c] sm:$0xff]
    %v1625 = vld [vmem:[#allocation9 + $0x274] sm:$0xff]
    %v1626 = vld [vmem:[#allocation9 + $0x27c] sm:$0xff]
    %v1627 = vld [vmem:[#allocation9 + $0x284] sm:$0xf]
    %v1628 = vld [vmem:[#allocation9 + $0x288] sm:$0xff]
    %v1629 = vld [vmem:[#allocation9 + $0x290] sm:$0xff]
    %v1630 = vld [vmem:[#allocation9 + $0x298] sm:$0xff]
    %v1631 = vld [vmem:[#allocation9 + $0x2a0] sm:$0xff]
    %v1632 = vld [vmem:[#allocation9 + $0x2a8] sm:$0xf]
    %v1633 = vld [vmem:[#allocation9 + $0x2ac] sm:$0xff]
    %v1634 = vld [vmem:[#allocation9 + $0x2b4] sm:$0xff]
    %v1635 = vld [vmem:[#allocation9 + $0x2bc] sm:$0xff]
    %v1636 = vld [vmem:[#allocation9 + $0x2c4] sm:$0xff]
    %v1637 = vld [vmem:[#allocation9 + $0x2cc] sm:$0xf]
    %v1638 = vld [vmem:[#allocation9 + $0x2d0] sm:$0xff]
    %v1639 = vld [vmem:[#allocation9 + $0x2d8] sm:$0xff]
    %v1640 = vld [vmem:[#allocation9 + $0x2e0] sm:$0xff]
    %v1641 = vld [vmem:[#allocation9 + $0x2e8] sm:$0xff]
    %v1642 = vld [vmem:[#allocation9 + $0x2f0] sm:$0xf]
    %v1643 = vld [vmem:[#allocation9 + $0x2f4] sm:$0xff]
    %v1644 = vld [vmem:[#allocation9 + $0x2fc] sm:$0xff]
    %v1645 = vld [vmem:[#allocation9 + $0x304] sm:$0xff]
    %v1646 = vld [vmem:[#allocation9 + $0x30c] sm:$0xff]
    %v1647 = vld [vmem:[#allocation9 + $0x314] sm:$0xf]
    %v1648 = vld [vmem:[#allocation9 + $0x318] sm:$0xff]
    %v1649 = vld [vmem:[#allocation9 + $0x320] sm:$0xff]
    %v1650 = vld [vmem:[#allocation9 + $0x328] sm:$0xff]
    %v1651 = vld [vmem:[#allocation9 + $0x330] sm:$0xff]
    %v1652 = vld [vmem:[#allocation9 + $0x338] sm:$0xf]
    %v1653 = vld [vmem:[#allocation9 + $0x33c] sm:$0xff]
    %v1654 = vld [vmem:[#allocation9 + $0x344] sm:$0xff]
    %v1655 = vld [vmem:[#allocation9 + $0x34c] sm:$0xff]
    %v1656 = vld [vmem:[#allocation9 + $0x354] sm:$0xff]
    %v1657 = vld [vmem:[#allocation9 + $0x35c] sm:$0xf]
    %v1658 = vld [vmem:[#allocation9 + $0x360] sm:$0xff]
    %v1659 = vld [vmem:[#allocation9 + $0x368] sm:$0xff]
    %v1660 = vld [vmem:[#allocation9 + $0x370] sm:$0xff]
    %v1661 = vld [vmem:[#allocation9 + $0x378] sm:$0xff]
    %v1662 = vld [vmem:[#allocation9 + $0x380] sm:$0xf]
    %v1663 = vld [vmem:[#allocation9 + $0x384] sm:$0xff]
    %v1664 = vld [vmem:[#allocation9 + $0x38c] sm:$0xff]
    %v1665 = vld [vmem:[#allocation9 + $0x394] sm:$0xff]
    %v1666 = vld [vmem:[#allocation9 + $0x39c] sm:$0xff]
    %v1667 = vld [vmem:[#allocation9 + $0x3a4] sm:$0xf]
    %v1668 = vld [vmem:[#allocation9 + $0x3a8] sm:$0xff]
    %v1669 = vld [vmem:[#allocation9 + $0x3b0] sm:$0xff]
    %v1670 = vld [vmem:[#allocation9 + $0x3b8] sm:$0xff]
    %v1671 = vld [vmem:[#allocation9 + $0x3c0] sm:$0xff]
    %v1672 = vld [vmem:[#allocation9 + $0x3c8] sm:$0xf]
    %v1673 = vld [vmem:[#allocation9 + $0x3cc] sm:$0xff]
    %v1674 = vld [vmem:[#allocation9 + $0x3d4] sm:$0xff]
    %v1675 = vld [vmem:[#allocation9 + $0x3dc] sm:$0xff]
    %v1676 = vld [vmem:[#allocation9 + $0x3e4] sm:$0xff]
    %v1677 = vld [vmem:[#allocation9 + $0x3ec] sm:$0xf]
    %v1678 = vld [vmem:[#allocation9 + $0x3f0] sm:$0xff]
    %v1679 = vld [vmem:[#allocation9 + $0x3f8] sm:$0xff]
    %v1680 = vld [vmem:[#allocation9 + $0x400] sm:$0xff]
    %v1681 = vld [vmem:[#allocation9 + $0x408] sm:$0xff]
    %v1682 = vld [vmem:[#allocation9 + $0x410] sm:$0xf]
    %v1683 = vld [vmem:[#allocation9 + $0x414] sm:$0xff]
    %v1684 = vld [vmem:[#allocation9 + $0x41c] sm:$0xff]
    %v1685 = vld [vmem:[#allocation9 + $0x424] sm:$0xff]
    %v1686 = vld [vmem:[#allocation9 + $0x42c] sm:$0xff]
    %v1687 = vld [vmem:[#allocation9 + $0x434] sm:$0xf]
    %v1688 = vld [vmem:[#allocation9 + $0x438] sm:$0xff]
    %v1689 = vld [vmem:[#allocation9 + $0x440] sm:$0xff]
    %v1690 = vld [vmem:[#allocation9 + $0x448] sm:$0xff]
    %v1691 = vld [vmem:[#allocation9 + $0x450] sm:$0xff]
    %v1692 = vld [vmem:[#allocation9 + $0x458] sm:$0xf]
    %v1693 = vld [vmem:[#allocation9 + $0x45c] sm:$0xff]
    %v1694 = vld [vmem:[#allocation9 + $0x464] sm:$0xff]
    %v1695 = vld [vmem:[#allocation9 + $0x46c] sm:$0xff]
    %v1696 = vld [vmem:[#allocation9 + $0x474] sm:$0xff]
    %v1697 = vld [vmem:[#allocation9 + $0x47c] sm:$0xf]
    %v1698 = vld [vmem:[#allocation9 + $0x480] sm:$0xff]
    %v1699 = vld [vmem:[#allocation9 + $0x488] sm:$0xff]
    %v1700 = vld [vmem:[#allocation9 + $0x490] sm:$0xff]
    %v1701 = vld [vmem:[#allocation9 + $0x498] sm:$0xff]
    %v1702 = vld [vmem:[#allocation9 + $0x4a0] sm:$0xf]
    %v1703 = vld [vmem:[#allocation9 + $0x4a4] sm:$0xff]
    %v1704 = vld [vmem:[#allocation9 + $0x4ac] sm:$0xff]
    %v1705 = vld [vmem:[#allocation9 + $0x4b4] sm:$0xff]
    %v1706 = vld [vmem:[#allocation9 + $0x4bc] sm:$0xff]
    %v1707 = vld [vmem:[#allocation9 + $0x4c4] sm:$0xf]
    %v1708 = vld [vmem:[#allocation9 + $0x4c8] sm:$0xff]
    %v1709 = vld [vmem:[#allocation9 + $0x4d0] sm:$0xff]
    %v1710 = vld [vmem:[#allocation9 + $0x4d8] sm:$0xff]
    %v1711 = vld [vmem:[#allocation9 + $0x4e0] sm:$0xff]
    %v1712 = vld [vmem:[#allocation9 + $0x4e8] sm:$0xf]
    %v1713 = vld [vmem:[#allocation9 + $0x4ec] sm:$0xff]
    %v1714 = vld [vmem:[#allocation9 + $0x4f4] sm:$0xff]
    %v1715 = vld [vmem:[#allocation9 + $0x4fc] sm:$0xff]
    %v1716 = vld [vmem:[#allocation9 + $0x504] sm:$0xff]
    %v1717 = vld [vmem:[#allocation9 + $0x50c] sm:$0xf]
    %v1718 = vld [vmem:[#allocation9 + $0x510] sm:$0xff]
    %v1719 = vld [vmem:[#allocation9 + $0x518] sm:$0xff]
    %v1720 = vld [vmem:[#allocation9 + $0x520] sm:$0xff]
    %v1721 = vld [vmem:[#allocation9 + $0x528] sm:$0xff]
    %v1722 = vld [vmem:[#allocation9 + $0x530] sm:$0xf]
    %v1723 = vld [vmem:[#allocation9 + $0x534] sm:$0xff]
    %v1724 = vld [vmem:[#allocation9 + $0x53c] sm:$0xff]
    %v1725 = vld [vmem:[#allocation9 + $0x544] sm:$0xff]
    %v1726 = vld [vmem:[#allocation9 + $0x54c] sm:$0xff]
    %v1727 = vld [vmem:[#allocation9 + $0x554] sm:$0xf]
    %v1728 = vld [vmem:[#allocation9 + $0x558] sm:$0xff]
    %v1729 = vld [vmem:[#allocation9 + $0x560] sm:$0xff]
    %v1730 = vld [vmem:[#allocation9 + $0x568] sm:$0xff]
    %v1731 = vld [vmem:[#allocation9 + $0x570] sm:$0xff]
    %v1732 = vld [vmem:[#allocation9 + $0x578] sm:$0xf]
    %v1733 = vld [vmem:[#allocation9 + $0x57c] sm:$0xff]
    %v1734 = vld [vmem:[#allocation9 + $0x584] sm:$0xff]
    %v1735 = vld [vmem:[#allocation9 + $0x58c] sm:$0xff]
    %v1736 = vld [vmem:[#allocation9 + $0x594] sm:$0xff]
    %v1737 = vld [vmem:[#allocation9 + $0x59c] sm:$0xf]
    %v1738 = vld [vmem:[#allocation9 + $0x5a0] sm:$0xff]
    %v1739 = vld [vmem:[#allocation9 + $0x5a8] sm:$0xff]
    %v1740 = vld [vmem:[#allocation9 + $0x5b0] sm:$0xff]
    %v1741 = vld [vmem:[#allocation9 + $0x5b8] sm:$0xff]
    %v1742 = vld [vmem:[#allocation9 + $0x5c0] sm:$0xf]
    %v1743 = vld [vmem:[#allocation9 + $0x5c4] sm:$0xff]
    %v1744 = vld [vmem:[#allocation9 + $0x5cc] sm:$0xff]
    %v1745 = vld [vmem:[#allocation9 + $0x5d4] sm:$0xff]
    %v1746 = vld [vmem:[#allocation9 + $0x5dc] sm:$0xff]
    %v1747 = vld [vmem:[#allocation9 + $0x5e4] sm:$0xf]
    %v1748 = vld [vmem:[#allocation9 + $0x5e8] sm:$0xff]
    %v1749 = vld [vmem:[#allocation9 + $0x5f0] sm:$0xff]
    %v1750 = vld [vmem:[#allocation9 + $0x5f8] sm:$0xff]
    %v1751 = vld [vmem:[#allocation9 + $0x600] sm:$0xff]
    %v1752 = vld [vmem:[#allocation9 + $0x608] sm:$0xf]
    %v1753 = vld [vmem:[#allocation9 + $0x60c] sm:$0xff]
    %v1754 = vld [vmem:[#allocation9 + $0x614] sm:$0xff]
    %v1755 = vld [vmem:[#allocation9 + $0x61c] sm:$0xff]
    %v1756 = vld [vmem:[#allocation9 + $0x624] sm:$0xff]
    %v1757 = vld [vmem:[#allocation9 + $0x62c] sm:$0xf]
    %v1758 = vld [vmem:[#allocation9 + $0x630] sm:$0xff]
    %v1759 = vld [vmem:[#allocation9 + $0x638] sm:$0xff]
    %v1760 = vld [vmem:[#allocation9 + $0x640] sm:$0xff]
    %v1761 = vld [vmem:[#allocation9 + $0x648] sm:$0xff]
    %v1762 = vld [vmem:[#allocation9 + $0x650] sm:$0xf]
    %v1763 = vld [vmem:[#allocation9 + $0x654] sm:$0xff]
    %v1764 = vld [vmem:[#allocation9 + $0x65c] sm:$0xff]
    %v1765 = vld [vmem:[#allocation9 + $0x664] sm:$0xff]
    %v1766 = vld [vmem:[#allocation9 + $0x66c] sm:$0xff]
    %v1767 = vld [vmem:[#allocation9 + $0x674] sm:$0xf]
    %v1768 = vld [vmem:[#allocation9 + $0x678] sm:$0xff]
    %v1769 = vld [vmem:[#allocation9 + $0x680] sm:$0xff]
    %v1770 = vld [vmem:[#allocation9 + $0x688] sm:$0xff]
    %v1771 = vld [vmem:[#allocation9 + $0x690] sm:$0xff]
    %v1772 = vld [vmem:[#allocation9 + $0x698] sm:$0xf]
    %v1773 = vld [vmem:[#allocation9 + $0x69c] sm:$0xff]
    %v1774 = vld [vmem:[#allocation9 + $0x6a4] sm:$0xff]
    %v1775 = vld [vmem:[#allocation9 + $0x6ac] sm:$0xff]
    %v1776 = vld [vmem:[#allocation9 + $0x6b4] sm:$0xff]
    %v1777 = vld [vmem:[#allocation9 + $0x6bc] sm:$0xf]
    %v1778 = vld [vmem:[#allocation9 + $0x6c0] sm:$0xff]
    %v1779 = vld [vmem:[#allocation9 + $0x6c8] sm:$0xff]
    %v1780 = vld [vmem:[#allocation9 + $0x6d0] sm:$0xff]
    %v1781 = vld [vmem:[#allocation9 + $0x6d8] sm:$0xff]
    %v1782 = vld [vmem:[#allocation9 + $0x6e0] sm:$0xf]
    %v1783 = vld [vmem:[#allocation9 + $0x6e4] sm:$0xff]
    %v1784 = vld [vmem:[#allocation9 + $0x6ec] sm:$0xff]
    %v1785 = vld [vmem:[#allocation9 + $0x6f4] sm:$0xff]
    %v1786 = vld [vmem:[#allocation9 + $0x6fc] sm:$0xff]
    %v1787 = vld [vmem:[#allocation9 + $0x704] sm:$0xf]
    %v1788 = vld [vmem:[#allocation9 + $0x708] sm:$0xff]
    %v1789 = vld [vmem:[#allocation9 + $0x710] sm:$0xff]
    %v1790 = vld [vmem:[#allocation9 + $0x718] sm:$0xff]
    %v1791 = vld [vmem:[#allocation9 + $0x720] sm:$0xff]
    %v1792 = vld [vmem:[#allocation9 + $0x728] sm:$0xf]
    %v1793 = vld [vmem:[#allocation9 + $0x72c] sm:$0xff]
    %v1794 = vld [vmem:[#allocation9 + $0x734] sm:$0xff]
    %v1795 = vld [vmem:[#allocation9 + $0x73c] sm:$0xff]
    %v1796 = vld [vmem:[#allocation9 + $0x744] sm:$0xff]
    %v1797 = vld [vmem:[#allocation9 + $0x74c] sm:$0xf]
    %v1798 = vld [vmem:[#allocation9 + $0x750] sm:$0xff]
    %v1799 = vld [vmem:[#allocation9 + $0x758] sm:$0xff]
    %v1800 = vld [vmem:[#allocation9 + $0x760] sm:$0xff]
    %v1801 = vld [vmem:[#allocation9 + $0x768] sm:$0xff]
    %v1802 = vld [vmem:[#allocation9 + $0x770] sm:$0xf]
    %v1803 = vld [vmem:[#allocation9 + $0x774] sm:$0xff]
    %v1804 = vld [vmem:[#allocation9 + $0x77c] sm:$0xff]
    %v1805 = vld [vmem:[#allocation9 + $0x784] sm:$0xff]
    %v1806 = vld [vmem:[#allocation9 + $0x78c] sm:$0xff]
    %v1807 = vld [vmem:[#allocation9 + $0x794] sm:$0xf]
    %v1808 = vld [vmem:[#allocation9 + $0x798] sm:$0xff]
    %v1809 = vld [vmem:[#allocation9 + $0x7a0] sm:$0xff]
    %v1810 = vld [vmem:[#allocation9 + $0x7a8] sm:$0xff]
    %v1811 = vld [vmem:[#allocation9 + $0x7b0] sm:$0xff]
    %v1812 = vld [vmem:[#allocation9 + $0x7b8] sm:$0xf]
    %v1813 = vld [vmem:[#allocation9 + $0x7bc] sm:$0xff]
    %v1814 = vld [vmem:[#allocation9 + $0x7c4] sm:$0xff]
    %v1815 = vld [vmem:[#allocation9 + $0x7cc] sm:$0xff]
    %v1816 = vld [vmem:[#allocation9 + $0x7d4] sm:$0xff]
    %v1817 = vld [vmem:[#allocation9 + $0x7dc] sm:$0xf]
    %v1818 = vld [vmem:[#allocation9 + $0x7e0] sm:$0xff]
    %v1819 = vld [vmem:[#allocation9 + $0x7e8] sm:$0xff]
    %v1820 = vld [vmem:[#allocation9 + $0x7f0] sm:$0xff]
    %v1821 = vld [vmem:[#allocation9 + $0x7f8] sm:$0xff]
    %v1822 = vld [vmem:[#allocation9 + $0x800] sm:$0xf]
    %v1823 = vld [vmem:[#allocation9 + $0x804] sm:$0xff]
    %v1824 = vld [vmem:[#allocation9 + $0x80c] sm:$0xff]
    %v1825 = vld [vmem:[#allocation9 + $0x814] sm:$0xff]
    %v1826 = vld [vmem:[#allocation9 + $0x81c] sm:$0xff]
    %v1827 = vld [vmem:[#allocation9 + $0x824] sm:$0xf]
    %v1828 = vld [vmem:[#allocation9 + $0x828] sm:$0xff]
    %v1829 = vld [vmem:[#allocation9 + $0x830] sm:$0xff]
    %v1830 = vld [vmem:[#allocation9 + $0x838] sm:$0xff]
    %v1831 = vld [vmem:[#allocation9 + $0x840] sm:$0xff]
    %v1832 = vld [vmem:[#allocation9 + $0x848] sm:$0xf]
    %v1833 = vld [vmem:[#allocation9 + $0x84c] sm:$0xff]
    %v1834 = vld [vmem:[#allocation9 + $0x854] sm:$0xff]
    %v1835 = vld [vmem:[#allocation9 + $0x85c] sm:$0xff]
    %v1836 = vld [vmem:[#allocation9 + $0x864] sm:$0xff]
    %v1837 = vld [vmem:[#allocation9 + $0x86c] sm:$0xf]
    %v1838 = vld [vmem:[#allocation9 + $0x870] sm:$0xff]
    %v1839 = vld [vmem:[#allocation9 + $0x878] sm:$0xff]
    %v1840 = vld [vmem:[#allocation9 + $0x880] sm:$0xff]
    %v1841 = vld [vmem:[#allocation9 + $0x888] sm:$0xff]
    %v1842 = vld [vmem:[#allocation9 + $0x890] sm:$0xf]
    %v1843 = vld [vmem:[#allocation9 + $0x894] sm:$0xff]
    %v1844 = vld [vmem:[#allocation9 + $0x89c] sm:$0xff]
    %v1845 = vld [vmem:[#allocation9 + $0x8a4] sm:$0xff]
    %v1846 = vld [vmem:[#allocation9 + $0x8ac] sm:$0xff]
    %v1847 = vld [vmem:[#allocation9 + $0x8b4] sm:$0xf]
    %v1848 = vld [vmem:[#allocation9 + $0x8b8] sm:$0xff]
    %v1849 = vld [vmem:[#allocation9 + $0x8c0] sm:$0xff]
    %v1850 = vld [vmem:[#allocation9 + $0x8c8] sm:$0xff]
    %v1851 = vld [vmem:[#allocation9 + $0x8d0] sm:$0xff]
    %v1852 = vld [vmem:[#allocation9 + $0x8d8] sm:$0xf]
    %v1853 = vld [vmem:[#allocation9 + $0x8dc] sm:$0xff]
    %v1854 = vld [vmem:[#allocation9 + $0x8e4] sm:$0xff]
    %v1855 = vld [vmem:[#allocation9 + $0x8ec] sm:$0xff]
    %v1856 = vld [vmem:[#allocation9 + $0x8f4] sm:$0xff]
    %v1857 = vld [vmem:[#allocation9 + $0x8fc] sm:$0xf]
    %v1858 = vld [vmem:[#allocation9 + $0x900] sm:$0xff]
    %v1859 = vld [vmem:[#allocation9 + $0x908] sm:$0xff]
    %v1860 = vld [vmem:[#allocation9 + $0x910] sm:$0xff]
    %v1861 = vld [vmem:[#allocation9 + $0x918] sm:$0xff]
    %v1862 = vld [vmem:[#allocation9 + $0x920] sm:$0xf]
    %v1863 = vld [vmem:[#allocation9 + $0x924] sm:$0xff]
    %v1864 = vld [vmem:[#allocation9 + $0x92c] sm:$0xff]
    %v1865 = vld [vmem:[#allocation9 + $0x934] sm:$0xff]
    %v1866 = vld [vmem:[#allocation9 + $0x93c] sm:$0xff]
    %v1867 = vld [vmem:[#allocation9 + $0x944] sm:$0xf]
    %v1868 = vld [vmem:[#allocation9 + $0x948] sm:$0xff]
    %v1869 = vld [vmem:[#allocation9 + $0x950] sm:$0xff]
    %v1870 = vld [vmem:[#allocation9 + $0x958] sm:$0xff]
    %v1871 = vld [vmem:[#allocation9 + $0x960] sm:$0xff]
    %v1872 = vld [vmem:[#allocation9 + $0x968] sm:$0xf]
    %v1873 = vld [vmem:[#allocation9 + $0x96c] sm:$0xff]
    %v1874 = vld [vmem:[#allocation9 + $0x974] sm:$0xff]
    %v1875 = vld [vmem:[#allocation9 + $0x97c] sm:$0xff]
    %v1876 = vld [vmem:[#allocation9 + $0x984] sm:$0xff]
    %v1877 = vld [vmem:[#allocation9 + $0x98c] sm:$0xf]
    %v1878 = vld [vmem:[#allocation9 + $0x990] sm:$0xff]
    %v1879 = vld [vmem:[#allocation9 + $0x998] sm:$0xff]
    %v1880 = vld [vmem:[#allocation9 + $0x9a0] sm:$0xff]
    %v1881 = vld [vmem:[#allocation9 + $0x9a8] sm:$0xff]
    %v1882 = vld [vmem:[#allocation9 + $0x9b0] sm:$0xf]
    %v1883 = vld [vmem:[#allocation9 + $0x9b4] sm:$0xff]
    %v1884 = vld [vmem:[#allocation9 + $0x9bc] sm:$0xff]
    %v1885 = vld [vmem:[#allocation9 + $0x9c4] sm:$0xff]
    %v1886 = vld [vmem:[#allocation9 + $0x9cc] sm:$0xff]
    %v1887 = vld [vmem:[#allocation9 + $0x9d4] sm:$0xf]
    %v1888 = vld [vmem:[#allocation9 + $0x9d8] sm:$0xff]
    %v1889 = vld [vmem:[#allocation9 + $0x9e0] sm:$0xff]
    %v1890 = vld [vmem:[#allocation9 + $0x9e8] sm:$0xff]
    %v1891 = vld [vmem:[#allocation9 + $0x9f0] sm:$0xff]
    %v1892 = vld [vmem:[#allocation9 + $0x9f8] sm:$0xf]
    %v1893 = vld [vmem:[#allocation9 + $0x9fc] sm:$0xff]
    %v1894 = vld [vmem:[#allocation9 + $0xa04] sm:$0xff]
    %v1895 = vld [vmem:[#allocation9 + $0xa0c] sm:$0xff]
    %v1896 = vld [vmem:[#allocation9 + $0xa14] sm:$0xff]
    %v1897 = vld [vmem:[#allocation9 + $0xa1c] sm:$0xf]
    %v1898 = vld [vmem:[#allocation9 + $0xa20] sm:$0xff]
    %v1899 = vld [vmem:[#allocation9 + $0xa28] sm:$0xff]
    %v1900 = vld [vmem:[#allocation9 + $0xa30] sm:$0xff]
    %v1901 = vld [vmem:[#allocation9 + $0xa38] sm:$0xff]
    %v1902 = vld [vmem:[#allocation9 + $0xa40] sm:$0xf]
    %v1903 = vld [vmem:[#allocation9 + $0xa44] sm:$0xff]
    %v1904 = vld [vmem:[#allocation9 + $0xa4c] sm:$0xff]
    %v1905 = vld [vmem:[#allocation9 + $0xa54] sm:$0xff]
    %v1906 = vld [vmem:[#allocation9 + $0xa5c] sm:$0xff]
    %v1907 = vld [vmem:[#allocation9 + $0xa64] sm:$0xf]
    %v1908 = vld [vmem:[#allocation9 + $0xa68] sm:$0xff]
    %v1909 = vld [vmem:[#allocation9 + $0xa70] sm:$0xff]
    %v1910 = vld [vmem:[#allocation9 + $0xa78] sm:$0xff]
    %v1911 = vld [vmem:[#allocation9 + $0xa80] sm:$0xff]
    %v1912 = vld [vmem:[#allocation9 + $0xa88] sm:$0xf]
    %v1913 = vld [vmem:[#allocation9 + $0xa8c] sm:$0xff]
    %v1914 = vld [vmem:[#allocation9 + $0xa94] sm:$0xff]
    %v1915 = vld [vmem:[#allocation9 + $0xa9c] sm:$0xff]
    %v1916 = vld [vmem:[#allocation9 + $0xaa4] sm:$0xff]
    %v1917 = vld [vmem:[#allocation9 + $0xaac] sm:$0xf]
    %v1918 = vld [vmem:[#allocation9 + $0xab0] sm:$0xff]
    %v1919 = vld [vmem:[#allocation9 + $0xab8] sm:$0xff]
    %v1920 = vld [vmem:[#allocation9 + $0xac0] sm:$0xff]
    %v1921 = vld [vmem:[#allocation9 + $0xac8] sm:$0xff]
    %v1922 = vld [vmem:[#allocation9 + $0xad0] sm:$0xf]
    %v1923 = vld [vmem:[#allocation9 + $0xad4] sm:$0xff]
    %v1924 = vld [vmem:[#allocation9 + $0xadc] sm:$0xff]
    %v1925 = vld [vmem:[#allocation9 + $0xae4] sm:$0xff]
    %v1926 = vld [vmem:[#allocation9 + $0xaec] sm:$0xff]
    %v1927 = vld [vmem:[#allocation9 + $0xaf4] sm:$0xf]
    %v1928 = vld [vmem:[#allocation9 + $0xaf8] sm:$0xff]
    %v1929 = vld [vmem:[#allocation9 + $0xb00] sm:$0xff]
    %v1930 = vld [vmem:[#allocation9 + $0xb08] sm:$0xff]
    %v1931 = vld [vmem:[#allocation9 + $0xb10] sm:$0xff]
    %v1932 = vld [vmem:[#allocation9 + $0xb18] sm:$0xf]
    %v1933 = vld [vmem:[#allocation9 + $0xb1c] sm:$0xff]
    %v1934 = vld [vmem:[#allocation9 + $0xb24] sm:$0xff]
    %v1935 = vld [vmem:[#allocation9 + $0xb2c] sm:$0xff]
    %v1936 = vld [vmem:[#allocation9 + $0xb34] sm:$0xff]
    %v1937 = vld [vmem:[#allocation9 + $0xb3c] sm:$0xf]
    %v1938 = vld [vmem:[#allocation10] sm:$0xff]
    %v1939 = vld [vmem:[#allocation10 + $0x8] sm:$0x1]
    %v1942 = vlaneseq
    %v1943 = vshrl.u32 %v1942, 7
    %v1944 = vsub.s32 0, %v1943
    %v1945 = vrot.slane %v1938, %v1944
    %v1946 = vlaneseq
    %v1947 = vshrl.u32 %v1946, 7
    %v1948 = vsub.s32 1, %v1947
    %v1949 = vrot.slane %v1938, %v1948
    %v1950 = vlaneseq
    %v1951 = vshrl.u32 %v1950, 7
    %v1952 = vsub.s32 2, %v1951
    %v1953 = vrot.slane %v1938, %v1952
    %v1954 = vlaneseq
    %v1955 = vshrl.u32 %v1954, 7
    %v1956 = vsub.s32 3, %v1955
    %v1957 = vrot.slane %v1938, %v1956
    %v1958 = vlaneseq
    %v1959 = vshrl.u32 %v1958, 7
    %v1960 = vsub.s32 4, %v1959
    %v1961 = vrot.slane %v1938, %v1960
    %v1962 = vlaneseq
    %v1963 = vshrl.u32 %v1962, 7
    %v1964 = vsub.s32 5, %v1963
    %v1965 = vrot.slane %v1938, %v1964
    %v1966 = vlaneseq
    %v1967 = vshrl.u32 %v1966, 7
    %v1968 = vsub.s32 6, %v1967
    %v1969 = vrot.slane %v1938, %v1968
    %v1970 = vlaneseq
    %v1971 = vshrl.u32 %v1970, 7
    %v1972 = vsub.s32 7, %v1971
    %v1973 = vrot.slane %v1938, %v1972
    %v1974 = vlaneseq
    %v1975 = vshrl.u32 %v1974, 7
    %v1976 = vsub.s32 0, %v1975
    %v1977 = vrot.slane %v1939, %v1976
    %v2387 = vunpack.c.l.b16 %v1538
    %v2388 = vunpack.c.h.b16 %v1538
    %v2389 = vunpack.c.l.b16 %v1539
    %v2390 = vunpack.c.h.b16 %v1539
    %v2391 = vunpack.c.l.b16 %v1540
    %v2392 = vunpack.c.h.b16 %v1540
    %v2393 = vunpack.c.l.b16 %v1541
    %v2394 = vunpack.c.h.b16 %v1541
    %v2395 = vunpack.c.l.b16 %v1542
    %v2396 = vunpack.c.l.b16 %v1543
    %v2397 = vunpack.c.h.b16 %v1543
    %v2398 = vunpack.c.l.b16 %v1544
    %v2399 = vunpack.c.h.b16 %v1544
    %v2400 = vunpack.c.l.b16 %v1545
    %v2401 = vunpack.c.h.b16 %v1545
    %v2402 = vunpack.c.l.b16 %v1546
    %v2403 = vunpack.c.h.b16 %v1546
    %v2404 = vunpack.c.l.b16 %v1547
    %v2405 = vunpack.c.l.b16 %v1548
    %v2406 = vunpack.c.h.b16 %v1548
    %v2407 = vunpack.c.l.b16 %v1549
    %v2408 = vunpack.c.h.b16 %v1549
    %v2409 = vunpack.c.l.b16 %v1550
    %v2410 = vunpack.c.h.b16 %v1550
    %v2411 = vunpack.c.l.b16 %v1551
    %v2412 = vunpack.c.h.b16 %v1551
    %v2413 = vunpack.c.l.b16 %v1552
    %v2414 = vunpack.c.l.b16 %v1553
    %v2415 = vunpack.c.h.b16 %v1553
    %v2416 = vunpack.c.l.b16 %v1554
    %v2417 = vunpack.c.h.b16 %v1554
    %v2418 = vunpack.c.l.b16 %v1555
    %v2419 = vunpack.c.h.b16 %v1555
    %v2420 = vunpack.c.l.b16 %v1556
    %v2421 = vunpack.c.h.b16 %v1556
    %v2422 = vunpack.c.l.b16 %v1557
    %v2423 = vunpack.c.l.b16 %v1558
    %v2424 = vunpack.c.h.b16 %v1558
    %v2425 = vunpack.c.l.b16 %v1559
    %v2426 = vunpack.c.h.b16 %v1559
    %v2427 = vunpack.c.l.b16 %v1560
    %v2428 = vunpack.c.h.b16 %v1560
    %v2429 = vunpack.c.l.b16 %v1561
    %v2430 = vunpack.c.h.b16 %v1561
    %v2431 = vunpack.c.l.b16 %v1562
    %v2432 = vunpack.c.l.b16 %v1563
    %v2433 = vunpack.c.h.b16 %v1563
    %v2434 = vunpack.c.l.b16 %v1564
    %v2435 = vunpack.c.h.b16 %v1564
    %v2436 = vunpack.c.l.b16 %v1565
    %v2437 = vunpack.c.h.b16 %v1565
    %v2438 = vunpack.c.l.b16 %v1566
    %v2439 = vunpack.c.h.b16 %v1566
    %v2440 = vunpack.c.l.b16 %v1567
    %v2441 = vunpack.c.l.b16 %v1568
    %v2442 = vunpack.c.h.b16 %v1568
    %v2443 = vunpack.c.l.b16 %v1569
    %v2444 = vunpack.c.h.b16 %v1569
    %v2445 = vunpack.c.l.b16 %v1570
    %v2446 = vunpack.c.h.b16 %v1570
    %v2447 = vunpack.c.l.b16 %v1571
    %v2448 = vunpack.c.h.b16 %v1571
    %v2449 = vunpack.c.l.b16 %v1572
    %v2450 = vunpack.c.l.b16 %v1573
    %v2451 = vunpack.c.h.b16 %v1573
    %v2452 = vunpack.c.l.b16 %v1574
    %v2453 = vunpack.c.h.b16 %v1574
    %v2454 = vunpack.c.l.b16 %v1575
    %v2455 = vunpack.c.h.b16 %v1575
    %v2456 = vunpack.c.l.b16 %v1576
    %v2457 = vunpack.c.h.b16 %v1576
    %v2458 = vunpack.c.l.b16 %v1577
    %v2459 = vunpack.c.l.b16 %v1578
    %v2460 = vunpack.c.h.b16 %v1578
    %v2461 = vunpack.c.l.b16 %v1579
    %v2462 = vunpack.c.h.b16 %v1579
    %v2463 = vunpack.c.l.b16 %v1580
    %v2464 = vunpack.c.h.b16 %v1580
    %v2465 = vunpack.c.l.b16 %v1581
    %v2466 = vunpack.c.h.b16 %v1581
    %v2467 = vunpack.c.l.b16 %v1582
    %v2468 = vunpack.c.l.b16 %v1583
    %v2469 = vunpack.c.h.b16 %v1583
    %v2470 = vunpack.c.l.b16 %v1584
    %v2471 = vunpack.c.h.b16 %v1584
    %v2472 = vunpack.c.l.b16 %v1585
    %v2473 = vunpack.c.h.b16 %v1585
    %v2474 = vunpack.c.l.b16 %v1586
    %v2475 = vunpack.c.h.b16 %v1586
    %v2476 = vunpack.c.l.b16 %v1587
    %v2477 = vunpack.c.l.b16 %v1588
    %v2478 = vunpack.c.h.b16 %v1588
    %v2479 = vunpack.c.l.b16 %v1589
    %v2480 = vunpack.c.h.b16 %v1589
    %v2481 = vunpack.c.l.b16 %v1590
    %v2482 = vunpack.c.h.b16 %v1590
    %v2483 = vunpack.c.l.b16 %v1591
    %v2484 = vunpack.c.h.b16 %v1591
    %v2485 = vunpack.c.l.b16 %v1592
    %v2486 = vunpack.c.l.b16 %v1593
    %v2487 = vunpack.c.h.b16 %v1593
    %v2488 = vunpack.c.l.b16 %v1594
    %v2489 = vunpack.c.h.b16 %v1594
    %v2490 = vunpack.c.l.b16 %v1595
    %v2491 = vunpack.c.h.b16 %v1595
    %v2492 = vunpack.c.l.b16 %v1596
    %v2493 = vunpack.c.h.b16 %v1596
    %v2494 = vunpack.c.l.b16 %v1597
    %v2495 = vunpack.c.l.b16 %v1598
    %v2496 = vunpack.c.h.b16 %v1598
    %v2497 = vunpack.c.l.b16 %v1599
    %v2498 = vunpack.c.h.b16 %v1599
    %v2499 = vunpack.c.l.b16 %v1600
    %v2500 = vunpack.c.h.b16 %v1600
    %v2501 = vunpack.c.l.b16 %v1601
    %v2502 = vunpack.c.h.b16 %v1601
    %v2503 = vunpack.c.l.b16 %v1602
    %v2504 = vunpack.c.l.b16 %v1603
    %v2505 = vunpack.c.h.b16 %v1603
    %v2506 = vunpack.c.l.b16 %v1604
    %v2507 = vunpack.c.h.b16 %v1604
    %v2508 = vunpack.c.l.b16 %v1605
    %v2509 = vunpack.c.h.b16 %v1605
    %v2510 = vunpack.c.l.b16 %v1606
    %v2511 = vunpack.c.h.b16 %v1606
    %v2512 = vunpack.c.l.b16 %v1607
    %v2513 = vunpack.c.l.b16 %v1608
    %v2514 = vunpack.c.h.b16 %v1608
    %v2515 = vunpack.c.l.b16 %v1609
    %v2516 = vunpack.c.h.b16 %v1609
    %v2517 = vunpack.c.l.b16 %v1610
    %v2518 = vunpack.c.h.b16 %v1610
    %v2519 = vunpack.c.l.b16 %v1611
    %v2520 = vunpack.c.h.b16 %v1611
    %v2521 = vunpack.c.l.b16 %v1612
    %v2522 = vunpack.c.l.b16 %v1613
    %v2523 = vunpack.c.h.b16 %v1613
    %v2524 = vunpack.c.l.b16 %v1614
    %v2525 = vunpack.c.h.b16 %v1614
    %v2526 = vunpack.c.l.b16 %v1615
    %v2527 = vunpack.c.h.b16 %v1615
    %v2528 = vunpack.c.l.b16 %v1616
    %v2529 = vunpack.c.h.b16 %v1616
    %v2530 = vunpack.c.l.b16 %v1617
    %v2531 = vunpack.c.l.b16 %v1618
    %v2532 = vunpack.c.h.b16 %v1618
    %v2533 = vunpack.c.l.b16 %v1619
    %v2534 = vunpack.c.h.b16 %v1619
    %v2535 = vunpack.c.l.b16 %v1620
    %v2536 = vunpack.c.h.b16 %v1620
    %v2537 = vunpack.c.l.b16 %v1621
    %v2538 = vunpack.c.h.b16 %v1621
    %v2539 = vunpack.c.l.b16 %v1622
    %v2540 = vunpack.c.l.b16 %v1623
    %v2541 = vunpack.c.h.b16 %v1623
    %v2542 = vunpack.c.l.b16 %v1624
    %v2543 = vunpack.c.h.b16 %v1624
    %v2544 = vunpack.c.l.b16 %v1625
    %v2545 = vunpack.c.h.b16 %v1625
    %v2546 = vunpack.c.l.b16 %v1626
    %v2547 = vunpack.c.h.b16 %v1626
    %v2548 = vunpack.c.l.b16 %v1627
    %v2549 = vunpack.c.l.b16 %v1628
    %v2550 = vunpack.c.h.b16 %v1628
    %v2551 = vunpack.c.l.b16 %v1629
    %v2552 = vunpack.c.h.b16 %v1629
    %v2553 = vunpack.c.l.b16 %v1630
    %v2554 = vunpack.c.h.b16 %v1630
    %v2555 = vunpack.c.l.b16 %v1631
    %v2556 = vunpack.c.h.b16 %v1631
    %v2557 = vunpack.c.l.b16 %v1632
    %v2558 = vunpack.c.l.b16 %v1633
    %v2559 = vunpack.c.h.b16 %v1633
    %v2560 = vunpack.c.l.b16 %v1634
    %v2561 = vunpack.c.h.b16 %v1634
    %v2562 = vunpack.c.l.b16 %v1635
    %v2563 = vunpack.c.h.b16 %v1635
    %v2564 = vunpack.c.l.b16 %v1636
    %v2565 = vunpack.c.h.b16 %v1636
    %v2566 = vunpack.c.l.b16 %v1637
    %v2567 = vunpack.c.l.b16 %v1638
    %v2568 = vunpack.c.h.b16 %v1638
    %v2569 = vunpack.c.l.b16 %v1639
    %v2570 = vunpack.c.h.b16 %v1639
    %v2571 = vunpack.c.l.b16 %v1640
    %v2572 = vunpack.c.h.b16 %v1640
    %v2573 = vunpack.c.l.b16 %v1641
    %v2574 = vunpack.c.h.b16 %v1641
    %v2575 = vunpack.c.l.b16 %v1642
    %v2576 = vunpack.c.l.b16 %v1643
    %v2577 = vunpack.c.h.b16 %v1643
    %v2578 = vunpack.c.l.b16 %v1644
    %v2579 = vunpack.c.h.b16 %v1644
    %v2580 = vunpack.c.l.b16 %v1645
    %v2581 = vunpack.c.h.b16 %v1645
    %v2582 = vunpack.c.l.b16 %v1646
    %v2583 = vunpack.c.h.b16 %v1646
    %v2584 = vunpack.c.l.b16 %v1647
    %v2585 = vunpack.c.l.b16 %v1648
    %v2586 = vunpack.c.h.b16 %v1648
    %v2587 = vunpack.c.l.b16 %v1649
    %v2588 = vunpack.c.h.b16 %v1649
    %v2589 = vunpack.c.l.b16 %v1650
    %v2590 = vunpack.c.h.b16 %v1650
    %v2591 = vunpack.c.l.b16 %v1651
    %v2592 = vunpack.c.h.b16 %v1651
    %v2593 = vunpack.c.l.b16 %v1652
    %v2594 = vunpack.c.l.b16 %v1653
    %v2595 = vunpack.c.h.b16 %v1653
    %v2596 = vunpack.c.l.b16 %v1654
    %v2597 = vunpack.c.h.b16 %v1654
    %v2598 = vunpack.c.l.b16 %v1655
    %v2599 = vunpack.c.h.b16 %v1655
    %v2600 = vunpack.c.l.b16 %v1656
    %v2601 = vunpack.c.h.b16 %v1656
    %v2602 = vunpack.c.l.b16 %v1657
    %v2603 = vunpack.c.l.b16 %v1658
    %v2604 = vunpack.c.h.b16 %v1658
    %v2605 = vunpack.c.l.b16 %v1659
    %v2606 = vunpack.c.h.b16 %v1659
    %v2607 = vunpack.c.l.b16 %v1660
    %v2608 = vunpack.c.h.b16 %v1660
    %v2609 = vunpack.c.l.b16 %v1661
    %v2610 = vunpack.c.h.b16 %v1661
    %v2611 = vunpack.c.l.b16 %v1662
    %v2612 = vunpack.c.l.b16 %v1663
    %v2613 = vunpack.c.h.b16 %v1663
    %v2614 = vunpack.c.l.b16 %v1664
    %v2615 = vunpack.c.h.b16 %v1664
    %v2616 = vunpack.c.l.b16 %v1665
    %v2617 = vunpack.c.h.b16 %v1665
    %v2618 = vunpack.c.l.b16 %v1666
    %v2619 = vunpack.c.h.b16 %v1666
    %v2620 = vunpack.c.l.b16 %v1667
    %v2621 = vunpack.c.l.b16 %v1668
    %v2622 = vunpack.c.h.b16 %v1668
    %v2623 = vunpack.c.l.b16 %v1669
    %v2624 = vunpack.c.h.b16 %v1669
    %v2625 = vunpack.c.l.b16 %v1670
    %v2626 = vunpack.c.h.b16 %v1670
    %v2627 = vunpack.c.l.b16 %v1671
    %v2628 = vunpack.c.h.b16 %v1671
    %v2629 = vunpack.c.l.b16 %v1672
    %v2630 = vunpack.c.l.b16 %v1673
    %v2631 = vunpack.c.h.b16 %v1673
    %v2632 = vunpack.c.l.b16 %v1674
    %v2633 = vunpack.c.h.b16 %v1674
    %v2634 = vunpack.c.l.b16 %v1675
    %v2635 = vunpack.c.h.b16 %v1675
    %v2636 = vunpack.c.l.b16 %v1676
    %v2637 = vunpack.c.h.b16 %v1676
    %v2638 = vunpack.c.l.b16 %v1677
    %v2639 = vunpack.c.l.b16 %v1678
    %v2640 = vunpack.c.h.b16 %v1678
    %v2641 = vunpack.c.l.b16 %v1679
    %v2642 = vunpack.c.h.b16 %v1679
    %v2643 = vunpack.c.l.b16 %v1680
    %v2644 = vunpack.c.h.b16 %v1680
    %v2645 = vunpack.c.l.b16 %v1681
    %v2646 = vunpack.c.h.b16 %v1681
    %v2647 = vunpack.c.l.b16 %v1682
    %v2648 = vunpack.c.l.b16 %v1683
    %v2649 = vunpack.c.h.b16 %v1683
    %v2650 = vunpack.c.l.b16 %v1684
    %v2651 = vunpack.c.h.b16 %v1684
    %v2652 = vunpack.c.l.b16 %v1685
    %v2653 = vunpack.c.h.b16 %v1685
    %v2654 = vunpack.c.l.b16 %v1686
    %v2655 = vunpack.c.h.b16 %v1686
    %v2656 = vunpack.c.l.b16 %v1687
    %v2657 = vunpack.c.l.b16 %v1688
    %v2658 = vunpack.c.h.b16 %v1688
    %v2659 = vunpack.c.l.b16 %v1689
    %v2660 = vunpack.c.h.b16 %v1689
    %v2661 = vunpack.c.l.b16 %v1690
    %v2662 = vunpack.c.h.b16 %v1690
    %v2663 = vunpack.c.l.b16 %v1691
    %v2664 = vunpack.c.h.b16 %v1691
    %v2665 = vunpack.c.l.b16 %v1692
    %v2666 = vunpack.c.l.b16 %v1693
    %v2667 = vunpack.c.h.b16 %v1693
    %v2668 = vunpack.c.l.b16 %v1694
    %v2669 = vunpack.c.h.b16 %v1694
    %v2670 = vunpack.c.l.b16 %v1695
    %v2671 = vunpack.c.h.b16 %v1695
    %v2672 = vunpack.c.l.b16 %v1696
    %v2673 = vunpack.c.h.b16 %v1696
    %v2674 = vunpack.c.l.b16 %v1697
    %v2675 = vunpack.c.l.b16 %v1698
    %v2676 = vunpack.c.h.b16 %v1698
    %v2677 = vunpack.c.l.b16 %v1699
    %v2678 = vunpack.c.h.b16 %v1699
    %v2679 = vunpack.c.l.b16 %v1700
    %v2680 = vunpack.c.h.b16 %v1700
    %v2681 = vunpack.c.l.b16 %v1701
    %v2682 = vunpack.c.h.b16 %v1701
    %v2683 = vunpack.c.l.b16 %v1702
    %v2684 = vunpack.c.l.b16 %v1703
    %v2685 = vunpack.c.h.b16 %v1703
    %v2686 = vunpack.c.l.b16 %v1704
    %v2687 = vunpack.c.h.b16 %v1704
    %v2688 = vunpack.c.l.b16 %v1705
    %v2689 = vunpack.c.h.b16 %v1705
    %v2690 = vunpack.c.l.b16 %v1706
    %v2691 = vunpack.c.h.b16 %v1706
    %v2692 = vunpack.c.l.b16 %v1707
    %v2693 = vunpack.c.l.b16 %v1708
    %v2694 = vunpack.c.h.b16 %v1708
    %v2695 = vunpack.c.l.b16 %v1709
    %v2696 = vunpack.c.h.b16 %v1709
    %v2697 = vunpack.c.l.b16 %v1710
    %v2698 = vunpack.c.h.b16 %v1710
    %v2699 = vunpack.c.l.b16 %v1711
    %v2700 = vunpack.c.h.b16 %v1711
    %v2701 = vunpack.c.l.b16 %v1712
    %v2702 = vunpack.c.l.b16 %v1713
    %v2703 = vunpack.c.h.b16 %v1713
    %v2704 = vunpack.c.l.b16 %v1714
    %v2705 = vunpack.c.h.b16 %v1714
    %v2706 = vunpack.c.l.b16 %v1715
    %v2707 = vunpack.c.h.b16 %v1715
    %v2708 = vunpack.c.l.b16 %v1716
    %v2709 = vunpack.c.h.b16 %v1716
    %v2710 = vunpack.c.l.b16 %v1717
    %v2711 = vunpack.c.l.b16 %v1718
    %v2712 = vunpack.c.h.b16 %v1718
    %v2713 = vunpack.c.l.b16 %v1719
    %v2714 = vunpack.c.h.b16 %v1719
    %v2715 = vunpack.c.l.b16 %v1720
    %v2716 = vunpack.c.h.b16 %v1720
    %v2717 = vunpack.c.l.b16 %v1721
    %v2718 = vunpack.c.h.b16 %v1721
    %v2719 = vunpack.c.l.b16 %v1722
    %v2720 = vunpack.c.l.b16 %v1723
    %v2721 = vunpack.c.h.b16 %v1723
    %v2722 = vunpack.c.l.b16 %v1724
    %v2723 = vunpack.c.h.b16 %v1724
    %v2724 = vunpack.c.l.b16 %v1725
    %v2725 = vunpack.c.h.b16 %v1725
    %v2726 = vunpack.c.l.b16 %v1726
    %v2727 = vunpack.c.h.b16 %v1726
    %v2728 = vunpack.c.l.b16 %v1727
    %v2729 = vunpack.c.l.b16 %v1728
    %v2730 = vunpack.c.h.b16 %v1728
    %v2731 = vunpack.c.l.b16 %v1729
    %v2732 = vunpack.c.h.b16 %v1729
    %v2733 = vunpack.c.l.b16 %v1730
    %v2734 = vunpack.c.h.b16 %v1730
    %v2735 = vunpack.c.l.b16 %v1731
    %v2736 = vunpack.c.h.b16 %v1731
    %v2737 = vunpack.c.l.b16 %v1732
    %v2738 = vunpack.c.l.b16 %v1733
    %v2739 = vunpack.c.h.b16 %v1733
    %v2740 = vunpack.c.l.b16 %v1734
    %v2741 = vunpack.c.h.b16 %v1734
    %v2742 = vunpack.c.l.b16 %v1735
    %v2743 = vunpack.c.h.b16 %v1735
    %v2744 = vunpack.c.l.b16 %v1736
    %v2745 = vunpack.c.h.b16 %v1736
    %v2746 = vunpack.c.l.b16 %v1737
    %v2747 = vunpack.c.l.b16 %v1738
    %v2748 = vunpack.c.h.b16 %v1738
    %v2749 = vunpack.c.l.b16 %v1739
    %v2750 = vunpack.c.h.b16 %v1739
    %v2751 = vunpack.c.l.b16 %v1740
    %v2752 = vunpack.c.h.b16 %v1740
    %v2753 = vunpack.c.l.b16 %v1741
    %v2754 = vunpack.c.h.b16 %v1741
    %v2755 = vunpack.c.l.b16 %v1742
    %v2756 = vunpack.c.l.b16 %v1743
    %v2757 = vunpack.c.h.b16 %v1743
    %v2758 = vunpack.c.l.b16 %v1744
    %v2759 = vunpack.c.h.b16 %v1744
    %v2760 = vunpack.c.l.b16 %v1745
    %v2761 = vunpack.c.h.b16 %v1745
    %v2762 = vunpack.c.l.b16 %v1746
    %v2763 = vunpack.c.h.b16 %v1746
    %v2764 = vunpack.c.l.b16 %v1747
    %v2765 = vunpack.c.l.b16 %v1748
    %v2766 = vunpack.c.h.b16 %v1748
    %v2767 = vunpack.c.l.b16 %v1749
    %v2768 = vunpack.c.h.b16 %v1749
    %v2769 = vunpack.c.l.b16 %v1750
    %v2770 = vunpack.c.h.b16 %v1750
    %v2771 = vunpack.c.l.b16 %v1751
    %v2772 = vunpack.c.h.b16 %v1751
    %v2773 = vunpack.c.l.b16 %v1752
    %v2774 = vunpack.c.l.b16 %v1753
    %v2775 = vunpack.c.h.b16 %v1753
    %v2776 = vunpack.c.l.b16 %v1754
    %v2777 = vunpack.c.h.b16 %v1754
    %v2778 = vunpack.c.l.b16 %v1755
    %v2779 = vunpack.c.h.b16 %v1755
    %v2780 = vunpack.c.l.b16 %v1756
    %v2781 = vunpack.c.h.b16 %v1756
    %v2782 = vunpack.c.l.b16 %v1757
    %v2783 = vunpack.c.l.b16 %v1758
    %v2784 = vunpack.c.h.b16 %v1758
    %v2785 = vunpack.c.l.b16 %v1759
    %v2786 = vunpack.c.h.b16 %v1759
    %v2787 = vunpack.c.l.b16 %v1760
    %v2788 = vunpack.c.h.b16 %v1760
    %v2789 = vunpack.c.l.b16 %v1761
    %v2790 = vunpack.c.h.b16 %v1761
    %v2791 = vunpack.c.l.b16 %v1762
    %v2792 = vunpack.c.l.b16 %v1763
    %v2793 = vunpack.c.h.b16 %v1763
    %v2794 = vunpack.c.l.b16 %v1764
    %v2795 = vunpack.c.h.b16 %v1764
    %v2796 = vunpack.c.l.b16 %v1765
    %v2797 = vunpack.c.h.b16 %v1765
    %v2798 = vunpack.c.l.b16 %v1766
    %v2799 = vunpack.c.h.b16 %v1766
    %v2800 = vunpack.c.l.b16 %v1767
    %v2801 = vunpack.c.l.b16 %v1768
    %v2802 = vunpack.c.h.b16 %v1768
    %v2803 = vunpack.c.l.b16 %v1769
    %v2804 = vunpack.c.h.b16 %v1769
    %v2805 = vunpack.c.l.b16 %v1770
    %v2806 = vunpack.c.h.b16 %v1770
    %v2807 = vunpack.c.l.b16 %v1771
    %v2808 = vunpack.c.h.b16 %v1771
    %v2809 = vunpack.c.l.b16 %v1772
    %v2810 = vunpack.c.l.b16 %v1773
    %v2811 = vunpack.c.h.b16 %v1773
    %v2812 = vunpack.c.l.b16 %v1774
    %v2813 = vunpack.c.h.b16 %v1774
    %v2814 = vunpack.c.l.b16 %v1775
    %v2815 = vunpack.c.h.b16 %v1775
    %v2816 = vunpack.c.l.b16 %v1776
    %v2817 = vunpack.c.h.b16 %v1776
    %v2818 = vunpack.c.l.b16 %v1777
    %v2819 = vunpack.c.l.b16 %v1778
    %v2820 = vunpack.c.h.b16 %v1778
    %v2821 = vunpack.c.l.b16 %v1779
    %v2822 = vunpack.c.h.b16 %v1779
    %v2823 = vunpack.c.l.b16 %v1780
    %v2824 = vunpack.c.h.b16 %v1780
    %v2825 = vunpack.c.l.b16 %v1781
    %v2826 = vunpack.c.h.b16 %v1781
    %v2827 = vunpack.c.l.b16 %v1782
    %v2828 = vunpack.c.l.b16 %v1783
    %v2829 = vunpack.c.h.b16 %v1783
    %v2830 = vunpack.c.l.b16 %v1784
    %v2831 = vunpack.c.h.b16 %v1784
    %v2832 = vunpack.c.l.b16 %v1785
    %v2833 = vunpack.c.h.b16 %v1785
    %v2834 = vunpack.c.l.b16 %v1786
    %v2835 = vunpack.c.h.b16 %v1786
    %v2836 = vunpack.c.l.b16 %v1787
    %v2837 = vunpack.c.l.b16 %v1788
    %v2838 = vunpack.c.h.b16 %v1788
    %v2839 = vunpack.c.l.b16 %v1789
    %v2840 = vunpack.c.h.b16 %v1789
    %v2841 = vunpack.c.l.b16 %v1790
    %v2842 = vunpack.c.h.b16 %v1790
    %v2843 = vunpack.c.l.b16 %v1791
    %v2844 = vunpack.c.h.b16 %v1791
    %v2845 = vunpack.c.l.b16 %v1792
    %v2846 = vunpack.c.l.b16 %v1793
    %v2847 = vunpack.c.h.b16 %v1793
    %v2848 = vunpack.c.l.b16 %v1794
    %v2849 = vunpack.c.h.b16 %v1794
    %v2850 = vunpack.c.l.b16 %v1795
    %v2851 = vunpack.c.h.b16 %v1795
    %v2852 = vunpack.c.l.b16 %v1796
    %v2853 = vunpack.c.h.b16 %v1796
    %v2854 = vunpack.c.l.b16 %v1797
    %v2855 = vunpack.c.l.b16 %v1798
    %v2856 = vunpack.c.h.b16 %v1798
    %v2857 = vunpack.c.l.b16 %v1799
    %v2858 = vunpack.c.h.b16 %v1799
    %v2859 = vunpack.c.l.b16 %v1800
    %v2860 = vunpack.c.h.b16 %v1800
    %v2861 = vunpack.c.l.b16 %v1801
    %v2862 = vunpack.c.h.b16 %v1801
    %v2863 = vunpack.c.l.b16 %v1802
    %v2864 = vunpack.c.l.b16 %v1803
    %v2865 = vunpack.c.h.b16 %v1803
    %v2866 = vunpack.c.l.b16 %v1804
    %v2867 = vunpack.c.h.b16 %v1804
    %v2868 = vunpack.c.l.b16 %v1805
    %v2869 = vunpack.c.h.b16 %v1805
    %v2870 = vunpack.c.l.b16 %v1806
    %v2871 = vunpack.c.h.b16 %v1806
    %v2872 = vunpack.c.l.b16 %v1807
    %v2873 = vunpack.c.l.b16 %v1808
    %v2874 = vunpack.c.h.b16 %v1808
    %v2875 = vunpack.c.l.b16 %v1809
    %v2876 = vunpack.c.h.b16 %v1809
    %v2877 = vunpack.c.l.b16 %v1810
    %v2878 = vunpack.c.h.b16 %v1810
    %v2879 = vunpack.c.l.b16 %v1811
    %v2880 = vunpack.c.h.b16 %v1811
    %v2881 = vunpack.c.l.b16 %v1812
    %v2882 = vunpack.c.l.b16 %v1813
    %v2883 = vunpack.c.h.b16 %v1813
    %v2884 = vunpack.c.l.b16 %v1814
    %v2885 = vunpack.c.h.b16 %v1814
    %v2886 = vunpack.c.l.b16 %v1815
    %v2887 = vunpack.c.h.b16 %v1815
    %v2888 = vunpack.c.l.b16 %v1816
    %v2889 = vunpack.c.h.b16 %v1816
    %v2890 = vunpack.c.l.b16 %v1817
    %v2891 = vunpack.c.l.b16 %v1818
    %v2892 = vunpack.c.h.b16 %v1818
    %v2893 = vunpack.c.l.b16 %v1819
    %v2894 = vunpack.c.h.b16 %v1819
    %v2895 = vunpack.c.l.b16 %v1820
    %v2896 = vunpack.c.h.b16 %v1820
    %v2897 = vunpack.c.l.b16 %v1821
    %v2898 = vunpack.c.h.b16 %v1821
    %v2899 = vunpack.c.l.b16 %v1822
    %v2900 = vunpack.c.l.b16 %v1823
    %v2901 = vunpack.c.h.b16 %v1823
    %v2902 = vunpack.c.l.b16 %v1824
    %v2903 = vunpack.c.h.b16 %v1824
    %v2904 = vunpack.c.l.b16 %v1825
    %v2905 = vunpack.c.h.b16 %v1825
    %v2906 = vunpack.c.l.b16 %v1826
    %v2907 = vunpack.c.h.b16 %v1826
    %v2908 = vunpack.c.l.b16 %v1827
    %v2909 = vunpack.c.l.b16 %v1828
    %v2910 = vunpack.c.h.b16 %v1828
    %v2911 = vunpack.c.l.b16 %v1829
    %v2912 = vunpack.c.h.b16 %v1829
    %v2913 = vunpack.c.l.b16 %v1830
    %v2914 = vunpack.c.h.b16 %v1830
    %v2915 = vunpack.c.l.b16 %v1831
    %v2916 = vunpack.c.h.b16 %v1831
    %v2917 = vunpack.c.l.b16 %v1832
    %v2918 = vunpack.c.l.b16 %v1833
    %v2919 = vunpack.c.h.b16 %v1833
    %v2920 = vunpack.c.l.b16 %v1834
    %v2921 = vunpack.c.h.b16 %v1834
    %v2922 = vunpack.c.l.b16 %v1835
    %v2923 = vunpack.c.h.b16 %v1835
    %v2924 = vunpack.c.l.b16 %v1836
    %v2925 = vunpack.c.h.b16 %v1836
    %v2926 = vunpack.c.l.b16 %v1837
    %v2927 = vunpack.c.l.b16 %v1838
    %v2928 = vunpack.c.h.b16 %v1838
    %v2929 = vunpack.c.l.b16 %v1839
    %v2930 = vunpack.c.h.b16 %v1839
    %v2931 = vunpack.c.l.b16 %v1840
    %v2932 = vunpack.c.h.b16 %v1840
    %v2933 = vunpack.c.l.b16 %v1841
    %v2934 = vunpack.c.h.b16 %v1841
    %v2935 = vunpack.c.l.b16 %v1842
    %v2936 = vunpack.c.l.b16 %v1843
    %v2937 = vunpack.c.h.b16 %v1843
    %v2938 = vunpack.c.l.b16 %v1844
    %v2939 = vunpack.c.h.b16 %v1844
    %v2940 = vunpack.c.l.b16 %v1845
    %v2941 = vunpack.c.h.b16 %v1845
    %v2942 = vunpack.c.l.b16 %v1846
    %v2943 = vunpack.c.h.b16 %v1846
    %v2944 = vunpack.c.l.b16 %v1847
    %v2945 = vunpack.c.l.b16 %v1848
    %v2946 = vunpack.c.h.b16 %v1848
    %v2947 = vunpack.c.l.b16 %v1849
    %v2948 = vunpack.c.h.b16 %v1849
    %v2949 = vunpack.c.l.b16 %v1850
    %v2950 = vunpack.c.h.b16 %v1850
    %v2951 = vunpack.c.l.b16 %v1851
    %v2952 = vunpack.c.h.b16 %v1851
    %v2953 = vunpack.c.l.b16 %v1852
    %v2954 = vunpack.c.l.b16 %v1853
    %v2955 = vunpack.c.h.b16 %v1853
    %v2956 = vunpack.c.l.b16 %v1854
    %v2957 = vunpack.c.h.b16 %v1854
    %v2958 = vunpack.c.l.b16 %v1855
    %v2959 = vunpack.c.h.b16 %v1855
    %v2960 = vunpack.c.l.b16 %v1856
    %v2961 = vunpack.c.h.b16 %v1856
    %v2962 = vunpack.c.l.b16 %v1857
    %v2963 = vunpack.c.l.b16 %v1858
    %v2964 = vunpack.c.h.b16 %v1858
    %v2965 = vunpack.c.l.b16 %v1859
    %v2966 = vunpack.c.h.b16 %v1859
    %v2967 = vunpack.c.l.b16 %v1860
    %v2968 = vunpack.c.h.b16 %v1860
    %v2969 = vunpack.c.l.b16 %v1861
    %v2970 = vunpack.c.h.b16 %v1861
    %v2971 = vunpack.c.l.b16 %v1862
    %v2972 = vunpack.c.l.b16 %v1863
    %v2973 = vunpack.c.h.b16 %v1863
    %v2974 = vunpack.c.l.b16 %v1864
    %v2975 = vunpack.c.h.b16 %v1864
    %v2976 = vunpack.c.l.b16 %v1865
    %v2977 = vunpack.c.h.b16 %v1865
    %v2978 = vunpack.c.l.b16 %v1866
    %v2979 = vunpack.c.h.b16 %v1866
    %v2980 = vunpack.c.l.b16 %v1867
    %v2981 = vunpack.c.l.b16 %v1868
    %v2982 = vunpack.c.h.b16 %v1868
    %v2983 = vunpack.c.l.b16 %v1869
    %v2984 = vunpack.c.h.b16 %v1869
    %v2985 = vunpack.c.l.b16 %v1870
    %v2986 = vunpack.c.h.b16 %v1870
    %v2987 = vunpack.c.l.b16 %v1871
    %v2988 = vunpack.c.h.b16 %v1871
    %v2989 = vunpack.c.l.b16 %v1872
    %v2990 = vunpack.c.l.b16 %v1873
    %v2991 = vunpack.c.h.b16 %v1873
    %v2992 = vunpack.c.l.b16 %v1874
    %v2993 = vunpack.c.h.b16 %v1874
    %v2994 = vunpack.c.l.b16 %v1875
    %v2995 = vunpack.c.h.b16 %v1875
    %v2996 = vunpack.c.l.b16 %v1876
    %v2997 = vunpack.c.h.b16 %v1876
    %v2998 = vunpack.c.l.b16 %v1877
    %v2999 = vunpack.c.l.b16 %v1878
    %v3000 = vunpack.c.h.b16 %v1878
    %v3001 = vunpack.c.l.b16 %v1879
    %v3002 = vunpack.c.h.b16 %v1879
    %v3003 = vunpack.c.l.b16 %v1880
    %v3004 = vunpack.c.h.b16 %v1880
    %v3005 = vunpack.c.l.b16 %v1881
    %v3006 = vunpack.c.h.b16 %v1881
    %v3007 = vunpack.c.l.b16 %v1882
    %v3008 = vunpack.c.l.b16 %v1883
    %v3009 = vunpack.c.h.b16 %v1883
    %v3010 = vunpack.c.l.b16 %v1884
    %v3011 = vunpack.c.h.b16 %v1884
    %v3012 = vunpack.c.l.b16 %v1885
    %v3013 = vunpack.c.h.b16 %v1885
    %v3014 = vunpack.c.l.b16 %v1886
    %v3015 = vunpack.c.h.b16 %v1886
    %v3016 = vunpack.c.l.b16 %v1887
    %v3017 = vunpack.c.l.b16 %v1888
    %v3018 = vunpack.c.h.b16 %v1888
    %v3019 = vunpack.c.l.b16 %v1889
    %v3020 = vunpack.c.h.b16 %v1889
    %v3021 = vunpack.c.l.b16 %v1890
    %v3022 = vunpack.c.h.b16 %v1890
    %v3023 = vunpack.c.l.b16 %v1891
    %v3024 = vunpack.c.h.b16 %v1891
    %v3025 = vunpack.c.l.b16 %v1892
    %v3026 = vunpack.c.l.b16 %v1893
    %v3027 = vunpack.c.h.b16 %v1893
    %v3028 = vunpack.c.l.b16 %v1894
    %v3029 = vunpack.c.h.b16 %v1894
    %v3030 = vunpack.c.l.b16 %v1895
    %v3031 = vunpack.c.h.b16 %v1895
    %v3032 = vunpack.c.l.b16 %v1896
    %v3033 = vunpack.c.h.b16 %v1896
    %v3034 = vunpack.c.l.b16 %v1897
    %v3035 = vunpack.c.l.b16 %v1898
    %v3036 = vunpack.c.h.b16 %v1898
    %v3037 = vunpack.c.l.b16 %v1899
    %v3038 = vunpack.c.h.b16 %v1899
    %v3039 = vunpack.c.l.b16 %v1900
    %v3040 = vunpack.c.h.b16 %v1900
    %v3041 = vunpack.c.l.b16 %v1901
    %v3042 = vunpack.c.h.b16 %v1901
    %v3043 = vunpack.c.l.b16 %v1902
    %v3044 = vunpack.c.l.b16 %v1903
    %v3045 = vunpack.c.h.b16 %v1903
    %v3046 = vunpack.c.l.b16 %v1904
    %v3047 = vunpack.c.h.b16 %v1904
    %v3048 = vunpack.c.l.b16 %v1905
    %v3049 = vunpack.c.h.b16 %v1905
    %v3050 = vunpack.c.l.b16 %v1906
    %v3051 = vunpack.c.h.b16 %v1906
    %v3052 = vunpack.c.l.b16 %v1907
    %v3053 = vunpack.c.l.b16 %v1908
    %v3054 = vunpack.c.h.b16 %v1908
    %v3055 = vunpack.c.l.b16 %v1909
    %v3056 = vunpack.c.h.b16 %v1909
    %v3057 = vunpack.c.l.b16 %v1910
    %v3058 = vunpack.c.h.b16 %v1910
    %v3059 = vunpack.c.l.b16 %v1911
    %v3060 = vunpack.c.h.b16 %v1911
    %v3061 = vunpack.c.l.b16 %v1912
    %v3062 = vunpack.c.l.b16 %v1913
    %v3063 = vunpack.c.h.b16 %v1913
    %v3064 = vunpack.c.l.b16 %v1914
    %v3065 = vunpack.c.h.b16 %v1914
    %v3066 = vunpack.c.l.b16 %v1915
    %v3067 = vunpack.c.h.b16 %v1915
    %v3068 = vunpack.c.l.b16 %v1916
    %v3069 = vunpack.c.h.b16 %v1916
    %v3070 = vunpack.c.l.b16 %v1917
    %v3071 = vunpack.c.l.b16 %v1918
    %v3072 = vunpack.c.h.b16 %v1918
    %v3073 = vunpack.c.l.b16 %v1919
    %v3074 = vunpack.c.h.b16 %v1919
    %v3075 = vunpack.c.l.b16 %v1920
    %v3076 = vunpack.c.h.b16 %v1920
    %v3077 = vunpack.c.l.b16 %v1921
    %v3078 = vunpack.c.h.b16 %v1921
    %v3079 = vunpack.c.l.b16 %v1922
    %v3080 = vunpack.c.l.b16 %v1923
    %v3081 = vunpack.c.h.b16 %v1923
    %v3082 = vunpack.c.l.b16 %v1924
    %v3083 = vunpack.c.h.b16 %v1924
    %v3084 = vunpack.c.l.b16 %v1925
    %v3085 = vunpack.c.h.b16 %v1925
    %v3086 = vunpack.c.l.b16 %v1926
    %v3087 = vunpack.c.h.b16 %v1926
    %v3088 = vunpack.c.l.b16 %v1927
    %v3089 = vunpack.c.l.b16 %v1928
    %v3090 = vunpack.c.h.b16 %v1928
    %v3091 = vunpack.c.l.b16 %v1929
    %v3092 = vunpack.c.h.b16 %v1929
    %v3093 = vunpack.c.l.b16 %v1930
    %v3094 = vunpack.c.h.b16 %v1930
    %v3095 = vunpack.c.l.b16 %v1931
    %v3096 = vunpack.c.h.b16 %v1931
    %v3097 = vunpack.c.l.b16 %v1932
    %v3098 = vunpack.c.l.b16 %v1933
    %v3099 = vunpack.c.h.b16 %v1933
    %v3100 = vunpack.c.l.b16 %v1934
    %v3101 = vunpack.c.h.b16 %v1934
    %v3102 = vunpack.c.l.b16 %v1935
    %v3103 = vunpack.c.h.b16 %v1935
    %v3104 = vunpack.c.l.b16 %v1936
    %v3105 = vunpack.c.h.b16 %v1936
    %v3106 = vunpack.c.l.b16 %v1937
    %v3107 = vpack.c.b16 %v2396, %v2387
    %v3108 = vpack.c.b16 %v2397, %v2388
    %v3109 = vpack.c.b16 %v2398, %v2389
    %v3110 = vpack.c.b16 %v2399, %v2390
    %v3111 = vpack.c.b16 %v2400, %v2391
    %v3112 = vpack.c.b16 %v2401, %v2392
    %v3113 = vpack.c.b16 %v2402, %v2393
    %v3114 = vpack.c.b16 %v2403, %v2394
    %v3115 = vpack.c.b16 %v2404, %v2395
    %v3116 = vpack.c.b16 %v2414, %v2405
    %v3117 = vpack.c.b16 %v2415, %v2406
    %v3118 = vpack.c.b16 %v2416, %v2407
    %v3119 = vpack.c.b16 %v2417, %v2408
    %v3120 = vpack.c.b16 %v2418, %v2409
    %v3121 = vpack.c.b16 %v2419, %v2410
    %v3122 = vpack.c.b16 %v2420, %v2411
    %v3123 = vpack.c.b16 %v2421, %v2412
    %v3124 = vpack.c.b16 %v2422, %v2413
    %v3125 = vpack.c.b16 %v2432, %v2423
    %v3126 = vpack.c.b16 %v2433, %v2424
    %v3127 = vpack.c.b16 %v2434, %v2425
    %v3128 = vpack.c.b16 %v2435, %v2426
    %v3129 = vpack.c.b16 %v2436, %v2427
    %v3130 = vpack.c.b16 %v2437, %v2428
    %v3131 = vpack.c.b16 %v2438, %v2429
    %v3132 = vpack.c.b16 %v2439, %v2430
    %v3133 = vpack.c.b16 %v2440, %v2431
    %v3134 = vpack.c.b16 %v2450, %v2441
    %v3135 = vpack.c.b16 %v2451, %v2442
    %v3136 = vpack.c.b16 %v2452, %v2443
    %v3137 = vpack.c.b16 %v2453, %v2444
    %v3138 = vpack.c.b16 %v2454, %v2445
    %v3139 = vpack.c.b16 %v2455, %v2446
    %v3140 = vpack.c.b16 %v2456, %v2447
    %v3141 = vpack.c.b16 %v2457, %v2448
    %v3142 = vpack.c.b16 %v2458, %v2449
    %v3143 = vpack.c.b16 %v2468, %v2459
    %v3144 = vpack.c.b16 %v2469, %v2460
    %v3145 = vpack.c.b16 %v2470, %v2461
    %v3146 = vpack.c.b16 %v2471, %v2462
    %v3147 = vpack.c.b16 %v2472, %v2463
    %v3148 = vpack.c.b16 %v2473, %v2464
    %v3149 = vpack.c.b16 %v2474, %v2465
    %v3150 = vpack.c.b16 %v2475, %v2466
    %v3151 = vpack.c.b16 %v2476, %v2467
    %v3152 = vpack.c.b16 %v2486, %v2477
    %v3153 = vpack.c.b16 %v2487, %v2478
    %v3154 = vpack.c.b16 %v2488, %v2479
    %v3155 = vpack.c.b16 %v2489, %v2480
    %v3156 = vpack.c.b16 %v2490, %v2481
    %v3157 = vpack.c.b16 %v2491, %v2482
    %v3158 = vpack.c.b16 %v2492, %v2483
    %v3159 = vpack.c.b16 %v2493, %v2484
    %v3160 = vpack.c.b16 %v2494, %v2485
    %v3161 = vpack.c.b16 %v2504, %v2495
    %v3162 = vpack.c.b16 %v2505, %v2496
    %v3163 = vpack.c.b16 %v2506, %v2497
    %v3164 = vpack.c.b16 %v2507, %v2498
    %v3165 = vpack.c.b16 %v2508, %v2499
    %v3166 = vpack.c.b16 %v2509, %v2500
    %v3167 = vpack.c.b16 %v2510, %v2501
    %v3168 = vpack.c.b16 %v2511, %v2502
    %v3169 = vpack.c.b16 %v2512, %v2503
    %v3170 = vpack.c.b16 %v2522, %v2513
    %v3171 = vpack.c.b16 %v2523, %v2514
    %v3172 = vpack.c.b16 %v2524, %v2515
    %v3173 = vpack.c.b16 %v2525, %v2516
    %v3174 = vpack.c.b16 %v2526, %v2517
    %v3175 = vpack.c.b16 %v2527, %v2518
    %v3176 = vpack.c.b16 %v2528, %v2519
    %v3177 = vpack.c.b16 %v2529, %v2520
    %v3178 = vpack.c.b16 %v2530, %v2521
    %v3179 = vpack.c.b16 %v2540, %v2531
    %v3180 = vpack.c.b16 %v2541, %v2532
    %v3181 = vpack.c.b16 %v2542, %v2533
    %v3182 = vpack.c.b16 %v2543, %v2534
    %v3183 = vpack.c.b16 %v2544, %v2535
    %v3184 = vpack.c.b16 %v2545, %v2536
    %v3185 = vpack.c.b16 %v2546, %v2537
    %v3186 = vpack.c.b16 %v2547, %v2538
    %v3187 = vpack.c.b16 %v2548, %v2539
    %v3188 = vpack.c.b16 %v2558, %v2549
    %v3189 = vpack.c.b16 %v2559, %v2550
    %v3190 = vpack.c.b16 %v2560, %v2551
    %v3191 = vpack.c.b16 %v2561, %v2552
    %v3192 = vpack.c.b16 %v2562, %v2553
    %v3193 = vpack.c.b16 %v2563, %v2554
    %v3194 = vpack.c.b16 %v2564, %v2555
    %v3195 = vpack.c.b16 %v2565, %v2556
    %v3196 = vpack.c.b16 %v2566, %v2557
    %v3197 = vpack.c.b16 %v2576, %v2567
    %v3198 = vpack.c.b16 %v2577, %v2568
    %v3199 = vpack.c.b16 %v2578, %v2569
    %v3200 = vpack.c.b16 %v2579, %v2570
    %v3201 = vpack.c.b16 %v2580, %v2571
    %v3202 = vpack.c.b16 %v2581, %v2572
    %v3203 = vpack.c.b16 %v2582, %v2573
    %v3204 = vpack.c.b16 %v2583, %v2574
    %v3205 = vpack.c.b16 %v2584, %v2575
    %v3206 = vpack.c.b16 %v2594, %v2585
    %v3207 = vpack.c.b16 %v2595, %v2586
    %v3208 = vpack.c.b16 %v2596, %v2587
    %v3209 = vpack.c.b16 %v2597, %v2588
    %v3210 = vpack.c.b16 %v2598, %v2589
    %v3211 = vpack.c.b16 %v2599, %v2590
    %v3212 = vpack.c.b16 %v2600, %v2591
    %v3213 = vpack.c.b16 %v2601, %v2592
    %v3214 = vpack.c.b16 %v2602, %v2593
    %v3215 = vpack.c.b16 %v2612, %v2603
    %v3216 = vpack.c.b16 %v2613, %v2604
    %v3217 = vpack.c.b16 %v2614, %v2605
    %v3218 = vpack.c.b16 %v2615, %v2606
    %v3219 = vpack.c.b16 %v2616, %v2607
    %v3220 = vpack.c.b16 %v2617, %v2608
    %v3221 = vpack.c.b16 %v2618, %v2609
    %v3222 = vpack.c.b16 %v2619, %v2610
    %v3223 = vpack.c.b16 %v2620, %v2611
    %v3224 = vpack.c.b16 %v2630, %v2621
    %v3225 = vpack.c.b16 %v2631, %v2622
    %v3226 = vpack.c.b16 %v2632, %v2623
    %v3227 = vpack.c.b16 %v2633, %v2624
    %v3228 = vpack.c.b16 %v2634, %v2625
    %v3229 = vpack.c.b16 %v2635, %v2626
    %v3230 = vpack.c.b16 %v2636, %v2627
    %v3231 = vpack.c.b16 %v2637, %v2628
    %v3232 = vpack.c.b16 %v2638, %v2629
    %v3233 = vpack.c.b16 %v2648, %v2639
    %v3234 = vpack.c.b16 %v2649, %v2640
    %v3235 = vpack.c.b16 %v2650, %v2641
    %v3236 = vpack.c.b16 %v2651, %v2642
    %v3237 = vpack.c.b16 %v2652, %v2643
    %v3238 = vpack.c.b16 %v2653, %v2644
    %v3239 = vpack.c.b16 %v2654, %v2645
    %v3240 = vpack.c.b16 %v2655, %v2646
    %v3241 = vpack.c.b16 %v2656, %v2647
    %v3242 = vpack.c.b16 %v2666, %v2657
    %v3243 = vpack.c.b16 %v2667, %v2658
    %v3244 = vpack.c.b16 %v2668, %v2659
    %v3245 = vpack.c.b16 %v2669, %v2660
    %v3246 = vpack.c.b16 %v2670, %v2661
    %v3247 = vpack.c.b16 %v2671, %v2662
    %v3248 = vpack.c.b16 %v2672, %v2663
    %v3249 = vpack.c.b16 %v2673, %v2664
    %v3250 = vpack.c.b16 %v2674, %v2665
    %v3251 = vpack.c.b16 %v2684, %v2675
    %v3252 = vpack.c.b16 %v2685, %v2676
    %v3253 = vpack.c.b16 %v2686, %v2677
    %v3254 = vpack.c.b16 %v2687, %v2678
    %v3255 = vpack.c.b16 %v2688, %v2679
    %v3256 = vpack.c.b16 %v2689, %v2680
    %v3257 = vpack.c.b16 %v2690, %v2681
    %v3258 = vpack.c.b16 %v2691, %v2682
    %v3259 = vpack.c.b16 %v2692, %v2683
    %v3260 = vpack.c.b16 %v2702, %v2693
    %v3261 = vpack.c.b16 %v2703, %v2694
    %v3262 = vpack.c.b16 %v2704, %v2695
    %v3263 = vpack.c.b16 %v2705, %v2696
    %v3264 = vpack.c.b16 %v2706, %v2697
    %v3265 = vpack.c.b16 %v2707, %v2698
    %v3266 = vpack.c.b16 %v2708, %v2699
    %v3267 = vpack.c.b16 %v2709, %v2700
    %v3268 = vpack.c.b16 %v2710, %v2701
    %v3269 = vpack.c.b16 %v2720, %v2711
    %v3270 = vpack.c.b16 %v2721, %v2712
    %v3271 = vpack.c.b16 %v2722, %v2713
    %v3272 = vpack.c.b16 %v2723, %v2714
    %v3273 = vpack.c.b16 %v2724, %v2715
    %v3274 = vpack.c.b16 %v2725, %v2716
    %v3275 = vpack.c.b16 %v2726, %v2717
    %v3276 = vpack.c.b16 %v2727, %v2718
    %v3277 = vpack.c.b16 %v2728, %v2719
    %v3278 = vpack.c.b16 %v2738, %v2729
    %v3279 = vpack.c.b16 %v2739, %v2730
    %v3280 = vpack.c.b16 %v2740, %v2731
    %v3281 = vpack.c.b16 %v2741, %v2732
    %v3282 = vpack.c.b16 %v2742, %v2733
    %v3283 = vpack.c.b16 %v2743, %v2734
    %v3284 = vpack.c.b16 %v2744, %v2735
    %v3285 = vpack.c.b16 %v2745, %v2736
    %v3286 = vpack.c.b16 %v2746, %v2737
    %v3287 = vpack.c.b16 %v2756, %v2747
    %v3288 = vpack.c.b16 %v2757, %v2748
    %v3289 = vpack.c.b16 %v2758, %v2749
    %v3290 = vpack.c.b16 %v2759, %v2750
    %v3291 = vpack.c.b16 %v2760, %v2751
    %v3292 = vpack.c.b16 %v2761, %v2752
    %v3293 = vpack.c.b16 %v2762, %v2753
    %v3294 = vpack.c.b16 %v2763, %v2754
    %v3295 = vpack.c.b16 %v2764, %v2755
    %v3296 = vpack.c.b16 %v2774, %v2765
    %v3297 = vpack.c.b16 %v2775, %v2766
    %v3298 = vpack.c.b16 %v2776, %v2767
    %v3299 = vpack.c.b16 %v2777, %v2768
    %v3300 = vpack.c.b16 %v2778, %v2769
    %v3301 = vpack.c.b16 %v2779, %v2770
    %v3302 = vpack.c.b16 %v2780, %v2771
    %v3303 = vpack.c.b16 %v2781, %v2772
    %v3304 = vpack.c.b16 %v2782, %v2773
    %v3305 = vpack.c.b16 %v2792, %v2783
    %v3306 = vpack.c.b16 %v2793, %v2784
    %v3307 = vpack.c.b16 %v2794, %v2785
    %v3308 = vpack.c.b16 %v2795, %v2786
    %v3309 = vpack.c.b16 %v2796, %v2787
    %v3310 = vpack.c.b16 %v2797, %v2788
    %v3311 = vpack.c.b16 %v2798, %v2789
    %v3312 = vpack.c.b16 %v2799, %v2790
    %v3313 = vpack.c.b16 %v2800, %v2791
    %v3314 = vpack.c.b16 %v2810, %v2801
    %v3315 = vpack.c.b16 %v2811, %v2802
    %v3316 = vpack.c.b16 %v2812, %v2803
    %v3317 = vpack.c.b16 %v2813, %v2804
    %v3318 = vpack.c.b16 %v2814, %v2805
    %v3319 = vpack.c.b16 %v2815, %v2806
    %v3320 = vpack.c.b16 %v2816, %v2807
    %v3321 = vpack.c.b16 %v2817, %v2808
    %v3322 = vpack.c.b16 %v2818, %v2809
    %v3323 = vpack.c.b16 %v2828, %v2819
    %v3324 = vpack.c.b16 %v2829, %v2820
    %v3325 = vpack.c.b16 %v2830, %v2821
    %v3326 = vpack.c.b16 %v2831, %v2822
    %v3327 = vpack.c.b16 %v2832, %v2823
    %v3328 = vpack.c.b16 %v2833, %v2824
    %v3329 = vpack.c.b16 %v2834, %v2825
    %v3330 = vpack.c.b16 %v2835, %v2826
    %v3331 = vpack.c.b16 %v2836, %v2827
    %v3332 = vpack.c.b16 %v2846, %v2837
    %v3333 = vpack.c.b16 %v2847, %v2838
    %v3334 = vpack.c.b16 %v2848, %v2839
    %v3335 = vpack.c.b16 %v2849, %v2840
    %v3336 = vpack.c.b16 %v2850, %v2841
    %v3337 = vpack.c.b16 %v2851, %v2842
    %v3338 = vpack.c.b16 %v2852, %v2843
    %v3339 = vpack.c.b16 %v2853, %v2844
    %v3340 = vpack.c.b16 %v2854, %v2845
    %v3341 = vpack.c.b16 %v2864, %v2855
    %v3342 = vpack.c.b16 %v2865, %v2856
    %v3343 = vpack.c.b16 %v2866, %v2857
    %v3344 = vpack.c.b16 %v2867, %v2858
    %v3345 = vpack.c.b16 %v2868, %v2859
    %v3346 = vpack.c.b16 %v2869, %v2860
    %v3347 = vpack.c.b16 %v2870, %v2861
    %v3348 = vpack.c.b16 %v2871, %v2862
    %v3349 = vpack.c.b16 %v2872, %v2863
    %v3350 = vpack.c.b16 %v2882, %v2873
    %v3351 = vpack.c.b16 %v2883, %v2874
    %v3352 = vpack.c.b16 %v2884, %v2875
    %v3353 = vpack.c.b16 %v2885, %v2876
    %v3354 = vpack.c.b16 %v2886, %v2877
    %v3355 = vpack.c.b16 %v2887, %v2878
    %v3356 = vpack.c.b16 %v2888, %v2879
    %v3357 = vpack.c.b16 %v2889, %v2880
    %v3358 = vpack.c.b16 %v2890, %v2881
    %v3359 = vpack.c.b16 %v2900, %v2891
    %v3360 = vpack.c.b16 %v2901, %v2892
    %v3361 = vpack.c.b16 %v2902, %v2893
    %v3362 = vpack.c.b16 %v2903, %v2894
    %v3363 = vpack.c.b16 %v2904, %v2895
    %v3364 = vpack.c.b16 %v2905, %v2896
    %v3365 = vpack.c.b16 %v2906, %v2897
    %v3366 = vpack.c.b16 %v2907, %v2898
    %v3367 = vpack.c.b16 %v2908, %v2899
    %v3368 = vpack.c.b16 %v2918, %v2909
    %v3369 = vpack.c.b16 %v2919, %v2910
    %v3370 = vpack.c.b16 %v2920, %v2911
    %v3371 = vpack.c.b16 %v2921, %v2912
    %v3372 = vpack.c.b16 %v2922, %v2913
    %v3373 = vpack.c.b16 %v2923, %v2914
    %v3374 = vpack.c.b16 %v2924, %v2915
    %v3375 = vpack.c.b16 %v2925, %v2916
    %v3376 = vpack.c.b16 %v2926, %v2917
    %v3377 = vpack.c.b16 %v2936, %v2927
    %v3378 = vpack.c.b16 %v2937, %v2928
    %v3379 = vpack.c.b16 %v2938, %v2929
    %v3380 = vpack.c.b16 %v2939, %v2930
    %v3381 = vpack.c.b16 %v2940, %v2931
    %v3382 = vpack.c.b16 %v2941, %v2932
    %v3383 = vpack.c.b16 %v2942, %v2933
    %v3384 = vpack.c.b16 %v2943, %v2934
    %v3385 = vpack.c.b16 %v2944, %v2935
    %v3386 = vpack.c.b16 %v2954, %v2945
    %v3387 = vpack.c.b16 %v2955, %v2946
    %v3388 = vpack.c.b16 %v2956, %v2947
    %v3389 = vpack.c.b16 %v2957, %v2948
    %v3390 = vpack.c.b16 %v2958, %v2949
    %v3391 = vpack.c.b16 %v2959, %v2950
    %v3392 = vpack.c.b16 %v2960, %v2951
    %v3393 = vpack.c.b16 %v2961, %v2952
    %v3394 = vpack.c.b16 %v2962, %v2953
    %v3395 = vpack.c.b16 %v2972, %v2963
    %v3396 = vpack.c.b16 %v2973, %v2964
    %v3397 = vpack.c.b16 %v2974, %v2965
    %v3398 = vpack.c.b16 %v2975, %v2966
    %v3399 = vpack.c.b16 %v2976, %v2967
    %v3400 = vpack.c.b16 %v2977, %v2968
    %v3401 = vpack.c.b16 %v2978, %v2969
    %v3402 = vpack.c.b16 %v2979, %v2970
    %v3403 = vpack.c.b16 %v2980, %v2971
    %v3404 = vpack.c.b16 %v2990, %v2981
    %v3405 = vpack.c.b16 %v2991, %v2982
    %v3406 = vpack.c.b16 %v2992, %v2983
    %v3407 = vpack.c.b16 %v2993, %v2984
    %v3408 = vpack.c.b16 %v2994, %v2985
    %v3409 = vpack.c.b16 %v2995, %v2986
    %v3410 = vpack.c.b16 %v2996, %v2987
    %v3411 = vpack.c.b16 %v2997, %v2988
    %v3412 = vpack.c.b16 %v2998, %v2989
    %v3413 = vpack.c.b16 %v3008, %v2999
    %v3414 = vpack.c.b16 %v3009, %v3000
    %v3415 = vpack.c.b16 %v3010, %v3001
    %v3416 = vpack.c.b16 %v3011, %v3002
    %v3417 = vpack.c.b16 %v3012, %v3003
    %v3418 = vpack.c.b16 %v3013, %v3004
    %v3419 = vpack.c.b16 %v3014, %v3005
    %v3420 = vpack.c.b16 %v3015, %v3006
    %v3421 = vpack.c.b16 %v3016, %v3007
    %v3422 = vpack.c.b16 %v3026, %v3017
    %v3423 = vpack.c.b16 %v3027, %v3018
    %v3424 = vpack.c.b16 %v3028, %v3019
    %v3425 = vpack.c.b16 %v3029, %v3020
    %v3426 = vpack.c.b16 %v3030, %v3021
    %v3427 = vpack.c.b16 %v3031, %v3022
    %v3428 = vpack.c.b16 %v3032, %v3023
    %v3429 = vpack.c.b16 %v3033, %v3024
    %v3430 = vpack.c.b16 %v3034, %v3025
    %v3431 = vpack.c.b16 %v3044, %v3035
    %v3432 = vpack.c.b16 %v3045, %v3036
    %v3433 = vpack.c.b16 %v3046, %v3037
    %v3434 = vpack.c.b16 %v3047, %v3038
    %v3435 = vpack.c.b16 %v3048, %v3039
    %v3436 = vpack.c.b16 %v3049, %v3040
    %v3437 = vpack.c.b16 %v3050, %v3041
    %v3438 = vpack.c.b16 %v3051, %v3042
    %v3439 = vpack.c.b16 %v3052, %v3043
    %v3440 = vpack.c.b16 %v3062, %v3053
    %v3441 = vpack.c.b16 %v3063, %v3054
    %v3442 = vpack.c.b16 %v3064, %v3055
    %v3443 = vpack.c.b16 %v3065, %v3056
    %v3444 = vpack.c.b16 %v3066, %v3057
    %v3445 = vpack.c.b16 %v3067, %v3058
    %v3446 = vpack.c.b16 %v3068, %v3059
    %v3447 = vpack.c.b16 %v3069, %v3060
    %v3448 = vpack.c.b16 %v3070, %v3061
    %v3449 = vpack.c.b16 %v3080, %v3071
    %v3450 = vpack.c.b16 %v3081, %v3072
    %v3451 = vpack.c.b16 %v3082, %v3073
    %v3452 = vpack.c.b16 %v3083, %v3074
    %v3453 = vpack.c.b16 %v3084, %v3075
    %v3454 = vpack.c.b16 %v3085, %v3076
    %v3455 = vpack.c.b16 %v3086, %v3077
    %v3456 = vpack.c.b16 %v3087, %v3078
    %v3457 = vpack.c.b16 %v3088, %v3079
    %v3458 = vpack.c.b16 %v3098, %v3089
    %v3459 = vpack.c.b16 %v3099, %v3090
    %v3460 = vpack.c.b16 %v3100, %v3091
    %v3461 = vpack.c.b16 %v3101, %v3092
    %v3462 = vpack.c.b16 %v3102, %v3093
    %v3463 = vpack.c.b16 %v3103, %v3094
    %v3464 = vpack.c.b16 %v3104, %v3095
    %v3465 = vpack.c.b16 %v3105, %v3096
    %v3466 = vpack.c.b16 %v3106, %v3097
    %3827 = vmatprep.subr.bf16.mxu0 %v3108
    %3828 = vmatpush1.bf16.msra.mxu0 %v3107
    %3829 = vmatprep.subr.bf16.mxu0 %v3117
    %3830 = vmatpush1.bf16.msra.mxu0 %v3116
    %3831 = vmatprep.subr.bf16.mxu0 %v3126
    %3832 = vmatpush1.bf16.msra.mxu0 %v3125
    %3833 = vmatprep.subr.bf16.mxu0 %v3135
    %3834 = vmatpush1.bf16.msra.mxu0 %v3134
    %3835 = vmatprep.subr.bf16.mxu0 %v3144
    %3836 = vmatpush1.bf16.msra.mxu0 %v3143
    %3837 = vmatprep.subr.bf16.mxu0 %v3153
    %3838 = vmatpush1.bf16.msra.mxu0 %v3152
    %3839 = vmatprep.subr.bf16.mxu0 %v3162
    %3840 = vmatpush1.bf16.msra.mxu0 %v3161
    %3841 = vmatprep.subr.bf16.mxu0 %v3171
    %3842 = vmatpush1.bf16.msra.mxu0 %v3170
    %3843 = vmatprep.subr.bf16.mxu0 %v3180
    %3844 = vmatpush1.bf16.msra.mxu0 %v3179
    %3845 = vmatprep.subr.bf16.mxu0 %v3189
    %3846 = vmatpush1.bf16.msra.mxu0 %v3188
    %3847 = vmatprep.subr.bf16.mxu0 %v3198
    %3848 = vmatpush1.bf16.msra.mxu0 %v3197
    %3849 = vmatprep.subr.bf16.mxu0 %v3207
    %3850 = vmatpush1.bf16.msra.mxu0 %v3206
    %3851 = vmatprep.subr.bf16.mxu0 %v3216
    %3852 = vmatpush1.bf16.msra.mxu0 %v3215
    %3853 = vmatprep.subr.bf16.mxu0 %v3225
    %3854 = vmatpush1.bf16.msra.mxu0 %v3224
    %3855 = vmatprep.subr.bf16.mxu0 %v3234
    %3856 = vmatpush1.bf16.msra.mxu0 %v3233
    %3857 = vmatprep.subr.bf16.mxu0 %v3243
    %3858 = vmatpush1.bf16.msra.mxu0 %v3242
    %3859 = vmatprep.mubr.bf16.mxu0 %v1534
    %3860 = vmatmul.mubr.bf16.gmra.mrb[0].mxu0 %v1533
    %v3861 = vpop.f32.mrb[0].mxu0
    %v3862 = vadd.f32 %v1945, %v3861
    %v3863 = vpop.f32.mrb[0].mxu0
    %v3864 = vadd.f32 %v1949, %v3863
    %v3865 = vpop.f32.mrb[0].mxu0
    %v3866 = vadd.f32 %v1945, %v3865
    %v3867 = vpop.f32.mrb[0].mxu0
    %v3868 = vadd.f32 %v1949, %v3867
    %3869 = vdwg.mxu0
    %3870 = vmatprep.subr.bf16.mxu0 %v3252
    %3871 = vmatpush1.bf16.msra.mxu0 %v3251
    %3872 = vmatprep.subr.bf16.mxu0 %v3261
    %3873 = vmatpush1.bf16.msra.mxu0 %v3260
    %3874 = vmatprep.subr.bf16.mxu0 %v3270
    %3875 = vmatpush1.bf16.msra.mxu0 %v3269
    %3876 = vmatprep.subr.bf16.mxu0 %v3279
    %3877 = vmatpush1.bf16.msra.mxu0 %v3278
    %3878 = vmatprep.subr.bf16.mxu0 %v3288
    %3879 = vmatpush1.bf16.msra.mxu0 %v3287
    %3880 = vmatprep.subr.bf16.mxu0 %v3297
    %3881 = vmatpush1.bf16.msra.mxu0 %v3296
    %3882 = vmatprep.subr.bf16.mxu0 %v3306
    %3883 = vmatpush1.bf16.msra.mxu0 %v3305
    %3884 = vmatprep.subr.bf16.mxu0 %v3315
    %3885 = vmatpush1.bf16.msra.mxu0 %v3314
    %3886 = vmatprep.subr.bf16.mxu0 %v3324
    %3887 = vmatpush1.bf16.msra.mxu0 %v3323
    %3888 = vmatprep.subr.bf16.mxu0 %v3333
    %3889 = vmatpush1.bf16.msra.mxu0 %v3332
    %3890 = vmatprep.subr.bf16.mxu0 %v3342
    %3891 = vmatpush1.bf16.msra.mxu0 %v3341
    %3892 = vmatprep.subr.bf16.mxu0 %v3351
    %3893 = vmatpush1.bf16.msra.mxu0 %v3350
    %3894 = vmatprep.subr.bf16.mxu0 %v3360
    %3895 = vmatpush1.bf16.msra.mxu0 %v3359
    %3896 = vmatprep.subr.bf16.mxu0 %v3369
    %3897 = vmatpush1.bf16.msra.mxu0 %v3368
    %3898 = vmatprep.subr.bf16.mxu0 %v3378
    %3899 = vmatpush1.bf16.msra.mxu0 %v3377
    %3900 = vmatprep.subr.bf16.mxu0 %v3387
    %3901 = vmatpush1.bf16.msra.mxu0 %v3386
    %3902 = vmatprep.mubr.bf16.mxu0 %v1536
    %3903 = vmatmul.mubr.bf16.gmra.mrb[0].mxu0 %v1535
    %v3904 = vpop.f32.mrb[0].mxu0
    %v3905 = vadd.f32 %v3862, %v3904
    %v3906 = vpop.f32.mrb[0].mxu0
    %v3907 = vadd.f32 %v3864, %v3906
    %v3908 = vpop.f32.mrb[0].mxu0
    %v3909 = vadd.f32 %v3866, %v3908
    %v3910 = vpop.f32.mrb[0].mxu0
    %v3911 = vadd.f32 %v3868, %v3910
    %3912 = vdwg.mxu0
    %3913 = vmatprep.subr.bf16.mxu0 %v3396
    %3914 = vmatpush1.bf16.msra.mxu0 %v3395
    %3915 = vmatprep.subr.bf16.mxu0 %v3405
    %3916 = vmatpush1.bf16.msra.mxu0 %v3404
    %3917 = vmatprep.subr.bf16.mxu0 %v3414
    %3918 = vmatpush1.bf16.msra.mxu0 %v3413
    %3919 = vmatprep.subr.bf16.mxu0 %v3423
    %3920 = vmatpush1.bf16.msra.mxu0 %v3422
    %3921 = vmatprep.subr.bf16.mxu0 %v3432
    %3922 = vmatpush1.bf16.msra.mxu0 %v3431
    %3923 = vmatprep.subr.bf16.mxu0 %v3441
    %3924 = vmatpush1.bf16.msra.mxu0 %v3440
    %3925 = vmatprep.subr.bf16.mxu0 %v3450
    %3926 = vmatpush1.bf16.msra.mxu0 %v3449
    %3927 = vmatprep.subr.bf16.mxu0 %v3459
    %3928 = vmatpush1.bf16.msra.mxu0 %v3458
    %3929 = vmatprep.subr.bf16.mxu0 0
    %3930 = vmatpush1.bf16.msra.mxu0 0
    %3931 = vmatprep.subr.bf16.mxu0 0
    %3932 = vmatpush1.bf16.msra.mxu0 0
    %3933 = vmatprep.subr.bf16.mxu0 0
    %3934 = vmatpush1.bf16.msra.mxu0 0
    %3935 = vmatprep.subr.bf16.mxu0 0
    %3936 = vmatpush1.bf16.msra.mxu0 0
    %3937 = vmatprep.subr.bf16.mxu0 0
    %3938 = vmatpush1.bf16.msra.mxu0 0
    %3939 = vmatprep.subr.bf16.mxu0 0
    %3940 = vmatpush1.bf16.msra.mxu0 0
    %3941 = vmatprep.subr.bf16.mxu0 0
    %3942 = vmatpush1.bf16.msra.mxu0 0
    %3943 = vmatprep.subr.bf16.mxu0 0
    %3944 = vmatpush1.bf16.msra.mxu0 0
    %3945 = vmatprep.mubr.bf16.mxu0 0
    %3946 = vmatmul.mubr.bf16.gmra.mrb[0].mxu0 %v1537
    %v3947 = vpop.f32.mrb[0].mxu0
    %v3948 = vadd.f32 %v3905, %v3947
    %v3949 = vpop.f32.mrb[0].mxu0
    %v3950 = vadd.f32 %v3907, %v3949
    %v3951 = vpop.f32.mrb[0].mxu0
    %v3952 = vadd.f32 %v3909, %v3951
    %v3953 = vpop.f32.mrb[0].mxu0
    %v3954 = vadd.f32 %v3911, %v3953
    %3955 = vdwg.mxu0
    %3956 = vmatprep.subr.bf16.mxu0 %v3110
    %3957 = vmatpush1.bf16.msra.mxu0 %v3109
    %3958 = vmatprep.subr.bf16.mxu0 %v3119
    %3959 = vmatpush1.bf16.msra.mxu0 %v3118
    %3960 = vmatprep.subr.bf16.mxu0 %v3128
    %3961 = vmatpush1.bf16.msra.mxu0 %v3127
    %3962 = vmatprep.subr.bf16.mxu0 %v3137
    %3963 = vmatpush1.bf16.msra.mxu0 %v3136
    %3964 = vmatprep.subr.bf16.mxu0 %v3146
    %3965 = vmatpush1.bf16.msra.mxu0 %v3145
    %3966 = vmatprep.subr.bf16.mxu0 %v3155
    %3967 = vmatpush1.bf16.msra.mxu0 %v3154
    %3968 = vmatprep.subr.bf16.mxu0 %v3164
    %3969 = vmatpush1.bf16.msra.mxu0 %v3163
    %3970 = vmatprep.subr.bf16.mxu0 %v3173
    %3971 = vmatpush1.bf16.msra.mxu0 %v3172
    %3972 = vmatprep.subr.bf16.mxu0 %v3182
    %3973 = vmatpush1.bf16.msra.mxu0 %v3181
    %3974 = vmatprep.subr.bf16.mxu0 %v3191
    %3975 = vmatpush1.bf16.msra.mxu0 %v3190
    %3976 = vmatprep.subr.bf16.mxu0 %v3200
    %3977 = vmatpush1.bf16.msra.mxu0 %v3199
    %3978 = vmatprep.subr.bf16.mxu0 %v3209
    %3979 = vmatpush1.bf16.msra.mxu0 %v3208
    %3980 = vmatprep.subr.bf16.mxu0 %v3218
    %3981 = vmatpush1.bf16.msra.mxu0 %v3217
    %3982 = vmatprep.subr.bf16.mxu0 %v3227
    %3983 = vmatpush1.bf16.msra.mxu0 %v3226
    %3984 = vmatprep.subr.bf16.mxu0 %v3236
    %3985 = vmatpush1.bf16.msra.mxu0 %v3235
    %3986 = vmatprep.subr.bf16.mxu0 %v3245
    %3987 = vmatpush1.bf16.msra.mxu0 %v3244
    %3988 = vmatprep.mubr.bf16.mxu0 %v1534
    %3989 = vmatmul.mubr.bf16.gmra.mrb[0].mxu0 %v1533
    %v3990 = vpop.f32.mrb[0].mxu0
    %v3991 = vadd.f32 %v1953, %v3990
    %v3992 = vpop.f32.mrb[0].mxu0
    %v3993 = vadd.f32 %v1957, %v3992
    %v3994 = vpop.f32.mrb[0].mxu0
    %v3995 = vadd.f32 %v1953, %v3994
    %v3996 = vpop.f32.mrb[0].mxu0
    %v3997 = vadd.f32 %v1957, %v3996
    %3998 = vdwg.mxu0
    %3999 = vmatprep.subr.bf16.mxu0 %v3254
    %4000 = vmatpush1.bf16.msra.mxu0 %v3253
    %4001 = vmatprep.subr.bf16.mxu0 %v3263
    %4002 = vmatpush1.bf16.msra.mxu0 %v3262
    %4003 = vmatprep.subr.bf16.mxu0 %v3272
    %4004 = vmatpush1.bf16.msra.mxu0 %v3271
    %4005 = vmatprep.subr.bf16.mxu0 %v3281
    %4006 = vmatpush1.bf16.msra.mxu0 %v3280
    %4007 = vmatprep.subr.bf16.mxu0 %v3290
    %4008 = vmatpush1.bf16.msra.mxu0 %v3289
    %4009 = vmatprep.subr.bf16.mxu0 %v3299
    %4010 = vmatpush1.bf16.msra.mxu0 %v3298
    %4011 = vmatprep.subr.bf16.mxu0 %v3308
    %4012 = vmatpush1.bf16.msra.mxu0 %v3307
    %4013 = vmatprep.subr.bf16.mxu0 %v3317
    %4014 = vmatpush1.bf16.msra.mxu0 %v3316
    %4015 = vmatprep.subr.bf16.mxu0 %v3326
    %4016 = vmatpush1.bf16.msra.mxu0 %v3325
    %4017 = vmatprep.subr.bf16.mxu0 %v3335
    %4018 = vmatpush1.bf16.msra.mxu0 %v3334
    %4019 = vmatprep.subr.bf16.mxu0 %v3344
    %4020 = vmatpush1.bf16.msra.mxu0 %v3343
    %4021 = vmatprep.subr.bf16.mxu0 %v3353
    %4022 = vmatpush1.bf16.msra.mxu0 %v3352
    %4023 = vmatprep.subr.bf16.mxu0 %v3362
    %4024 = vmatpush1.bf16.msra.mxu0 %v3361
    %4025 = vmatprep.subr.bf16.mxu0 %v3371
    %4026 = vmatpush1.bf16.msra.mxu0 %v3370
    %4027 = vmatprep.subr.bf16.mxu0 %v3380
    %4028 = vmatpush1.bf16.msra.mxu0 %v3379
    %4029 = vmatprep.subr.bf16.mxu0 %v3389
    %4030 = vmatpush1.bf16.msra.mxu0 %v3388
    %4031 = vmatprep.mubr.bf16.mxu0 %v1536
    %4032 = vmatmul.mubr.bf16.gmra.mrb[0].mxu0 %v1535
    %v4033 = vpop.f32.mrb[0].mxu0
    %v4034 = vadd.f32 %v3991, %v4033
    %v4035 = vpop.f32.mrb[0].mxu0
    %v4036 = vadd.f32 %v3993, %v4035
    %v4037 = vpop.f32.mrb[0].mxu0
    %v4038 = vadd.f32 %v3995, %v4037
    %v4039 = vpop.f32.mrb[0].mxu0
    %v4040 = vadd.f32 %v3997, %v4039
    %4041 = vdwg.mxu0
    %4042 = vmatprep.subr.bf16.mxu0 %v3398
    %4043 = vmatpush1.bf16.msra.mxu0 %v3397
    %4044 = vmatprep.subr.bf16.mxu0 %v3407
    %4045 = vmatpush1.bf16.msra.mxu0 %v3406
    %4046 = vmatprep.subr.bf16.mxu0 %v3416
    %4047 = vmatpush1.bf16.msra.mxu0 %v3415
    %4048 = vmatprep.subr.bf16.mxu0 %v3425
    %4049 = vmatpush1.bf16.msra.mxu0 %v3424
    %4050 = vmatprep.subr.bf16.mxu0 %v3434
    %4051 = vmatpush1.bf16.msra.mxu0 %v3433
    %4052 = vmatprep.subr.bf16.mxu0 %v3443
    %4053 = vmatpush1.bf16.msra.mxu0 %v3442
    %4054 = vmatprep.subr.bf16.mxu0 %v3452
    %4055 = vmatpush1.bf16.msra.mxu0 %v3451
    %4056 = vmatprep.subr.bf16.mxu0 %v3461
    %4057 = vmatpush1.bf16.msra.mxu0 %v3460
    %4058 = vmatprep.subr.bf16.mxu0 0
    %4059 = vmatpush1.bf16.msra.mxu0 0
    %4060 = vmatprep.subr.bf16.mxu0 0
    %4061 = vmatpush1.bf16.msra.mxu0 0
    %4062 = vmatprep.subr.bf16.mxu0 0
    %4063 = vmatpush1.bf16.msra.mxu0 0
    %4064 = vmatprep.subr.bf16.mxu0 0
    %4065 = vmatpush1.bf16.msra.mxu0 0
    %4066 = vmatprep.subr.bf16.mxu0 0
    %4067 = vmatpush1.bf16.msra.mxu0 0
    %4068 = vmatprep.subr.bf16.mxu0 0
    %4069 = vmatpush1.bf16.msra.mxu0 0
    %4070 = vmatprep.subr.bf16.mxu0 0
    %4071 = vmatpush1.bf16.msra.mxu0 0
    %4072 = vmatprep.subr.bf16.mxu0 0
    %4073 = vmatpush1.bf16.msra.mxu0 0
    %4074 = vmatprep.mubr.bf16.mxu0 0
    %4075 = vmatmul.mubr.bf16.gmra.mrb[0].mxu0 %v1537
    %v4076 = vpop.f32.mrb[0].mxu0
    %v4077 = vadd.f32 %v4034, %v4076
    %v4078 = vpop.f32.mrb[0].mxu0
    %v4079 = vadd.f32 %v4036, %v4078
    %v4080 = vpop.f32.mrb[0].mxu0
    %v4081 = vadd.f32 %v4038, %v4080
    %v4082 = vpop.f32.mrb[0].mxu0
    %v4083 = vadd.f32 %v4040, %v4082
    %4084 = vdwg.mxu0
    %4085 = vmatprep.subr.bf16.mxu0 %v3112
    %4086 = vmatpush1.bf16.msra.mxu0 %v3111
    %4087 = vmatprep.subr.bf16.mxu0 %v3121
    %4088 = vmatpush1.bf16.msra.mxu0 %v3120
    %4089 = vmatprep.subr.bf16.mxu0 %v3130
    %4090 = vmatpush1.bf16.msra.mxu0 %v3129
    %4091 = vmatprep.subr.bf16.mxu0 %v3139
    %4092 = vmatpush1.bf16.msra.mxu0 %v3138
    %4093 = vmatprep.subr.bf16.mxu0 %v3148
    %4094 = vmatpush1.bf16.msra.mxu0 %v3147
    %4095 = vmatprep.subr.bf16.mxu0 %v3157
    %4096 = vmatpush1.bf16.msra.mxu0 %v3156
    %4097 = vmatprep.subr.bf16.mxu0 %v3166
    %4098 = vmatpush1.bf16.msra.mxu0 %v3165
    %4099 = vmatprep.subr.bf16.mxu0 %v3175
    %4100 = vmatpush1.bf16.msra.mxu0 %v3174
    %4101 = vmatprep.subr.bf16.mxu0 %v3184
    %4102 = vmatpush1.bf16.msra.mxu0 %v3183
    %4103 = vmatprep.subr.bf16.mxu0 %v3193
    %4104 = vmatpush1.bf16.msra.mxu0 %v3192
    %4105 = vmatprep.subr.bf16.mxu0 %v3202
    %4106 = vmatpush1.bf16.msra.mxu0 %v3201
    %4107 = vmatprep.subr.bf16.mxu0 %v3211
    %4108 = vmatpush1.bf16.msra.mxu0 %v3210
    %4109 = vmatprep.subr.bf16.mxu0 %v3220
    %4110 = vmatpush1.bf16.msra.mxu0 %v3219
    %4111 = vmatprep.subr.bf16.mxu0 %v3229
    %4112 = vmatpush1.bf16.msra.mxu0 %v3228
    %4113 = vmatprep.subr.bf16.mxu0 %v3238
    %4114 = vmatpush1.bf16.msra.mxu0 %v3237
    %4115 = vmatprep.subr.bf16.mxu0 %v3247
    %4116 = vmatpush1.bf16.msra.mxu0 %v3246
    %4117 = vmatprep.mubr.bf16.mxu0 %v1534
    %4118 = vmatmul.mubr.bf16.gmra.mrb[0].mxu0 %v1533
    %v4119 = vpop.f32.mrb[0].mxu0
    %v4120 = vadd.f32 %v1961, %v4119
    %v4121 = vpop.f32.mrb[0].mxu0
    %v4122 = vadd.f32 %v1965, %v4121
    %v4123 = vpop.f32.mrb[0].mxu0
    %v4124 = vadd.f32 %v1961, %v4123
    %v4125 = vpop.f32.mrb[0].mxu0
    %v4126 = vadd.f32 %v1965, %v4125
    %4127 = vdwg.mxu0
    %4128 = vmatprep.subr.bf16.mxu0 %v3256
    %4129 = vmatpush1.bf16.msra.mxu0 %v3255
    %4130 = vmatprep.subr.bf16.mxu0 %v3265
    %4131 = vmatpush1.bf16.msra.mxu0 %v3264
    %4132 = vmatprep.subr.bf16.mxu0 %v3274
    %4133 = vmatpush1.bf16.msra.mxu0 %v3273
    %4134 = vmatprep.subr.bf16.mxu0 %v3283
    %4135 = vmatpush1.bf16.msra.mxu0 %v3282
    %4136 = vmatprep.subr.bf16.mxu0 %v3292
    %4137 = vmatpush1.bf16.msra.mxu0 %v3291
    %4138 = vmatprep.subr.bf16.mxu0 %v3301
    %4139 = vmatpush1.bf16.msra.mxu0 %v3300
    %4140 = vmatprep.subr.bf16.mxu0 %v3310
    %4141 = vmatpush1.bf16.msra.mxu0 %v3309
    %4142 = vmatprep.subr.bf16.mxu0 %v3319
    %4143 = vmatpush1.bf16.msra.mxu0 %v3318
    %4144 = vmatprep.subr.bf16.mxu0 %v3328
    %4145 = vmatpush1.bf16.msra.mxu0 %v3327
    %4146 = vmatprep.subr.bf16.mxu0 %v3337
    %4147 = vmatpush1.bf16.msra.mxu0 %v3336
    %4148 = vmatprep.subr.bf16.mxu0 %v3346
    %4149 = vmatpush1.bf16.msra.mxu0 %v3345
    %4150 = vmatprep.subr.bf16.mxu0 %v3355
    %4151 = vmatpush1.bf16.msra.mxu0 %v3354
    %4152 = vmatprep.subr.bf16.mxu0 %v3364
    %4153 = vmatpush1.bf16.msra.mxu0 %v3363
    %4154 = vmatprep.subr.bf16.mxu0 %v3373
    %4155 = vmatpush1.bf16.msra.mxu0 %v3372
    %4156 = vmatprep.subr.bf16.mxu0 %v3382
    %4157 = vmatpush1.bf16.msra.mxu0 %v3381
    %4158 = vmatprep.subr.bf16.mxu0 %v3391
    %4159 = vmatpush1.bf16.msra.mxu0 %v3390
    %4160 = vmatprep.mubr.bf16.mxu0 %v1536
    %4161 = vmatmul.mubr.bf16.gmra.mrb[0].mxu0 %v1535
    %v4162 = vpop.f32.mrb[0].mxu0
    %v4163 = vadd.f32 %v4120, %v4162
    %v4164 = vpop.f32.mrb[0].mxu0
    %v4165 = vadd.f32 %v4122, %v4164
    %v4166 = vpop.f32.mrb[0].mxu0
    %v4167 = vadd.f32 %v4124, %v4166
    %v4168 = vpop.f32.mrb[0].mxu0
    %v4169 = vadd.f32 %v4126, %v4168
    %4170 = vdwg.mxu0
    %4171 = vmatprep.subr.bf16.mxu0 %v3400
    %4172 = vmatpush1.bf16.msra.mxu0 %v3399
    %4173 = vmatprep.subr.bf16.mxu0 %v3409
    %4174 = vmatpush1.bf16.msra.mxu0 %v3408
    %4175 = vmatprep.subr.bf16.mxu0 %v3418
    %4176 = vmatpush1.bf16.msra.mxu0 %v3417
    %4177 = vmatprep.subr.bf16.mxu0 %v3427
    %4178 = vmatpush1.bf16.msra.mxu0 %v3426
    %4179 = vmatprep.subr.bf16.mxu0 %v3436
    %4180 = vmatpush1.bf16.msra.mxu0 %v3435
    %4181 = vmatprep.subr.bf16.mxu0 %v3445
    %4182 = vmatpush1.bf16.msra.mxu0 %v3444
    %4183 = vmatprep.subr.bf16.mxu0 %v3454
    %4184 = vmatpush1.bf16.msra.mxu0 %v3453
    %4185 = vmatprep.subr.bf16.mxu0 %v3463
    %4186 = vmatpush1.bf16.msra.mxu0 %v3462
    %4187 = vmatprep.subr.bf16.mxu0 0
    %4188 = vmatpush1.bf16.msra.mxu0 0
    %4189 = vmatprep.subr.bf16.mxu0 0
    %4190 = vmatpush1.bf16.msra.mxu0 0
    %4191 = vmatprep.subr.bf16.mxu0 0
    %4192 = vmatpush1.bf16.msra.mxu0 0
    %4193 = vmatprep.subr.bf16.mxu0 0
    %4194 = vmatpush1.bf16.msra.mxu0 0
    %4195 = vmatprep.subr.bf16.mxu0 0
    %4196 = vmatpush1.bf16.msra.mxu0 0
    %4197 = vmatprep.subr.bf16.mxu0 0
    %4198 = vmatpush1.bf16.msra.mxu0 0
    %4199 = vmatprep.subr.bf16.mxu0 0
    %4200 = vmatpush1.bf16.msra.mxu0 0
    %4201 = vmatprep.subr.bf16.mxu0 0
    %4202 = vmatpush1.bf16.msra.mxu0 0
    %4203 = vmatprep.mubr.bf16.mxu0 0
    %4204 = vmatmul.mubr.bf16.gmra.mrb[0].mxu0 %v1537
    %v4205 = vpop.f32.mrb[0].mxu0
    %v4206 = vadd.f32 %v4163, %v4205
    %v4207 = vpop.f32.mrb[0].mxu0
    %v4208 = vadd.f32 %v4165, %v4207
    %v4209 = vpop.f32.mrb[0].mxu0
    %v4210 = vadd.f32 %v4167, %v4209
    %v4211 = vpop.f32.mrb[0].mxu0
    %v4212 = vadd.f32 %v4169, %v4211
    %4213 = vdwg.mxu0
    %4214 = vmatprep.subr.bf16.mxu0 %v3114
    %4215 = vmatpush1.bf16.msra.mxu0 %v3113
    %4216 = vmatprep.subr.bf16.mxu0 %v3123
    %4217 = vmatpush1.bf16.msra.mxu0 %v3122
    %4218 = vmatprep.subr.bf16.mxu0 %v3132
    %4219 = vmatpush1.bf16.msra.mxu0 %v3131
    %4220 = vmatprep.subr.bf16.mxu0 %v3141
    %4221 = vmatpush1.bf16.msra.mxu0 %v3140
    %4222 = vmatprep.subr.bf16.mxu0 %v3150
    %4223 = vmatpush1.bf16.msra.mxu0 %v3149
    %4224 = vmatprep.subr.bf16.mxu0 %v3159
    %4225 = vmatpush1.bf16.msra.mxu0 %v3158
    %4226 = vmatprep.subr.bf16.mxu0 %v3168
    %4227 = vmatpush1.bf16.msra.mxu0 %v3167
    %4228 = vmatprep.subr.bf16.mxu0 %v3177
    %4229 = vmatpush1.bf16.msra.mxu0 %v3176
    %4230 = vmatprep.subr.bf16.mxu0 %v3186
    %4231 = vmatpush1.bf16.msra.mxu0 %v3185
    %4232 = vmatprep.subr.bf16.mxu0 %v3195
    %4233 = vmatpush1.bf16.msra.mxu0 %v3194
    %4234 = vmatprep.subr.bf16.mxu0 %v3204
    %4235 = vmatpush1.bf16.msra.mxu0 %v3203
    %4236 = vmatprep.subr.bf16.mxu0 %v3213
    %4237 = vmatpush1.bf16.msra.mxu0 %v3212
    %4238 = vmatprep.subr.bf16.mxu0 %v3222
    %4239 = vmatpush1.bf16.msra.mxu0 %v3221
    %4240 = vmatprep.subr.bf16.mxu0 %v3231
    %4241 = vmatpush1.bf16.msra.mxu0 %v3230
    %4242 = vmatprep.subr.bf16.mxu0 %v3240
    %4243 = vmatpush1.bf16.msra.mxu0 %v3239
    %4244 = vmatprep.subr.bf16.mxu0 %v3249
    %4245 = vmatpush1.bf16.msra.mxu0 %v3248
    %4246 = vmatprep.mubr.bf16.mxu0 %v1534
    %4247 = vmatmul.mubr.bf16.gmra.mrb[0].mxu0 %v1533
    %v4248 = vpop.f32.mrb[0].mxu0
    %v4249 = vadd.f32 %v1969, %v4248
    %v4250 = vpop.f32.mrb[0].mxu0
    %v4251 = vadd.f32 %v1973, %v4250
    %v4252 = vpop.f32.mrb[0].mxu0
    %v4253 = vadd.f32 %v1969, %v4252
    %v4254 = vpop.f32.mrb[0].mxu0
    %v4255 = vadd.f32 %v1973, %v4254
    %4256 = vdwg.mxu0
    %4257 = vmatprep.subr.bf16.mxu0 %v3258
    %4258 = vmatpush1.bf16.msra.mxu0 %v3257
    %4259 = vmatprep.subr.bf16.mxu0 %v3267
    %4260 = vmatpush1.bf16.msra.mxu0 %v3266
    %4261 = vmatprep.subr.bf16.mxu0 %v3276
    %4262 = vmatpush1.bf16.msra.mxu0 %v3275
    %4263 = vmatprep.subr.bf16.mxu0 %v3285
    %4264 = vmatpush1.bf16.msra.mxu0 %v3284
    %4265 = vmatprep.subr.bf16.mxu0 %v3294
    %4266 = vmatpush1.bf16.msra.mxu0 %v3293
    %4267 = vmatprep.subr.bf16.mxu0 %v3303
    %4268 = vmatpush1.bf16.msra.mxu0 %v3302
    %4269 = vmatprep.subr.bf16.mxu0 %v3312
    %4270 = vmatpush1.bf16.msra.mxu0 %v3311
    %4271 = vmatprep.subr.bf16.mxu0 %v3321
    %4272 = vmatpush1.bf16.msra.mxu0 %v3320
    %4273 = vmatprep.subr.bf16.mxu0 %v3330
    %4274 = vmatpush1.bf16.msra.mxu0 %v3329
    %4275 = vmatprep.subr.bf16.mxu0 %v3339
    %4276 = vmatpush1.bf16.msra.mxu0 %v3338
    %4277 = vmatprep.subr.bf16.mxu0 %v3348
    %4278 = vmatpush1.bf16.msra.mxu0 %v3347
    %4279 = vmatprep.subr.bf16.mxu0 %v3357
    %4280 = vmatpush1.bf16.msra.mxu0 %v3356
    %4281 = vmatprep.subr.bf16.mxu0 %v3366
    %4282 = vmatpush1.bf16.msra.mxu0 %v3365
    %4283 = vmatprep.subr.bf16.mxu0 %v3375
    %4284 = vmatpush1.bf16.msra.mxu0 %v3374
    %4285 = vmatprep.subr.bf16.mxu0 %v3384
    %4286 = vmatpush1.bf16.msra.mxu0 %v3383
    %4287 = vmatprep.subr.bf16.mxu0 %v3393
    %4288 = vmatpush1.bf16.msra.mxu0 %v3392
    %4289 = vmatprep.mubr.bf16.mxu0 %v1536
    %4290 = vmatmul.mubr.bf16.gmra.mrb[0].mxu0 %v1535
    %v4291 = vpop.f32.mrb[0].mxu0
    %v4292 = vadd.f32 %v4249, %v4291
    %v4293 = vpop.f32.mrb[0].mxu0
    %v4294 = vadd.f32 %v4251, %v4293
    %v4295 = vpop.f32.mrb[0].mxu0
    %v4296 = vadd.f32 %v4253, %v4295
    %v4297 = vpop.f32.mrb[0].mxu0
    %v4298 = vadd.f32 %v4255, %v4297
    %4299 = vdwg.mxu0
    %4300 = vmatprep.subr.bf16.mxu0 %v3402
    %4301 = vmatpush1.bf16.msra.mxu0 %v3401
    %4302 = vmatprep.subr.bf16.mxu0 %v3411
    %4303 = vmatpush1.bf16.msra.mxu0 %v3410
    %4304 = vmatprep.subr.bf16.mxu0 %v3420
    %4305 = vmatpush1.bf16.msra.mxu0 %v3419
    %4306 = vmatprep.subr.bf16.mxu0 %v3429
    %4307 = vmatpush1.bf16.msra.mxu0 %v3428
    %4308 = vmatprep.subr.bf16.mxu0 %v3438
    %4309 = vmatpush1.bf16.msra.mxu0 %v3437
    %4310 = vmatprep.subr.bf16.mxu0 %v3447
    %4311 = vmatpush1.bf16.msra.mxu0 %v3446
    %4312 = vmatprep.subr.bf16.mxu0 %v3456
    %4313 = vmatpush1.bf16.msra.mxu0 %v3455
    %4314 = vmatprep.subr.bf16.mxu0 %v3465
    %4315 = vmatpush1.bf16.msra.mxu0 %v3464
    %4316 = vmatprep.subr.bf16.mxu0 0
    %4317 = vmatpush1.bf16.msra.mxu0 0
    %4318 = vmatprep.subr.bf16.mxu0 0
    %4319 = vmatpush1.bf16.msra.mxu0 0
    %4320 = vmatprep.subr.bf16.mxu0 0
    %4321 = vmatpush1.bf16.msra.mxu0 0
    %4322 = vmatprep.subr.bf16.mxu0 0
    %4323 = vmatpush1.bf16.msra.mxu0 0
    %4324 = vmatprep.subr.bf16.mxu0 0
    %4325 = vmatpush1.bf16.msra.mxu0 0
    %4326 = vmatprep.subr.bf16.mxu0 0
    %4327 = vmatpush1.bf16.msra.mxu0 0
    %4328 = vmatprep.subr.bf16.mxu0 0
    %4329 = vmatpush1.bf16.msra.mxu0 0
    %4330 = vmatprep.subr.bf16.mxu0 0
    %4331 = vmatpush1.bf16.msra.mxu0 0
    %4332 = vmatprep.mubr.bf16.mxu0 0
    %4333 = vmatmul.mubr.bf16.gmra.mrb[0].mxu0 %v1537
    %v4334 = vpop.f32.mrb[0].mxu0
    %v4335 = vadd.f32 %v4292, %v4334
    %v4336 = vpop.f32.mrb[0].mxu0
    %v4337 = vadd.f32 %v4294, %v4336
    %v4338 = vpop.f32.mrb[0].mxu0
    %v4339 = vadd.f32 %v4296, %v4338
    %v4340 = vpop.f32.mrb[0].mxu0
    %v4341 = vadd.f32 %v4298, %v4340
    %4342 = vdwg.mxu0
    %4343 = vmatprep.subr.bf16.mxu0 0
    %4344 = vmatpush1.bf16.msra.mxu0 %v3115
    %4345 = vmatprep.subr.bf16.mxu0 0
    %4346 = vmatpush1.bf16.msra.mxu0 %v3124
    %4347 = vmatprep.subr.bf16.mxu0 0
    %4348 = vmatpush1.bf16.msra.mxu0 %v3133
    %4349 = vmatprep.subr.bf16.mxu0 0
    %4350 = vmatpush1.bf16.msra.mxu0 %v3142
    %4351 = vmatprep.subr.bf16.mxu0 0
    %4352 = vmatpush1.bf16.msra.mxu0 %v3151
    %4353 = vmatprep.subr.bf16.mxu0 0
    %4354 = vmatpush1.bf16.msra.mxu0 %v3160
    %4355 = vmatprep.subr.bf16.mxu0 0
    %4356 = vmatpush1.bf16.msra.mxu0 %v3169
    %4357 = vmatprep.subr.bf16.mxu0 0
    %4358 = vmatpush1.bf16.msra.mxu0 %v3178
    %4359 = vmatprep.subr.bf16.mxu0 0
    %4360 = vmatpush1.bf16.msra.mxu0 %v3187
    %4361 = vmatprep.subr.bf16.mxu0 0
    %4362 = vmatpush1.bf16.msra.mxu0 %v3196
    %4363 = vmatprep.subr.bf16.mxu0 0
    %4364 = vmatpush1.bf16.msra.mxu0 %v3205
    %4365 = vmatprep.subr.bf16.mxu0 0
    %4366 = vmatpush1.bf16.msra.mxu0 %v3214
    %4367 = vmatprep.subr.bf16.mxu0 0
    %4368 = vmatpush1.bf16.msra.mxu0 %v3223
    %4369 = vmatprep.subr.bf16.mxu0 0
    %4370 = vmatpush1.bf16.msra.mxu0 %v3232
    %4371 = vmatprep.subr.bf16.mxu0 0
    %4372 = vmatpush1.bf16.msra.mxu0 %v3241
    %4373 = vmatprep.subr.bf16.mxu0 0
    %4374 = vmatpush1.bf16.msra.mxu0 %v3250
    %4375 = vmatprep.mubr.bf16.mxu0 %v1534
    %4376 = vmatmul.mubr.bf16.gmra.mrb[0].mxu0 %v1533
    %v4377 = vpop.f32.mrb[0].mxu0
    %v4378 = vadd.f32 %v1977, %v4377
    %v4379 = vpop.f32.mrb[0].mxu0
    %v4380 = vpop.f32.mrb[0].mxu0
    %v4381 = vadd.f32 %v1977, %v4380
    %v4382 = vpop.f32.mrb[0].mxu0
    %4383 = vdwg.mxu0
    %4384 = vmatprep.subr.bf16.mxu0 0
    %4385 = vmatpush1.bf16.msra.mxu0 %v3259
    %4386 = vmatprep.subr.bf16.mxu0 0
    %4387 = vmatpush1.bf16.msra.mxu0 %v3268
    %4388 = vmatprep.subr.bf16.mxu0 0
    %4389 = vmatpush1.bf16.msra.mxu0 %v3277
    %4390 = vmatprep.subr.bf16.mxu0 0
    %4391 = vmatpush1.bf16.msra.mxu0 %v3286
    %4392 = vmatprep.subr.bf16.mxu0 0
    %4393 = vmatpush1.bf16.msra.mxu0 %v3295
    %4394 = vmatprep.subr.bf16.mxu0 0
    %4395 = vmatpush1.bf16.msra.mxu0 %v3304
    %4396 = vmatprep.subr.bf16.mxu0 0
    %4397 = vmatpush1.bf16.msra.mxu0 %v3313
    %4398 = vmatprep.subr.bf16.mxu0 0
    %4399 = vmatpush1.bf16.msra.mxu0 %v3322
    %4400 = vmatprep.subr.bf16.mxu0 0
    %4401 = vmatpush1.bf16.msra.mxu0 %v3331
    %4402 = vmatprep.subr.bf16.mxu0 0
    %4403 = vmatpush1.bf16.msra.mxu0 %v3340
    %4404 = vmatprep.subr.bf16.mxu0 0
    %4405 = vmatpush1.bf16.msra.mxu0 %v3349
    %4406 = vmatprep.subr.bf16.mxu0 0
    %4407 = vmatpush1.bf16.msra.mxu0 %v3358
    %4408 = vmatprep.subr.bf16.mxu0 0
    %4409 = vmatpush1.bf16.msra.mxu0 %v3367
    %4410 = vmatprep.subr.bf16.mxu0 0
    %4411 = vmatpush1.bf16.msra.mxu0 %v3376
    %4412 = vmatprep.subr.bf16.mxu0 0
    %4413 = vmatpush1.bf16.msra.mxu0 %v3385
    %4414 = vmatprep.subr.bf16.mxu0 0
    %4415 = vmatpush1.bf16.msra.mxu0 %v3394
    %4416 = vmatprep.mubr.bf16.mxu0 %v1536
    %4417 = vmatmul.mubr.bf16.gmra.mrb[0].mxu0 %v1535
    %v4418 = vpop.f32.mrb[0].mxu0
    %v4419 = vadd.f32 %v4378, %v4418
    %v4420 = vpop.f32.mrb[0].mxu0
    %v4421 = vpop.f32.mrb[0].mxu0
    %v4422 = vadd.f32 %v4381, %v4421
    %v4423 = vpop.f32.mrb[0].mxu0
    %4424 = vdwg.mxu0
    %4425 = vmatprep.subr.bf16.mxu0 0
    %4426 = vmatpush1.bf16.msra.mxu0 %v3403
    %4427 = vmatprep.subr.bf16.mxu0 0
    %4428 = vmatpush1.bf16.msra.mxu0 %v3412
    %4429 = vmatprep.subr.bf16.mxu0 0
    %4430 = vmatpush1.bf16.msra.mxu0 %v3421
    %4431 = vmatprep.subr.bf16.mxu0 0
    %4432 = vmatpush1.bf16.msra.mxu0 %v3430
    %4433 = vmatprep.subr.bf16.mxu0 0
    %4434 = vmatpush1.bf16.msra.mxu0 %v3439
    %4435 = vmatprep.subr.bf16.mxu0 0
    %4436 = vmatpush1.bf16.msra.mxu0 %v3448
    %4437 = vmatprep.subr.bf16.mxu0 0
    %4438 = vmatpush1.bf16.msra.mxu0 %v3457
    %4439 = vmatprep.subr.bf16.mxu0 0
    %4440 = vmatpush1.bf16.msra.mxu0 %v3466
    %4441 = vmatprep.subr.bf16.mxu0 0
    %4442 = vmatpush1.bf16.msra.mxu0 0
    %4443 = vmatprep.subr.bf16.mxu0 0
    %4444 = vmatpush1.bf16.msra.mxu0 0
    %4445 = vmatprep.subr.bf16.mxu0 0
    %4446 = vmatpush1.bf16.msra.mxu0 0
    %4447 = vmatprep.subr.bf16.mxu0 0
    %4448 = vmatpush1.bf16.msra.mxu0 0
    %4449 = vmatprep.subr.bf16.mxu0 0
    %4450 = vmatpush1.bf16.msra.mxu0 0
    %4451 = vmatprep.subr.bf16.mxu0 0
    %4452 = vmatpush1.bf16.msra.mxu0 0
    %4453 = vmatprep.subr.bf16.mxu0 0
    %4454 = vmatpush1.bf16.msra.mxu0 0
    %4455 = vmatprep.subr.bf16.mxu0 0
    %4456 = vmatpush1.bf16.msra.mxu0 0
    %4457 = vmatprep.mubr.bf16.mxu0 0
    %4458 = vmatmul.mubr.bf16.gmra.mrb[0].mxu0 %v1537
    %v4459 = vpop.f32.mrb[0].mxu0
    %v4460 = vadd.f32 %v4419, %v4459
    %v4461 = vpop.f32.mrb[0].mxu0
    %v4462 = vpop.f32.mrb[0].mxu0
    %v4463 = vadd.f32 %v4422, %v4462
    %v4464 = vpop.f32.mrb[0].mxu0
    %4465 = vdwg.mxu0
    %v4466 = vmax.f32 %v3948, 0.0
    %v4467 = vmax.f32 %v3950, 0.0
    %v4468 = vmax.f32 %v4077, 0.0
    %v4469 = vmax.f32 %v4079, 0.0
    %v4470 = vmax.f32 %v4206, 0.0
    %v4471 = vmax.f32 %v4208, 0.0
    %v4472 = vmax.f32 %v4335, 0.0
    %v4473 = vmax.f32 %v4337, 0.0
    %v4474 = vmax.f32 %v4460, 0.0
    %v4475 = vmax.f32 %v3952, 0.0
    %v4476 = vmax.f32 %v3954, 0.0
    %v4477 = vmax.f32 %v4081, 0.0
    %v4478 = vmax.f32 %v4083, 0.0
    %v4479 = vmax.f32 %v4210, 0.0
    %v4480 = vmax.f32 %v4212, 0.0
    %v4481 = vmax.f32 %v4339, 0.0
    %v4482 = vmax.f32 %v4341, 0.0
    %v4483 = vmax.f32 %v4463, 0.0
    %v4484 = vpack.c.bf16 %v4475, %v4466
    %v4485 = vpack.c.bf16 %v4476, %v4467
    %v4486 = vpack.c.bf16 %v4477, %v4468
    %v4487 = vpack.c.bf16 %v4478, %v4469
    %v4488 = vpack.c.bf16 %v4479, %v4470
    %v4489 = vpack.c.bf16 %v4480, %v4471
    %v4490 = vpack.c.bf16 %v4481, %v4472
    %v4491 = vpack.c.bf16 %v4482, %v4473
    %v4492 = vpack.c.bf16 %v4483, %v4474
    %v4493 = vld [vmem:[#allocation12] sm:$0xf]
    %v4494 = vld [vmem:[#allocation12 + $0x4] sm:$0xf]
    %v4495 = vld [vmem:[#allocation12 + $0x8] sm:$0xf]
    %v4496 = vld [vmem:[#allocation12 + $0xc] sm:$0xf]
    %v4497 = vld [vmem:[#allocation12 + $0x10] sm:$0xf]
    %v4498 = vld [vmem:[#allocation12 + $0x14] sm:$0xf]
    %v4499 = vld [vmem:[#allocation12 + $0x18] sm:$0xf]
    %v4500 = vld [vmem:[#allocation12 + $0x1c] sm:$0xf]
    %v4501 = vld [vmem:[#allocation12 + $0x20] sm:$0xf]
    %v4502 = vld [vmem:[#allocation12 + $0x24] sm:$0xf]
    %v4503 = vld [vmem:[#allocation12 + $0x28] sm:$0xf]
    %v4504 = vld [vmem:[#allocation12 + $0x2c] sm:$0xf]
    %v4505 = vld [vmem:[#allocation12 + $0x30] sm:$0xf]
    %v4506 = vld [vmem:[#allocation12 + $0x34] sm:$0xf]
    %v4507 = vld [vmem:[#allocation12 + $0x38] sm:$0xf]
    %v4508 = vld [vmem:[#allocation12 + $0x3c] sm:$0xf]
    %v4509 = vld [vmem:[#allocation12 + $0x40] sm:$0xf]
    %v4510 = vld [vmem:[#allocation12 + $0x44] sm:$0xf]
    %v4511 = vld [vmem:[#allocation12 + $0x48] sm:$0xf]
    %v4512 = vld [vmem:[#allocation12 + $0x4c] sm:$0xf]
    %v4513 = vld [vmem:[#allocation12 + $0x50] sm:$0xf]
    %v4514 = vld [vmem:[#allocation12 + $0x54] sm:$0xf]
    %v4515 = vld [vmem:[#allocation12 + $0x58] sm:$0xf]
    %v4516 = vld [vmem:[#allocation12 + $0x5c] sm:$0xf]
    %v4517 = vld [vmem:[#allocation12 + $0x60] sm:$0xf]
    %v4518 = vld [vmem:[#allocation12 + $0x64] sm:$0xf]
    %v4519 = vld [vmem:[#allocation12 + $0x68] sm:$0xf]
    %v4520 = vld [vmem:[#allocation12 + $0x6c] sm:$0xf]
    %v4521 = vld [vmem:[#allocation12 + $0x70] sm:$0xf]
    %v4522 = vld [vmem:[#allocation12 + $0x74] sm:$0xf]
    %v4523 = vld [vmem:[#allocation12 + $0x78] sm:$0xf]
    %v4524 = vld [vmem:[#allocation12 + $0x7c] sm:$0xf]
    %v4525 = vld [vmem:[#allocation12 + $0x80] sm:$0xf]
    %v4526 = vld [vmem:[#allocation12 + $0x84] sm:$0xf]
    %v4527 = vld [vmem:[#allocation12 + $0x88] sm:$0xf]
    %v4528 = vld [vmem:[#allocation12 + $0x8c] sm:$0xf]
    %v4529 = vld [vmem:[#allocation12 + $0x90] sm:$0xf]
    %v4530 = vld [vmem:[#allocation12 + $0x94] sm:$0xf]
    %v4531 = vld [vmem:[#allocation12 + $0x98] sm:$0xf]
    %v4532 = vld [vmem:[#allocation12 + $0x9c] sm:$0xf]
    %v4533 = vld [vmem:[#allocation12 + $0xa0] sm:$0xf]
    %v4534 = vld [vmem:[#allocation12 + $0xa4] sm:$0xf]
    %v4535 = vld [vmem:[#allocation12 + $0xa8] sm:$0xf]
    %v4536 = vld [vmem:[#allocation12 + $0xac] sm:$0xf]
    %v4537 = vld [vmem:[#allocation12 + $0xb0] sm:$0xf]
    %v4538 = vld [vmem:[#allocation12 + $0xb4] sm:$0xf]
    %v4539 = vld [vmem:[#allocation12 + $0xb8] sm:$0xf]
    %v4540 = vld [vmem:[#allocation12 + $0xbc] sm:$0xf]
    %v4541 = vld [vmem:[#allocation12 + $0xc0] sm:$0xf]
    %v4542 = vld [vmem:[#allocation12 + $0xc4] sm:$0xf]
    %v4543 = vld [vmem:[#allocation12 + $0xc8] sm:$0xf]
    %v4544 = vld [vmem:[#allocation12 + $0xcc] sm:$0xf]
    %v4545 = vld [vmem:[#allocation12 + $0xd0] sm:$0xf]
    %v4546 = vld [vmem:[#allocation12 + $0xd4] sm:$0xf]
    %v4547 = vld [vmem:[#allocation12 + $0xd8] sm:$0xf]
    %v4548 = vld [vmem:[#allocation12 + $0xdc] sm:$0xf]
    %v4549 = vld [vmem:[#allocation12 + $0xe0] sm:$0xf]
    %v4550 = vld [vmem:[#allocation12 + $0xe4] sm:$0xf]
    %v4551 = vld [vmem:[#allocation12 + $0xe8] sm:$0xf]
    %v4552 = vld [vmem:[#allocation12 + $0xec] sm:$0xf]
    %v4553 = vld [vmem:[#allocation12 + $0xf0] sm:$0xf]
    %v4554 = vld [vmem:[#allocation12 + $0xf4] sm:$0xf]
    %v4555 = vld [vmem:[#allocation12 + $0xf8] sm:$0xf]
    %v4556 = vld [vmem:[#allocation12 + $0xfc] sm:$0xf]
    %v4557 = vld [vmem:[#allocation12 + $0x100] sm:$0xf]
    %v4558 = vld [vmem:[#allocation12 + $0x104] sm:$0xf]
    %v4559 = vld [vmem:[#allocation12 + $0x108] sm:$0xf]
    %v4560 = vld [vmem:[#allocation12 + $0x10c] sm:$0xf]
    %v4561 = vld [vmem:[#allocation12 + $0x110] sm:$0xf]
    %v4562 = vld [vmem:[#allocation12 + $0x114] sm:$0xf]
    %v4563 = vld [vmem:[#allocation12 + $0x118] sm:$0xf]
    %v4564 = vld [vmem:[#allocation12 + $0x11c] sm:$0xf]
    %v4565 = vld [vmem:[#allocation12 + $0x120] sm:$0xf]
    %v4566 = vld [vmem:[#allocation12 + $0x124] sm:$0xf]
    %v4567 = vld [vmem:[#allocation12 + $0x128] sm:$0xf]
    %v4568 = vld [vmem:[#allocation12 + $0x12c] sm:$0xf]
    %v4569 = vld [vmem:[#allocation12 + $0x130] sm:$0xf]
    %v4570 = vld [vmem:[#allocation12 + $0x134] sm:$0xf]
    %v4571 = vld [vmem:[#allocation12 + $0x138] sm:$0xf]
    %v4572 = vld [vmem:[#allocation12 + $0x13c] sm:$0xf]
    %v4573 = vld [vmem:[#allocation12 + $0x140] sm:$0xf]
    %v4574 = vld [vmem:[#allocation12 + $0x144] sm:$0xf]
    %v4575 = vld [vmem:[#allocation12 + $0x148] sm:$0xf]
    %v4576 = vld [vmem:[#allocation12 + $0x14c] sm:$0xf]
    %v4577 = vld [vmem:[#allocation12 + $0x150] sm:$0xf]
    %v4578 = vld [vmem:[#allocation12 + $0x154] sm:$0xf]
    %v4579 = vld [vmem:[#allocation12 + $0x158] sm:$0xf]
    %v4580 = vld [vmem:[#allocation12 + $0x15c] sm:$0xf]
    %v4581 = vld [vmem:[#allocation12 + $0x160] sm:$0xf]
    %v4582 = vld [vmem:[#allocation12 + $0x164] sm:$0xf]
    %v4583 = vld [vmem:[#allocation12 + $0x168] sm:$0xf]
    %v4584 = vld [vmem:[#allocation12 + $0x16c] sm:$0xf]
    %v4585 = vld [vmem:[#allocation12 + $0x170] sm:$0xf]
    %v4586 = vld [vmem:[#allocation12 + $0x174] sm:$0xf]
    %v4587 = vld [vmem:[#allocation12 + $0x178] sm:$0xf]
    %v4588 = vld [vmem:[#allocation12 + $0x17c] sm:$0xf]
    %v4589 = vld [vmem:[#allocation12 + $0x180] sm:$0xf]
    %v4590 = vld [vmem:[#allocation12 + $0x184] sm:$0xf]
    %v4591 = vld [vmem:[#allocation12 + $0x188] sm:$0xf]
    %v4592 = vld [vmem:[#allocation12 + $0x18c] sm:$0xf]
    %v4593 = vld [vmem:[#allocation12 + $0x190] sm:$0xf]
    %v4594 = vld [vmem:[#allocation12 + $0x194] sm:$0xf]
    %v4595 = vld [vmem:[#allocation12 + $0x198] sm:$0xf]
    %v4596 = vld [vmem:[#allocation12 + $0x19c] sm:$0xf]
    %v4597 = vld [vmem:[#allocation12 + $0x1a0] sm:$0xf]
    %v4598 = vld [vmem:[#allocation12 + $0x1a4] sm:$0xf]
    %v4599 = vld [vmem:[#allocation12 + $0x1a8] sm:$0xf]
    %v4600 = vld [vmem:[#allocation12 + $0x1ac] sm:$0xf]
    %v4601 = vld [vmem:[#allocation12 + $0x1b0] sm:$0xf]
    %v4602 = vld [vmem:[#allocation12 + $0x1b4] sm:$0xf]
    %v4603 = vld [vmem:[#allocation12 + $0x1b8] sm:$0xf]
    %v4604 = vld [vmem:[#allocation12 + $0x1bc] sm:$0xf]
    %v4605 = vld [vmem:[#allocation12 + $0x1c0] sm:$0xf]
    %v4606 = vld [vmem:[#allocation12 + $0x1c4] sm:$0xf]
    %v4607 = vld [vmem:[#allocation12 + $0x1c8] sm:$0xf]
    %v4608 = vld [vmem:[#allocation12 + $0x1cc] sm:$0xf]
    %v4609 = vld [vmem:[#allocation12 + $0x1d0] sm:$0xf]
    %v4610 = vld [vmem:[#allocation12 + $0x1d4] sm:$0xf]
    %v4611 = vld [vmem:[#allocation12 + $0x1d8] sm:$0xf]
    %v4612 = vld [vmem:[#allocation12 + $0x1dc] sm:$0xf]
    %v4613 = vld [vmem:[#allocation12 + $0x1e0] sm:$0xf]
    %v4614 = vld [vmem:[#allocation12 + $0x1e4] sm:$0xf]
    %v4615 = vld [vmem:[#allocation12 + $0x1e8] sm:$0xf]
    %v4616 = vld [vmem:[#allocation12 + $0x1ec] sm:$0xf]
    %v4617 = vld [vmem:[#allocation12 + $0x1f0] sm:$0xf]
    %v4618 = vld [vmem:[#allocation12 + $0x1f4] sm:$0xf]
    %v4619 = vld [vmem:[#allocation12 + $0x1f8] sm:$0xf]
    %v4620 = vld [vmem:[#allocation12 + $0x1fc] sm:$0xf]
    %v4621 = vld [vmem:[#allocation12 + $0x200] sm:$0xf]
    %v4622 = vld [vmem:[#allocation12 + $0x204] sm:$0xf]
    %v4623 = vld [vmem:[#allocation12 + $0x208] sm:$0xf]
    %v4624 = vld [vmem:[#allocation12 + $0x20c] sm:$0xf]
    %v4625 = vld [vmem:[#allocation12 + $0x210] sm:$0xf]
    %v4626 = vld [vmem:[#allocation12 + $0x214] sm:$0xf]
    %v4627 = vld [vmem:[#allocation12 + $0x218] sm:$0xf]
    %v4628 = vld [vmem:[#allocation12 + $0x21c] sm:$0xf]
    %v4629 = vld [vmem:[#allocation12 + $0x220] sm:$0xf]
    %v4630 = vld [vmem:[#allocation12 + $0x224] sm:$0xf]
    %v4631 = vld [vmem:[#allocation12 + $0x228] sm:$0xf]
    %v4632 = vld [vmem:[#allocation12 + $0x22c] sm:$0xf]
    %v4633 = vld [vmem:[#allocation12 + $0x230] sm:$0xf]
    %v4634 = vld [vmem:[#allocation12 + $0x234] sm:$0xf]
    %v4635 = vld [vmem:[#allocation12 + $0x238] sm:$0xf]
    %v4636 = vld [vmem:[#allocation12 + $0x23c] sm:$0xf]
    %v4637 = vld [vmem:[#allocation13] sm:$0x1]
    %v4639 = vlaneseq
    %v4640 = vshrl.u32 %v4639, 7
    %v4641 = vsub.s32 0, %v4640
    %v4642 = vrot.slane %v4637, %v4641
    %v4788 = vunpack.c.l.b16 %v4493
    %v4789 = vunpack.c.l.b16 %v4494
    %v4790 = vunpack.c.l.b16 %v4495
    %v4791 = vunpack.c.l.b16 %v4496
    %v4792 = vunpack.c.l.b16 %v4497
    %v4793 = vunpack.c.l.b16 %v4498
    %v4794 = vunpack.c.l.b16 %v4499
    %v4795 = vunpack.c.l.b16 %v4500
    %v4796 = vunpack.c.l.b16 %v4501
    %v4797 = vunpack.c.l.b16 %v4502
    %v4798 = vunpack.c.l.b16 %v4503
    %v4799 = vunpack.c.l.b16 %v4504
    %v4800 = vunpack.c.l.b16 %v4505
    %v4801 = vunpack.c.l.b16 %v4506
    %v4802 = vunpack.c.l.b16 %v4507
    %v4803 = vunpack.c.l.b16 %v4508
    %v4804 = vunpack.c.l.b16 %v4509
    %v4805 = vunpack.c.l.b16 %v4510
    %v4806 = vunpack.c.l.b16 %v4511
    %v4807 = vunpack.c.l.b16 %v4512
    %v4808 = vunpack.c.l.b16 %v4513
    %v4809 = vunpack.c.l.b16 %v4514
    %v4810 = vunpack.c.l.b16 %v4515
    %v4811 = vunpack.c.l.b16 %v4516
    %v4812 = vunpack.c.l.b16 %v4517
    %v4813 = vunpack.c.l.b16 %v4518
    %v4814 = vunpack.c.l.b16 %v4519
    %v4815 = vunpack.c.l.b16 %v4520
    %v4816 = vunpack.c.l.b16 %v4521
    %v4817 = vunpack.c.l.b16 %v4522
    %v4818 = vunpack.c.l.b16 %v4523
    %v4819 = vunpack.c.l.b16 %v4524
    %v4820 = vunpack.c.l.b16 %v4525
    %v4821 = vunpack.c.l.b16 %v4526
    %v4822 = vunpack.c.l.b16 %v4527
    %v4823 = vunpack.c.l.b16 %v4528
    %v4824 = vunpack.c.l.b16 %v4529
    %v4825 = vunpack.c.l.b16 %v4530
    %v4826 = vunpack.c.l.b16 %v4531
    %v4827 = vunpack.c.l.b16 %v4532
    %v4828 = vunpack.c.l.b16 %v4533
    %v4829 = vunpack.c.l.b16 %v4534
    %v4830 = vunpack.c.l.b16 %v4535
    %v4831 = vunpack.c.l.b16 %v4536
    %v4832 = vunpack.c.l.b16 %v4537
    %v4833 = vunpack.c.l.b16 %v4538
    %v4834 = vunpack.c.l.b16 %v4539
    %v4835 = vunpack.c.l.b16 %v4540
    %v4836 = vunpack.c.l.b16 %v4541
    %v4837 = vunpack.c.l.b16 %v4542
    %v4838 = vunpack.c.l.b16 %v4543
    %v4839 = vunpack.c.l.b16 %v4544
    %v4840 = vunpack.c.l.b16 %v4545
    %v4841 = vunpack.c.l.b16 %v4546
    %v4842 = vunpack.c.l.b16 %v4547
    %v4843 = vunpack.c.l.b16 %v4548
    %v4844 = vunpack.c.l.b16 %v4549
    %v4845 = vunpack.c.l.b16 %v4550
    %v4846 = vunpack.c.l.b16 %v4551
    %v4847 = vunpack.c.l.b16 %v4552
    %v4848 = vunpack.c.l.b16 %v4553
    %v4849 = vunpack.c.l.b16 %v4554
    %v4850 = vunpack.c.l.b16 %v4555
    %v4851 = vunpack.c.l.b16 %v4556
    %v4852 = vunpack.c.l.b16 %v4557
    %v4853 = vunpack.c.l.b16 %v4558
    %v4854 = vunpack.c.l.b16 %v4559
    %v4855 = vunpack.c.l.b16 %v4560
    %v4856 = vunpack.c.l.b16 %v4561
    %v4857 = vunpack.c.l.b16 %v4562
    %v4858 = vunpack.c.l.b16 %v4563
    %v4859 = vunpack.c.l.b16 %v4564
    %v4860 = vunpack.c.l.b16 %v4565
    %v4861 = vunpack.c.l.b16 %v4566
    %v4862 = vunpack.c.l.b16 %v4567
    %v4863 = vunpack.c.l.b16 %v4568
    %v4864 = vunpack.c.l.b16 %v4569
    %v4865 = vunpack.c.l.b16 %v4570
    %v4866 = vunpack.c.l.b16 %v4571
    %v4867 = vunpack.c.l.b16 %v4572
    %v4868 = vunpack.c.l.b16 %v4573
    %v4869 = vunpack.c.l.b16 %v4574
    %v4870 = vunpack.c.l.b16 %v4575
    %v4871 = vunpack.c.l.b16 %v4576
    %v4872 = vunpack.c.l.b16 %v4577
    %v4873 = vunpack.c.l.b16 %v4578
    %v4874 = vunpack.c.l.b16 %v4579
    %v4875 = vunpack.c.l.b16 %v4580
    %v4876 = vunpack.c.l.b16 %v4581
    %v4877 = vunpack.c.l.b16 %v4582
    %v4878 = vunpack.c.l.b16 %v4583
    %v4879 = vunpack.c.l.b16 %v4584
    %v4880 = vunpack.c.l.b16 %v4585
    %v4881 = vunpack.c.l.b16 %v4586
    %v4882 = vunpack.c.l.b16 %v4587
    %v4883 = vunpack.c.l.b16 %v4588
    %v4884 = vunpack.c.l.b16 %v4589
    %v4885 = vunpack.c.l.b16 %v4590
    %v4886 = vunpack.c.l.b16 %v4591
    %v4887 = vunpack.c.l.b16 %v4592
    %v4888 = vunpack.c.l.b16 %v4593
    %v4889 = vunpack.c.l.b16 %v4594
    %v4890 = vunpack.c.l.b16 %v4595
    %v4891 = vunpack.c.l.b16 %v4596
    %v4892 = vunpack.c.l.b16 %v4597
    %v4893 = vunpack.c.l.b16 %v4598
    %v4894 = vunpack.c.l.b16 %v4599
    %v4895 = vunpack.c.l.b16 %v4600
    %v4896 = vunpack.c.l.b16 %v4601
    %v4897 = vunpack.c.l.b16 %v4602
    %v4898 = vunpack.c.l.b16 %v4603
    %v4899 = vunpack.c.l.b16 %v4604
    %v4900 = vunpack.c.l.b16 %v4605
    %v4901 = vunpack.c.l.b16 %v4606
    %v4902 = vunpack.c.l.b16 %v4607
    %v4903 = vunpack.c.l.b16 %v4608
    %v4904 = vunpack.c.l.b16 %v4609
    %v4905 = vunpack.c.l.b16 %v4610
    %v4906 = vunpack.c.l.b16 %v4611
    %v4907 = vunpack.c.l.b16 %v4612
    %v4908 = vunpack.c.l.b16 %v4613
    %v4909 = vunpack.c.l.b16 %v4614
    %v4910 = vunpack.c.l.b16 %v4615
    %v4911 = vunpack.c.l.b16 %v4616
    %v4912 = vunpack.c.l.b16 %v4617
    %v4913 = vunpack.c.l.b16 %v4618
    %v4914 = vunpack.c.l.b16 %v4619
    %v4915 = vunpack.c.l.b16 %v4620
    %v4916 = vunpack.c.l.b16 %v4621
    %v4917 = vunpack.c.l.b16 %v4622
    %v4918 = vunpack.c.l.b16 %v4623
    %v4919 = vunpack.c.l.b16 %v4624
    %v4920 = vunpack.c.l.b16 %v4625
    %v4921 = vunpack.c.l.b16 %v4626
    %v4922 = vunpack.c.l.b16 %v4627
    %v4923 = vunpack.c.l.b16 %v4628
    %v4924 = vunpack.c.l.b16 %v4629
    %v4925 = vunpack.c.l.b16 %v4630
    %v4926 = vunpack.c.l.b16 %v4631
    %v4927 = vunpack.c.l.b16 %v4632
    %v4928 = vunpack.c.l.b16 %v4633
    %v4929 = vunpack.c.l.b16 %v4634
    %v4930 = vunpack.c.l.b16 %v4635
    %v4931 = vunpack.c.l.b16 %v4636
    %v4932 = vpack.c.b16 %v4789, %v4788
    %v4933 = vpack.c.b16 %v4791, %v4790
    %v4934 = vpack.c.b16 %v4793, %v4792
    %v4935 = vpack.c.b16 %v4795, %v4794
    %v4936 = vpack.c.b16 %v4797, %v4796
    %v4937 = vpack.c.b16 %v4799, %v4798
    %v4938 = vpack.c.b16 %v4801, %v4800
    %v4939 = vpack.c.b16 %v4803, %v4802
    %v4940 = vpack.c.b16 %v4805, %v4804
    %v4941 = vpack.c.b16 %v4807, %v4806
    %v4942 = vpack.c.b16 %v4809, %v4808
    %v4943 = vpack.c.b16 %v4811, %v4810
    %v4944 = vpack.c.b16 %v4813, %v4812
    %v4945 = vpack.c.b16 %v4815, %v4814
    %v4946 = vpack.c.b16 %v4817, %v4816
    %v4947 = vpack.c.b16 %v4819, %v4818
    %v4948 = vpack.c.b16 %v4821, %v4820
    %v4949 = vpack.c.b16 %v4823, %v4822
    %v4950 = vpack.c.b16 %v4825, %v4824
    %v4951 = vpack.c.b16 %v4827, %v4826
    %v4952 = vpack.c.b16 %v4829, %v4828
    %v4953 = vpack.c.b16 %v4831, %v4830
    %v4954 = vpack.c.b16 %v4833, %v4832
    %v4955 = vpack.c.b16 %v4835, %v4834
    %v4956 = vpack.c.b16 %v4837, %v4836
    %v4957 = vpack.c.b16 %v4839, %v4838
    %v4958 = vpack.c.b16 %v4841, %v4840
    %v4959 = vpack.c.b16 %v4843, %v4842
    %v4960 = vpack.c.b16 %v4845, %v4844
    %v4961 = vpack.c.b16 %v4847, %v4846
    %v4962 = vpack.c.b16 %v4849, %v4848
    %v4963 = vpack.c.b16 %v4851, %v4850
    %v4964 = vpack.c.b16 %v4853, %v4852
    %v4965 = vpack.c.b16 %v4855, %v4854
    %v4966 = vpack.c.b16 %v4857, %v4856
    %v4967 = vpack.c.b16 %v4859, %v4858
    %v4968 = vpack.c.b16 %v4861, %v4860
    %v4969 = vpack.c.b16 %v4863, %v4862
    %v4970 = vpack.c.b16 %v4865, %v4864
    %v4971 = vpack.c.b16 %v4867, %v4866
    %v4972 = vpack.c.b16 %v4869, %v4868
    %v4973 = vpack.c.b16 %v4871, %v4870
    %v4974 = vpack.c.b16 %v4873, %v4872
    %v4975 = vpack.c.b16 %v4875, %v4874
    %v4976 = vpack.c.b16 %v4877, %v4876
    %v4977 = vpack.c.b16 %v4879, %v4878
    %v4978 = vpack.c.b16 %v4881, %v4880
    %v4979 = vpack.c.b16 %v4883, %v4882
    %v4980 = vpack.c.b16 %v4885, %v4884
    %v4981 = vpack.c.b16 %v4887, %v4886
    %v4982 = vpack.c.b16 %v4889, %v4888
    %v4983 = vpack.c.b16 %v4891, %v4890
    %v4984 = vpack.c.b16 %v4893, %v4892
    %v4985 = vpack.c.b16 %v4895, %v4894
    %v4986 = vpack.c.b16 %v4897, %v4896
    %v4987 = vpack.c.b16 %v4899, %v4898
    %v4988 = vpack.c.b16 %v4901, %v4900
    %v4989 = vpack.c.b16 %v4903, %v4902
    %v4990 = vpack.c.b16 %v4905, %v4904
    %v4991 = vpack.c.b16 %v4907, %v4906
    %v4992 = vpack.c.b16 %v4909, %v4908
    %v4993 = vpack.c.b16 %v4911, %v4910
    %v4994 = vpack.c.b16 %v4913, %v4912
    %v4995 = vpack.c.b16 %v4915, %v4914
    %v4996 = vpack.c.b16 %v4917, %v4916
    %v4997 = vpack.c.b16 %v4919, %v4918
    %v4998 = vpack.c.b16 %v4921, %v4920
    %v4999 = vpack.c.b16 %v4923, %v4922
    %v5000 = vpack.c.b16 %v4925, %v4924
    %v5001 = vpack.c.b16 %v4927, %v4926
    %v5002 = vpack.c.b16 %v4929, %v4928
    %v5003 = vpack.c.b16 %v4931, %v4930
    %5076 = vmatprep.subr.bf16.mxu0 0
    %5077 = vmatpush1.bf16.msra.mxu0 %v4932
    %5078 = vmatprep.subr.bf16.mxu0 0
    %5079 = vmatpush1.bf16.msra.mxu0 %v4933
    %5080 = vmatprep.subr.bf16.mxu0 0
    %5081 = vmatpush1.bf16.msra.mxu0 %v4934
    %5082 = vmatprep.subr.bf16.mxu0 0
    %5083 = vmatpush1.bf16.msra.mxu0 %v4935
    %5084 = vmatprep.subr.bf16.mxu0 0
    %5085 = vmatpush1.bf16.msra.mxu0 %v4936
    %5086 = vmatprep.subr.bf16.mxu0 0
    %5087 = vmatpush1.bf16.msra.mxu0 %v4937
    %5088 = vmatprep.subr.bf16.mxu0 0
    %5089 = vmatpush1.bf16.msra.mxu0 %v4938
    %5090 = vmatprep.subr.bf16.mxu0 0
    %5091 = vmatpush1.bf16.msra.mxu0 %v4939
    %5092 = vmatprep.subr.bf16.mxu0 0
    %5093 = vmatpush1.bf16.msra.mxu0 %v4940
    %5094 = vmatprep.subr.bf16.mxu0 0
    %5095 = vmatpush1.bf16.msra.mxu0 %v4941
    %5096 = vmatprep.subr.bf16.mxu0 0
    %5097 = vmatpush1.bf16.msra.mxu0 %v4942
    %5098 = vmatprep.subr.bf16.mxu0 0
    %5099 = vmatpush1.bf16.msra.mxu0 %v4943
    %5100 = vmatprep.subr.bf16.mxu0 0
    %5101 = vmatpush1.bf16.msra.mxu0 %v4944
    %5102 = vmatprep.subr.bf16.mxu0 0
    %5103 = vmatpush1.bf16.msra.mxu0 %v4945
    %5104 = vmatprep.subr.bf16.mxu0 0
    %5105 = vmatpush1.bf16.msra.mxu0 %v4946
    %5106 = vmatprep.subr.bf16.mxu0 0
    %5107 = vmatpush1.bf16.msra.mxu0 %v4947
    %5108 = vmatprep.mubr.bf16.mxu0 %v4485
    %5109 = vmatmul.mubr.bf16.gmra.mrb[0].mxu0 %v4484
    %v5110 = vpop.f32.mrb[0].mxu0
    %v5111 = vadd.f32 %v4642, %v5110
    %v5112 = vpop.f32.mrb[0].mxu0
    %v5113 = vpop.f32.mrb[0].mxu0
    %v5114 = vadd.f32 %v4642, %v5113
    %v5115 = vpop.f32.mrb[0].mxu0
    %5116 = vdwg.mxu0
    %5117 = vmatprep.subr.bf16.mxu0 0
    %5118 = vmatpush1.bf16.msra.mxu0 %v4948
    %5119 = vmatprep.subr.bf16.mxu0 0
    %5120 = vmatpush1.bf16.msra.mxu0 %v4949
    %5121 = vmatprep.subr.bf16.mxu0 0
    %5122 = vmatpush1.bf16.msra.mxu0 %v4950
    %5123 = vmatprep.subr.bf16.mxu0 0
    %5124 = vmatpush1.bf16.msra.mxu0 %v4951
    %5125 = vmatprep.subr.bf16.mxu0 0
    %5126 = vmatpush1.bf16.msra.mxu0 %v4952
    %5127 = vmatprep.subr.bf16.mxu0 0
    %5128 = vmatpush1.bf16.msra.mxu0 %v4953
    %5129 = vmatprep.subr.bf16.mxu0 0
    %5130 = vmatpush1.bf16.msra.mxu0 %v4954
    %5131 = vmatprep.subr.bf16.mxu0 0
    %5132 = vmatpush1.bf16.msra.mxu0 %v4955
    %5133 = vmatprep.subr.bf16.mxu0 0
    %5134 = vmatpush1.bf16.msra.mxu0 %v4956
    %5135 = vmatprep.subr.bf16.mxu0 0
    %5136 = vmatpush1.bf16.msra.mxu0 %v4957
    %5137 = vmatprep.subr.bf16.mxu0 0
    %5138 = vmatpush1.bf16.msra.mxu0 %v4958
    %5139 = vmatprep.subr.bf16.mxu0 0
    %5140 = vmatpush1.bf16.msra.mxu0 %v4959
    %5141 = vmatprep.subr.bf16.mxu0 0
    %5142 = vmatpush1.bf16.msra.mxu0 %v4960
    %5143 = vmatprep.subr.bf16.mxu0 0
    %5144 = vmatpush1.bf16.msra.mxu0 %v4961
    %5145 = vmatprep.subr.bf16.mxu0 0
    %5146 = vmatpush1.bf16.msra.mxu0 %v4962
    %5147 = vmatprep.subr.bf16.mxu0 0
    %5148 = vmatpush1.bf16.msra.mxu0 %v4963
    %5149 = vmatprep.mubr.bf16.mxu0 %v4487
    %5150 = vmatmul.mubr.bf16.gmra.mrb[0].mxu0 %v4486
    %v5151 = vpop.f32.mrb[0].mxu0
    %v5152 = vadd.f32 %v5111, %v5151
    %v5153 = vpop.f32.mrb[0].mxu0
    %v5154 = vpop.f32.mrb[0].mxu0
    %v5155 = vadd.f32 %v5114, %v5154
    %v5156 = vpop.f32.mrb[0].mxu0
    %5157 = vdwg.mxu0
    %5158 = vmatprep.subr.bf16.mxu0 0
    %5159 = vmatpush1.bf16.msra.mxu0 %v4964
    %5160 = vmatprep.subr.bf16.mxu0 0
    %5161 = vmatpush1.bf16.msra.mxu0 %v4965
    %5162 = vmatprep.subr.bf16.mxu0 0
    %5163 = vmatpush1.bf16.msra.mxu0 %v4966
    %5164 = vmatprep.subr.bf16.mxu0 0
    %5165 = vmatpush1.bf16.msra.mxu0 %v4967
    %5166 = vmatprep.subr.bf16.mxu0 0
    %5167 = vmatpush1.bf16.msra.mxu0 %v4968
    %5168 = vmatprep.subr.bf16.mxu0 0
    %5169 = vmatpush1.bf16.msra.mxu0 %v4969
    %5170 = vmatprep.subr.bf16.mxu0 0
    %5171 = vmatpush1.bf16.msra.mxu0 %v4970
    %5172 = vmatprep.subr.bf16.mxu0 0
    %5173 = vmatpush1.bf16.msra.mxu0 %v4971
    %5174 = vmatprep.subr.bf16.mxu0 0
    %5175 = vmatpush1.bf16.msra.mxu0 %v4972
    %5176 = vmatprep.subr.bf16.mxu0 0
    %5177 = vmatpush1.bf16.msra.mxu0 %v4973
    %5178 = vmatprep.subr.bf16.mxu0 0
    %5179 = vmatpush1.bf16.msra.mxu0 %v4974
    %5180 = vmatprep.subr.bf16.mxu0 0
    %5181 = vmatpush1.bf16.msra.mxu0 %v4975
    %5182 = vmatprep.subr.bf16.mxu0 0
    %5183 = vmatpush1.bf16.msra.mxu0 %v4976
    %5184 = vmatprep.subr.bf16.mxu0 0
    %5185 = vmatpush1.bf16.msra.mxu0 %v4977
    %5186 = vmatprep.subr.bf16.mxu0 0
    %5187 = vmatpush1.bf16.msra.mxu0 %v4978
    %5188 = vmatprep.subr.bf16.mxu0 0
    %5189 = vmatpush1.bf16.msra.mxu0 %v4979
    %5190 = vmatprep.mubr.bf16.mxu0 %v4489
    %5191 = vmatmul.mubr.bf16.gmra.mrb[0].mxu0 %v4488
    %v5192 = vpop.f32.mrb[0].mxu0
    %v5193 = vadd.f32 %v5152, %v5192
    %v5194 = vpop.f32.mrb[0].mxu0
    %v5195 = vpop.f32.mrb[0].mxu0
    %v5196 = vadd.f32 %v5155, %v5195
    %v5197 = vpop.f32.mrb[0].mxu0
    %5198 = vdwg.mxu0
    %5199 = vmatprep.subr.bf16.mxu0 0
    %5200 = vmatpush1.bf16.msra.mxu0 %v4980
    %5201 = vmatprep.subr.bf16.mxu0 0
    %5202 = vmatpush1.bf16.msra.mxu0 %v4981
    %5203 = vmatprep.subr.bf16.mxu0 0
    %5204 = vmatpush1.bf16.msra.mxu0 %v4982
    %5205 = vmatprep.subr.bf16.mxu0 0
    %5206 = vmatpush1.bf16.msra.mxu0 %v4983
    %5207 = vmatprep.subr.bf16.mxu0 0
    %5208 = vmatpush1.bf16.msra.mxu0 %v4984
    %5209 = vmatprep.subr.bf16.mxu0 0
    %5210 = vmatpush1.bf16.msra.mxu0 %v4985
    %5211 = vmatprep.subr.bf16.mxu0 0
    %5212 = vmatpush1.bf16.msra.mxu0 %v4986
    %5213 = vmatprep.subr.bf16.mxu0 0
    %5214 = vmatpush1.bf16.msra.mxu0 %v4987
    %5215 = vmatprep.subr.bf16.mxu0 0
    %5216 = vmatpush1.bf16.msra.mxu0 %v4988
    %5217 = vmatprep.subr.bf16.mxu0 0
    %5218 = vmatpush1.bf16.msra.mxu0 %v4989
    %5219 = vmatprep.subr.bf16.mxu0 0
    %5220 = vmatpush1.bf16.msra.mxu0 %v4990
    %5221 = vmatprep.subr.bf16.mxu0 0
    %5222 = vmatpush1.bf16.msra.mxu0 %v4991
    %5223 = vmatprep.subr.bf16.mxu0 0
    %5224 = vmatpush1.bf16.msra.mxu0 %v4992
    %5225 = vmatprep.subr.bf16.mxu0 0
    %5226 = vmatpush1.bf16.msra.mxu0 %v4993
    %5227 = vmatprep.subr.bf16.mxu0 0
    %5228 = vmatpush1.bf16.msra.mxu0 %v4994
    %5229 = vmatprep.subr.bf16.mxu0 0
    %5230 = vmatpush1.bf16.msra.mxu0 %v4995
    %5231 = vmatprep.mubr.bf16.mxu0 %v4491
    %5232 = vmatmul.mubr.bf16.gmra.mrb[0].mxu0 %v4490
    %v5233 = vpop.f32.mrb[0].mxu0
    %v5234 = vadd.f32 %v5193, %v5233
    %v5235 = vpop.f32.mrb[0].mxu0
    %v5236 = vpop.f32.mrb[0].mxu0
    %v5237 = vadd.f32 %v5196, %v5236
    %v5238 = vpop.f32.mrb[0].mxu0
    %5239 = vdwg.mxu0
    %5240 = vmatprep.subr.bf16.mxu0 0
    %5241 = vmatpush1.bf16.msra.mxu0 %v4996
    %5242 = vmatprep.subr.bf16.mxu0 0
    %5243 = vmatpush1.bf16.msra.mxu0 %v4997
    %5244 = vmatprep.subr.bf16.mxu0 0
    %5245 = vmatpush1.bf16.msra.mxu0 %v4998
    %5246 = vmatprep.subr.bf16.mxu0 0
    %5247 = vmatpush1.bf16.msra.mxu0 %v4999
    %5248 = vmatprep.subr.bf16.mxu0 0
    %5249 = vmatpush1.bf16.msra.mxu0 %v5000
    %5250 = vmatprep.subr.bf16.mxu0 0
    %5251 = vmatpush1.bf16.msra.mxu0 %v5001
    %5252 = vmatprep.subr.bf16.mxu0 0
    %5253 = vmatpush1.bf16.msra.mxu0 %v5002
    %5254 = vmatprep.subr.bf16.mxu0 0
    %5255 = vmatpush1.bf16.msra.mxu0 %v5003
    %5256 = vmatprep.subr.bf16.mxu0 0
    %5257 = vmatpush1.bf16.msra.mxu0 0
    %5258 = vmatprep.subr.bf16.mxu0 0
    %5259 = vmatpush1.bf16.msra.mxu0 0
    %5260 = vmatprep.subr.bf16.mxu0 0
    %5261 = vmatpush1.bf16.msra.mxu0 0
    %5262 = vmatprep.subr.bf16.mxu0 0
    %5263 = vmatpush1.bf16.msra.mxu0 0
    %5264 = vmatprep.subr.bf16.mxu0 0
    %5265 = vmatpush1.bf16.msra.mxu0 0
    %5266 = vmatprep.subr.bf16.mxu0 0
    %5267 = vmatpush1.bf16.msra.mxu0 0
    %5268 = vmatprep.subr.bf16.mxu0 0
    %5269 = vmatpush1.bf16.msra.mxu0 0
    %5270 = vmatprep.subr.bf16.mxu0 0
    %5271 = vmatpush1.bf16.msra.mxu0 0
    %5272 = vmatprep.mubr.bf16.mxu0 0
    %5273 = vmatmul.mubr.bf16.gmra.mrb[0].mxu0 %v4492
    %v5274 = vpop.f32.mrb[0].mxu0
    %v5275 = vadd.f32 %v5234, %v5274
    %v5276 = vpop.f32.mrb[0].mxu0
    %v5277 = vpop.f32.mrb[0].mxu0
    %v5278 = vadd.f32 %v5237, %v5277
    %v5279 = vpop.f32.mrb[0].mxu0
    %5280 = vdwg.mxu0
    %v5281 = vmax.f32 %v5275, 0.0
    %v5282 = vmax.f32 %v5278, 0.0
    %v5283 = vpack.c.bf16 %v5282, %v5281
    %v5284 = vld [vmem:[#allocation15] sm:$0xff]
    %v5285 = vld [vmem:[#allocation15 + $0x8] sm:$0xff]
    %v5286 = vld [vmem:[#allocation15 + $0x10] sm:$0xff]
    %v5287 = vld [vmem:[#allocation15 + $0x18] sm:$0xff]
    %v5288 = vld [vmem:[#allocation15 + $0x20] sm:$0xff]
    %v5289 = vld [vmem:[#allocation15 + $0x28] sm:$0xff]
    %v5290 = vld [vmem:[#allocation15 + $0x30] sm:$0xff]
    %v5291 = vld [vmem:[#allocation15 + $0x38] sm:$0xff]
    %v5292 = vld [vmem:[#allocation15 + $0x40] sm:$0xff]
    %v5293 = vld [vmem:[#allocation15 + $0x48] sm:$0xff]
    %v5294 = vld [vmem:[#allocation15 + $0x50] sm:$0xff]
    %v5295 = vld [vmem:[#allocation15 + $0x58] sm:$0xff]
    %v5296 = vld [vmem:[#allocation15 + $0x60] sm:$0xff]
    %v5297 = vld [vmem:[#allocation15 + $0x68] sm:$0xff]
    %v5298 = vld [vmem:[#allocation15 + $0x70] sm:$0xff]
    %v5299 = vld [vmem:[#allocation15 + $0x78] sm:$0xff]
    %v5300 = vld [vmem:[#allocation16] sm:$0x3]
    %v5302 = vlaneseq
    %v5303 = vshrl.u32 %v5302, 7
    %v5304 = vsub.s32 0, %v5303
    %v5305 = vrot.slane %v5300, %v5304
    %v5306 = vlaneseq
    %v5307 = vshrl.u32 %v5306, 7
    %v5308 = vsub.s32 1, %v5307
    %v5309 = vrot.slane %v5300, %v5308
    %v5328 = vunpack.c.l.b16 %v5284
    %v5329 = vunpack.c.h.b16 %v5284
    %v5330 = vunpack.c.l.b16 %v5285
    %v5331 = vunpack.c.h.b16 %v5285
    %v5332 = vunpack.c.l.b16 %v5286
    %v5333 = vunpack.c.h.b16 %v5286
    %v5334 = vunpack.c.l.b16 %v5287
    %v5335 = vunpack.c.h.b16 %v5287
    %v5336 = vunpack.c.l.b16 %v5288
    %v5337 = vunpack.c.h.b16 %v5288
    %v5338 = vunpack.c.l.b16 %v5289
    %v5339 = vunpack.c.h.b16 %v5289
    %v5340 = vunpack.c.l.b16 %v5290
    %v5341 = vunpack.c.h.b16 %v5290
    %v5342 = vunpack.c.l.b16 %v5291
    %v5343 = vunpack.c.h.b16 %v5291
    %v5344 = vunpack.c.l.b16 %v5292
    %v5345 = vunpack.c.h.b16 %v5292
    %v5346 = vunpack.c.l.b16 %v5293
    %v5347 = vunpack.c.h.b16 %v5293
    %v5348 = vunpack.c.l.b16 %v5294
    %v5349 = vunpack.c.h.b16 %v5294
    %v5350 = vunpack.c.l.b16 %v5295
    %v5351 = vunpack.c.h.b16 %v5295
    %v5352 = vunpack.c.l.b16 %v5296
    %v5353 = vunpack.c.h.b16 %v5296
    %v5354 = vunpack.c.l.b16 %v5297
    %v5355 = vunpack.c.h.b16 %v5297
    %v5356 = vunpack.c.l.b16 %v5298
    %v5357 = vunpack.c.h.b16 %v5298
    %v5358 = vunpack.c.l.b16 %v5299
    %v5359 = vunpack.c.h.b16 %v5299
    %v5360 = vpack.c.b16 %v5330, %v5328
    %v5361 = vpack.c.b16 %v5331, %v5329
    %v5362 = vpack.c.b16 %v5334, %v5332
    %v5363 = vpack.c.b16 %v5335, %v5333
    %v5364 = vpack.c.b16 %v5338, %v5336
    %v5365 = vpack.c.b16 %v5339, %v5337
    %v5366 = vpack.c.b16 %v5342, %v5340
    %v5367 = vpack.c.b16 %v5343, %v5341
    %v5368 = vpack.c.b16 %v5346, %v5344
    %v5369 = vpack.c.b16 %v5347, %v5345
    %v5370 = vpack.c.b16 %v5350, %v5348
    %v5371 = vpack.c.b16 %v5351, %v5349
    %v5372 = vpack.c.b16 %v5354, %v5352
    %v5373 = vpack.c.b16 %v5355, %v5353
    %v5374 = vpack.c.b16 %v5358, %v5356
    %v5375 = vpack.c.b16 %v5359, %v5357
    %5392 = vmatprep.subr.bf16.mxu0 %v5361
    %5393 = vmatpush1.bf16.msra.mxu0 %v5360
    %5394 = vmatprep.subr.bf16.mxu0 %v5363
    %5395 = vmatpush1.bf16.msra.mxu0 %v5362
    %5396 = vmatprep.subr.bf16.mxu0 %v5365
    %5397 = vmatpush1.bf16.msra.mxu0 %v5364
    %5398 = vmatprep.subr.bf16.mxu0 %v5367
    %5399 = vmatpush1.bf16.msra.mxu0 %v5366
    %5400 = vmatprep.subr.bf16.mxu0 %v5369
    %5401 = vmatpush1.bf16.msra.mxu0 %v5368
    %5402 = vmatprep.subr.bf16.mxu0 %v5371
    %5403 = vmatpush1.bf16.msra.mxu0 %v5370
    %5404 = vmatprep.subr.bf16.mxu0 %v5373
    %5405 = vmatpush1.bf16.msra.mxu0 %v5372
    %5406 = vmatprep.subr.bf16.mxu0 %v5375
    %5407 = vmatpush1.bf16.msra.mxu0 %v5374
    %5408 = vmatprep.subr.bf16.mxu0 0
    %5409 = vmatpush1.bf16.msra.mxu0 0
    %5410 = vmatprep.subr.bf16.mxu0 0
    %5411 = vmatpush1.bf16.msra.mxu0 0
    %5412 = vmatprep.subr.bf16.mxu0 0
    %5413 = vmatpush1.bf16.msra.mxu0 0
    %5414 = vmatprep.subr.bf16.mxu0 0
    %5415 = vmatpush1.bf16.msra.mxu0 0
    %5416 = vmatprep.subr.bf16.mxu0 0
    %5417 = vmatpush1.bf16.msra.mxu0 0
    %5418 = vmatprep.subr.bf16.mxu0 0
    %5419 = vmatpush1.bf16.msra.mxu0 0
    %5420 = vmatprep.subr.bf16.mxu0 0
    %5421 = vmatpush1.bf16.msra.mxu0 0
    %5422 = vmatprep.subr.bf16.mxu0 0
    %5423 = vmatpush1.bf16.msra.mxu0 0
    %5424 = vmatprep.mubr.bf16.mxu0 0
    %5425 = vmatmul.mubr.bf16.gmra.mrb[0].mxu0 %v5283
    %v5426 = vpop.f32.mrb[0].mxu0
    %v5427 = vadd.f32 %v5305, %v5426
    %v5428 = vpop.f32.mrb[0].mxu0
    %v5429 = vadd.f32 %v5309, %v5428
    %v5430 = vpop.f32.mrb[0].mxu0
    %v5431 = vadd.f32 %v5305, %v5430
    %v5432 = vpop.f32.mrb[0].mxu0
    %v5433 = vadd.f32 %v5309, %v5432
    %5434 = vdwg.mxu0
    %v5435 = vmax.f32 %v5429, 0.0
    %v5436 = vmax.f32 %v5433, 0.0
    %5437 = vmax.xlane.f32.xlu0 %v5427
    %v5438 = vpop.xlane.xlu0 %5437
    %5439 = vmax.xlane.f32.xlu0 %v5431
    %v5440 = vpop.xlane.xlu0 %5439
    %v5441 = vsub.f32 %v5427, %v5438
    %v5442 = vsub.f32 %v5431, %v5440
    %v5443 = vmul.f32 %v5441, 1.442695
    %v5444 = vpow.pop %v5443
    %v5445 = vmul.f32 %v5442, 1.442695
    %v5446 = vpow.pop %v5445
    %5447 = vadd.xlane.f32.xlu0 %v5444
    %v5448 = vpop.xlane.xlu0 %5447
    %5449 = vadd.xlane.f32.xlu0 %v5446
    %v5450 = vpop.xlane.xlu0 %5449
    %v5451 = vrcp.pop %v5448
    %v5452 = vrcp.pop %v5450
    %v5453 = vmul.f32 %v5444, %v5451
    %v5454 = vmul.f32 %v5446, %v5452
    %v5455 = vpack.c.bf16 %v5436, %v5435
    %v5456 = vld [vmem:[#allocation18] sm:$0xf]
    %v5457 = vld [vmem:[#allocation18 + $0x4] sm:$0xf]
    %v5458 = vld [vmem:[#allocation18 + $0x8] sm:$0xf]
    %v5459 = vld [vmem:[#allocation18 + $0xc] sm:$0xf]
    %v5460 = vld [vmem:[#allocation18 + $0x10] sm:$0xf]
    %v5461 = vld [vmem:[#allocation18 + $0x14] sm:$0xf]
    %v5462 = vld [vmem:[#allocation18 + $0x18] sm:$0xf]
    %v5463 = vld [vmem:[#allocation18 + $0x1c] sm:$0xf]
    %v5464 = vld [vmem:[#allocation18 + $0x20] sm:$0xf]
    %v5465 = vld [vmem:[#allocation18 + $0x24] sm:$0xf]
    %v5466 = vld [vmem:[#allocation18 + $0x28] sm:$0xf]
    %v5467 = vld [vmem:[#allocation18 + $0x2c] sm:$0xf]
    %v5468 = vld [vmem:[#allocation18 + $0x30] sm:$0xf]
    %v5469 = vld [vmem:[#allocation18 + $0x34] sm:$0xf]
    %v5470 = vld [vmem:[#allocation18 + $0x38] sm:$0xf]
    %v5471 = vld [vmem:[#allocation18 + $0x3c] sm:$0xf]
    %v5472 = vld [vmem:[#allocation19] sm:$0x1]
    %v5474 = vlaneseq
    %v5475 = vshrl.u32 %v5474, 7
    %v5476 = vsub.s32 0, %v5475
    %v5477 = vrot.slane %v5472, %v5476
    %v5495 = vunpack.c.l.b16 %v5456
    %v5496 = vunpack.c.l.b16 %v5457
    %v5497 = vunpack.c.l.b16 %v5458
    %v5498 = vunpack.c.l.b16 %v5459
    %v5499 = vunpack.c.l.b16 %v5460
    %v5500 = vunpack.c.l.b16 %v5461
    %v5501 = vunpack.c.l.b16 %v5462
    %v5502 = vunpack.c.l.b16 %v5463
    %v5503 = vunpack.c.l.b16 %v5464
    %v5504 = vunpack.c.l.b16 %v5465
    %v5505 = vunpack.c.l.b16 %v5466
    %v5506 = vunpack.c.l.b16 %v5467
    %v5507 = vunpack.c.l.b16 %v5468
    %v5508 = vunpack.c.l.b16 %v5469
    %v5509 = vunpack.c.l.b16 %v5470
    %v5510 = vunpack.c.l.b16 %v5471
    %v5511 = vpack.c.b16 %v5496, %v5495
    %v5512 = vpack.c.b16 %v5498, %v5497
    %v5513 = vpack.c.b16 %v5500, %v5499
    %v5514 = vpack.c.b16 %v5502, %v5501
    %v5515 = vpack.c.b16 %v5504, %v5503
    %v5516 = vpack.c.b16 %v5506, %v5505
    %v5517 = vpack.c.b16 %v5508, %v5507
    %v5518 = vpack.c.b16 %v5510, %v5509
    %5527 = vmatprep.subr.bf16.mxu0 0
    %5528 = vmatpush1.bf16.msra.mxu0 %v5511
    %5529 = vmatprep.subr.bf16.mxu0 0
    %5530 = vmatpush1.bf16.msra.mxu0 %v5512
    %5531 = vmatprep.subr.bf16.mxu0 0
    %5532 = vmatpush1.bf16.msra.mxu0 %v5513
    %5533 = vmatprep.subr.bf16.mxu0 0
    %5534 = vmatpush1.bf16.msra.mxu0 %v5514
    %5535 = vmatprep.subr.bf16.mxu0 0
    %5536 = vmatpush1.bf16.msra.mxu0 %v5515
    %5537 = vmatprep.subr.bf16.mxu0 0
    %5538 = vmatpush1.bf16.msra.mxu0 %v5516
    %5539 = vmatprep.subr.bf16.mxu0 0
    %5540 = vmatpush1.bf16.msra.mxu0 %v5517
    %5541 = vmatprep.subr.bf16.mxu0 0
    %5542 = vmatpush1.bf16.msra.mxu0 %v5518
    %5543 = vmatprep.subr.bf16.mxu0 0
    %5544 = vmatpush1.bf16.msra.mxu0 0
    %5545 = vmatprep.subr.bf16.mxu0 0
    %5546 = vmatpush1.bf16.msra.mxu0 0
    %5547 = vmatprep.subr.bf16.mxu0 0
    %5548 = vmatpush1.bf16.msra.mxu0 0
    %5549 = vmatprep.subr.bf16.mxu0 0
    %5550 = vmatpush1.bf16.msra.mxu0 0
    %5551 = vmatprep.subr.bf16.mxu0 0
    %5552 = vmatpush1.bf16.msra.mxu0 0
    %5553 = vmatprep.subr.bf16.mxu0 0
    %5554 = vmatpush1.bf16.msra.mxu0 0
    %5555 = vmatprep.subr.bf16.mxu0 0
    %5556 = vmatpush1.bf16.msra.mxu0 0
    %5557 = vmatprep.subr.bf16.mxu0 0
    %5558 = vmatpush1.bf16.msra.mxu0 0
    %5559 = vmatprep.mubr.bf16.mxu0 0
    %5560 = vmatmul.mubr.bf16.gmra.mrb[0].mxu0 %v5455
    %v5561 = vpop.f32.mrb[0].mxu0
    %v5562 = vadd.f32 %v5477, %v5561
    %v5563 = vpop.f32.mrb[0].mxu0
    %v5564 = vpop.f32.mrb[0].mxu0
    %v5565 = vadd.f32 %v5477, %v5564
    %v5566 = vpop.f32.mrb[0].mxu0
    %5567 = vdwg.mxu0
    %v5568 = vtanh.pop %v5562
    %v5569 = vtanh.pop %v5565
    %5570 = vst [vmem:[%s13] sm:$0xff] %v5453
    %5571 = vst [vmem:[%s13 + $0x10] sm:$0xff] %v5454
    %5572 = vst [vmem:[%s13 + $0x8] sm:$0xff] %v5568
    %5573 = vst [vmem:[%s13 + $0x18] sm:$0xff] %v5569
    // Predicated region
    $region102: #{net_forward.1} parent=1 // pred_check
      _
    $region103: #{net_forward.1} parent=1 // pred_check_branch
      %5575 = sbr.rel (0) target = $region105
    $region104: #{net_forward.1} parent=1 // pred_region
      _
    $region105: #{net_forward.1} parent=1 // pred_fallthru
      _
    // Predicated region
    $region106: #{net_forward.1} parent=1 // pred_check
      _
    $region107: #{net_forward.1} parent=1 // pred_check_branch
      %5577 = sbr.rel (0) target = $region109
    $region108: #{net_forward.1} parent=1 // pred_region
      _
    $region109: #{net_forward.1} parent=1 // pred_fallthru
      _
    %5578 = vsyncpa [#allocation3], 1
    %5579 = vsyncpa [#allocation5], 1
    %5580 = vsyncpa [#allocation8], 1
    %5581 = vsyncpa [#allocation11], 1
    %5582 = vsyncpa [#allocation14], 1
    %5583 = vsyncpa [#allocation17], 1
    %5584 = vsyncpa [#allocation20], 1

</llo_original>
